<compile_context>
chip_gen: v6e
topology: v6e:2x2x1
jax: 0.10.0
libtpu: 0.0.40
codegen_flags: <defaults>
</compile_context>

<pallas_src>
import math

import jax
import jax.numpy as jnp
from jax import lax
from jax.experimental import pallas as pl
from jax.experimental.pallas import tpu as pltpu


def _make_kernel(alpha, num_steps, seq_len, batch_blk, input_size, hidden_size):
    alpha = float(alpha)
    T, bb, I, H = seq_len, batch_blk, input_size, hidden_size
    HH = H * H
    R = T * bb                     # rows of the post-loop batched matmuls

    # Row chunk for the post-loop (rows, H*H) intermediates (VMEM guard).
    budget_bytes = 8 * 1024 * 1024
    per_row_bytes = HH * 4 * 3     # tm + ip + product, f32
    rc = R
    if R * per_row_bytes > budget_bytes:
        rc = bb
        cand = bb
        while cand <= R:
            if R % cand == 0 and cand * per_row_bytes <= budget_bytes:
                rc = cand
            cand += bb

    def kernel(x_ref, ctx0_ref, wc2c_ref, wi2c_ref, bc_ref,
               wc2t_ref, bc2t_ref, wi2h_ref, bi2h_ref,
               out_ref, hfin_ref, cfin_ref,
               xc_ref, stash_ref, flat_ref):
        f32 = jnp.float32

        # ---- Pre-loop: x -> context projection for ALL rows at once (M = T*bb).
        x_all = x_ref[...]                                        # (T*bb, I)
        xc_ref[...] = (jnp.dot(x_all, wi2c_ref[...],
                               preferred_element_type=f32) + bc_ref[...])

        wc2c = wc2c_ref[...]                                      # hoisted, small

        def leaky(ctx, pre):
            new = jnp.maximum(pre, 0.0)
            if alpha == 1.0:
                return new
            return ctx * (1.0 - alpha) + new * alpha

        # ---- Serial recurrence: only the context update lives on the chain.
        def step(t, ctx):
            start = pl.multiple_of(t * bb, bb)
            xc_t = xc_ref[pl.ds(start, bb), :]                    # (bb, H)
            for _ in range(num_steps - 1):
                ctx = leaky(ctx, jnp.dot(ctx, wc2c,
                                         preferred_element_type=f32) + xc_t)
            stash_ref[t] = ctx      # ctx used by the last inner step's output
            ctx = leaky(ctx, jnp.dot(ctx, wc2c,
                                     preferred_element_type=f32) + xc_t)
            return ctx

        ctx_fin = lax.fori_loop(0, T, step, ctx0_ref[...],
                                unroll=(True if T <= 32 else 8))
        cfin_ref[...] = ctx_fin

        # ---- Flatten the (T, bb, H) stash into (T*bb, H) rows (static copies).
        for t in range(T):
            flat_ref[t * bb:(t + 1) * bb, :] = stash_ref[t]

        # ---- Selection matrix built on-chip: sel[i*H + j, c] = 1 iff c == i.
        r_idx = lax.broadcasted_iota(jnp.int32, (HH, H), 0)
        c_idx = lax.broadcasted_iota(jnp.int32, (HH, H), 1)
        d = r_idx - c_idx * H
        sel = ((d >= 0) & (d < H)).astype(f32)                    # (H*H, H)

        # ---- Output path, batched over all (t, b) rows (chunked if large).
        for r0 in range(0, R, rc):
            ctx_c = flat_ref[r0:r0 + rc, :]                       # (rc, H)
            x_c = x_ref[r0:r0 + rc, :]                            # (rc, I)
            tm = (jnp.dot(ctx_c, wc2t_ref[...],
                          preferred_element_type=f32) + bc2t_ref[...])   # (rc, H*H)
            ip = (jnp.dot(x_c, wi2h_ref[...],
                          preferred_element_type=f32) + bi2h_ref[...])   # (rc, H*H)
            # transformed_input[r, i] = sum_j tm[r, i*H+j] * ip[r, j]
            ti = jnp.dot(tm * ip, sel, preferred_element_type=f32)       # (rc, H)
            out_ref[r0:r0 + rc, :] = ti
            if r0 + rc == R:
                hfin_ref[...] = ti[rc - bb:, :]   # last timestep's rows

    return kernel


def context_transform_ctrnn_forward(x, hidden0, context0, params, alpha,
                                     num_steps=1, batch_block=None):
    """x: (T,B,I); hidden0/context0: (B,H).

    Returns (outputs (T,B,H), (hidden (B,H), context (B,H))) matching the
    PyTorch module.  `hidden0` (and the h2h weights) provably never affect any
    output of the original module, so they are not fed to the kernel.
    Requires T >= 1 (for T == 0 the module would return hidden0 unchanged).
    """
    (wi2h, bi2h, wh2h, bh2h, wi2c, bi2c,
     wc2c, bc2c, wc2t, bc2t) = params
    del hidden0, wh2h, bh2h          # dead path in the PyTorch forward
    T, B, I = x.shape
    H = wc2c.shape[0]
    assert T >= 1 and num_steps >= 1

    # Batch chunking: grid axis (v7x: pass batch_block=B//2, multiple of 8,
    # to use both TensorCores; v5e/v6e: keep the default bb == B).
    bb = B if batch_block is None else batch_block
    assert bb == B or (B % bb == 0 and bb % 8 == 0), \
        "batch_block must equal B or be a multiple of 8 dividing B"
    NC = B // bb

    f32 = jnp.float32
    wi2h_t = jnp.tile(wi2h, (1, H))                  # (I, H*H) lane-tiled proj
    bi2h_t = jnp.tile(bi2h, (1, H))                  # (1, H*H)
    bias_c = bc2c + bi2c                             # (1, H) fused ctx bias

    # Lane/DMA-friendly flat layout: rows = chunk-major, then time, then batch.
    x_in = (x.reshape(T, NC, bb, I).transpose(1, 0, 2, 3)
             .reshape(NC * T * bb, I))

    kernel = _make_kernel(alpha, num_steps, T, bb, I, H)
    HH = H * H

    grid_spec = pltpu.PrefetchScalarGridSpec(
        num_scalar_prefetch=0,
        grid=(NC,),      # batch chunks; whole time loop inside each grid step
        in_specs=[
            pl.BlockSpec((T * bb, I), lambda c: (c, 0)),   # x (flat rows)
            pl.BlockSpec((bb, H), lambda c: (c, 0)),       # initial context
            pl.BlockSpec((H, H), lambda c: (0, 0)),        # wc2c
            pl.BlockSpec((I, H), lambda c: (0, 0)),        # wi2c
            pl.BlockSpec((1, H), lambda c: (0, 0)),        # bc2c + bi2c
            pl.BlockSpec((H, HH), lambda c: (0, 0)),       # wc2t
            pl.BlockSpec((1, HH), lambda c: (0, 0)),       # bc2t
            pl.BlockSpec((I, HH), lambda c: (0, 0)),       # tile(wi2h)
            pl.BlockSpec((1, HH), lambda c: (0, 0)),       # tile(bi2h)
        ],
        out_specs=(
            pl.BlockSpec((T * bb, H), lambda c: (c, 0)),   # outputs (flat rows)
            pl.BlockSpec((bb, H), lambda c: (c, 0)),       # final hidden
            pl.BlockSpec((bb, H), lambda c: (c, 0)),       # final context
        ),
        scratch_shapes=[
            pltpu.VMEM((T * bb, H), f32),   # precomputed x->ctx projection
            pltpu.VMEM((T, bb, H), f32),    # per-step context stash
            pltpu.VMEM((T * bb, H), f32),   # flattened stash (matmul M-rows)
        ],
    )
    out2d, hid_f, ctx_f = pl.pallas_call(
        kernel,
        out_shape=(jax.ShapeDtypeStruct((NC * T * bb, H), f32),
                   jax.ShapeDtypeStruct((B, H), f32),
                   jax.ShapeDtypeStruct((B, H), f32)),
        grid_spec=grid_spec,
        compiler_params=pltpu.CompilerParams(
            dimension_semantics=("parallel",)),
    )(x_in, context0, wc2c, wi2c, bias_c, wc2t, bc2t, wi2h_t, bi2h_t)

    outputs = (out2d.reshape(NC, T, bb, H).transpose(1, 0, 2, 3)
                     .reshape(T, B, H))
    return outputs, (hid_f, ctx_f)


def init_params(key, input_size, hidden_size):
    """nn.Linear-style init; weights stored as (in_features, out_features)."""
    def linear(k, fan_in, fan_out):
        kw, kb = jax.random.split(k)
        bound = 1.0 / math.sqrt(fan_in)
        w = jax.random.uniform(kw, (fan_in, fan_out), jnp.float32, -bound, bound)
        b = jax.random.uniform(kb, (1, fan_out), jnp.float32, -bound, bound)
        return w, b

    k1, k2, k3, k4, k5 = jax.random.split(key, 5)
    wi2h, bi2h = linear(k1, input_size, hidden_size)                  # input2h
    wh2h, bh2h = linear(k2, hidden_size, hidden_size)                 # h2h (dead)
    wi2c, bi2c = linear(k3, input_size, hidden_size)                  # input2context
    wc2c, bc2c = linear(k4, hidden_size, hidden_size)                 # context2context
    wc2t, bc2t = linear(k5, hidden_size, hidden_size * hidden_size)   # context2transform
    return (wi2h, bi2h, wh2h, bh2h, wi2c, bi2c, wc2c, bc2c, wc2t, bc2t)


def reference_forward(x, hidden0, context0, params, alpha, num_steps=1):
    """Pure-JAX reference mirroring the PyTorch module exactly."""
    (wi2h, bi2h, wh2h, bh2h, wi2c, bi2c,
     wc2c, bc2c, wc2t, bc2t) = params
    T, B, _ = x.shape
    H = wc2c.shape[0]
    hidden, context = hidden0, context0
    outs = []
    for t in range(T):
        xt = x[t]
        for _ in range(num_steps):
            ip = xt @ wi2h + bi2h
            tm = (context @ wc2t + bc2t).reshape(B, H, H)
            ti = jnp.einsum('bij,bj->bi', tm, ip)
            h_new = jax.nn.relu(context + ti + hidden @ wh2h + bh2h)
            hidden = hidden * (1.0 - alpha) + h_new * alpha
            ci = xt @ wi2c + bi2c
            c_new = jax.nn.relu(context @ wc2c + bc2c + ci)
            context = context * (1.0 - alpha) + c_new * alpha
            hidden = ti          # as in PyTorch: hidden = transformed_input
        outs.append(hidden)
    return jnp.stack(outs, axis=0), (hidden, context)


if __name__ == "__main__":
    T, B = 8, 4
    input_size = 16
    hidden_size = 32

    key = jax.random.PRNGKey(0)
    k_param, k_x = jax.random.split(key)
    params = init_params(k_param, input_size, hidden_size)
    x = jax.random.normal(k_x, (T, B, input_size), jnp.float32)
    hidden0 = jnp.zeros((B, hidden_size), jnp.float32)
    context0 = jnp.zeros((B, hidden_size), jnp.float32)

    # Config 1: module defaults (dt=None -> alpha=1.0), num_steps=1.
    # Config 2: leaky integration (dt=50 -> alpha=0.5), num_steps=2.
    for alpha, num_steps in ((1.0, 1), (0.5, 2)):
        out, (hid, ctx) = context_transform_ctrnn_forward(
            x, hidden0, context0, params, alpha, num_steps=num_steps)
        out = jax.block_until_ready(out)
        hid = jax.block_until_ready(hid)
        ctx = jax.block_until_ready(ctx)

        ref_out, (ref_hid, ref_ctx) = reference_forward(
            x, hidden0, context0, params, alpha, num_steps=num_steps)
        assert out.shape == (T, B, hidden_size)
        assert hid.shape == (B, hidden_size)
        assert ctx.shape == (B, hidden_size)
        assert jnp.allclose(out, ref_out, atol=1e-4, rtol=1e-4)
        assert jnp.allclose(hid, ref_hid, atol=1e-4, rtol=1e-4)
        assert jnp.allclose(ctx, ref_ctx, atol=1e-4, rtol=1e-4)

    print("KERNEL_OK")
</pallas_src>

<mosaic_0001>
module attributes {stable_mosaic.version = 11 : i64} {
  func.func @kernel(%arg0: i32, %arg1: memref<32x16xf32, #tpu.memory_space<vmem>>, %arg2: memref<4x32xf32, #tpu.memory_space<vmem>>, %arg3: memref<32x32xf32, #tpu.memory_space<vmem>>, %arg4: memref<16x32xf32, #tpu.memory_space<vmem>>, %arg5: memref<1x32xf32, #tpu.memory_space<vmem>>, %arg6: memref<32x1024xf32, #tpu.memory_space<vmem>>, %arg7: memref<1x1024xf32, #tpu.memory_space<vmem>>, %arg8: memref<16x1024xf32, #tpu.memory_space<vmem>>, %arg9: memref<1x1024xf32, #tpu.memory_space<vmem>>, %arg10: memref<32x32xf32, #tpu.memory_space<vmem>>, %arg11: memref<4x32xf32, #tpu.memory_space<vmem>>, %arg12: memref<4x32xf32, #tpu.memory_space<vmem>>, %arg13: memref<32x32xf32, #tpu.memory_space<vmem>>, %arg14: memref<8x4x32xf32, #tpu.memory_space<vmem>>, %arg15: memref<32x32xf32, #tpu.memory_space<vmem>>) attributes {dimension_semantics = [#tpu.dimension_semantics<parallel>], iteration_bounds = array<i64: 1>, scalar_prefetch = 0 : i64, scratch_operands = 3 : i64, tpu.core_type = #tpu.core_type<tc>, window_params = [{transform_indices = @transform_0, window_bounds = array<i64: 32, 16>}, {transform_indices = @transform_1, window_bounds = array<i64: 4, 32>}, {pipeline_mode = #tpu.pipeline_mode<synchronous>, transform_indices = @transform_2, window_bounds = array<i64: 32, 32>}, {pipeline_mode = #tpu.pipeline_mode<synchronous>, transform_indices = @transform_3, window_bounds = array<i64: 16, 32>}, {pipeline_mode = #tpu.pipeline_mode<synchronous>, transform_indices = @transform_4, window_bounds = array<i64: 1, 32>}, {pipeline_mode = #tpu.pipeline_mode<synchronous>, transform_indices = @transform_5, window_bounds = array<i64: 32, 1024>}, {pipeline_mode = #tpu.pipeline_mode<synchronous>, transform_indices = @transform_6, window_bounds = array<i64: 1, 1024>}, {pipeline_mode = #tpu.pipeline_mode<synchronous>, transform_indices = @transform_7, window_bounds = array<i64: 16, 1024>}, {pipeline_mode = #tpu.pipeline_mode<synchronous>, transform_indices = @transform_8, window_bounds = array<i64: 1, 1024>}, {transform_indices = @transform_9, window_bounds = array<i64: 32, 32>}, {transform_indices = @transform_10, window_bounds = array<i64: 4, 32>}, {transform_indices = @transform_11, window_bounds = array<i64: 4, 32>}]} {
    %c0 = arith.constant 0 : index
    %c0_0 = arith.constant 0 : index
    %0 = vector.load %arg1[%c0, %c0_0] : memref<32x16xf32, #tpu.memory_space<vmem>>, vector<32x16xf32>
    %c0_1 = arith.constant 0 : index
    %c0_2 = arith.constant 0 : index
    %1 = vector.load %arg4[%c0_1, %c0_2] : memref<16x32xf32, #tpu.memory_space<vmem>>, vector<16x32xf32>
    %cst = arith.constant dense<0.000000e+00> : vector<32x32xf32>
    %2 = tpu.matmul %0, %1, %cst {dimension_numbers = #tpu.dot_dimension_numbers<[1], [0], [0], [1], [0, 0, 1, 1], [], []>} : vector<32x16xf32>, vector<16x32xf32>, vector<32x32xf32> -> vector<32x32xf32>
    %c0_3 = arith.constant 0 : index
    %c0_4 = arith.constant 0 : index
    %3 = vector.load %arg5[%c0_3, %c0_4] : memref<1x32xf32, #tpu.memory_space<vmem>>, vector<1x32xf32>
    %4 = vector.broadcast %3 : vector<1x32xf32> to vector<32x32xf32>
    %5 = arith.addf %2, %4 : vector<32x32xf32>
    %c0_5 = arith.constant 0 : index
    %c0_6 = arith.constant 0 : index
    %6 = vector.load %arg13[%c0_5, %c0_6] : memref<32x32xf32, #tpu.memory_space<vmem>>, vector<32x32xf32>
    tpu.vector_store %arg13[%c0_5, %c0_6], %5 {strides = array<i32>} : memref<32x32xf32, #tpu.memory_space<vmem>>, vector<32x32xf32>,
    %c0_7 = arith.constant 0 : index
    %c0_8 = arith.constant 0 : index
    %7 = vector.load %arg3[%c0_7, %c0_8] : memref<32x32xf32, #tpu.memory_space<vmem>>, vector<32x32xf32>
    %c0_9 = arith.constant 0 : index
    %c0_10 = arith.constant 0 : index
    %8 = vector.load %arg2[%c0_9, %c0_10] : memref<4x32xf32, #tpu.memory_space<vmem>>, vector<4x32xf32>
    %c0_i32 = arith.constant 0 : i32
    %c4_i32 = arith.constant 4 : i32
    %9 = arith.muli %c0_i32, %c4_i32 : i32
    %10 = tpu.assume_multiple %9, 4 : i32
    %11 = arith.index_cast %10 : i32 to index
    %c0_11 = arith.constant 0 : index
    %12 = vector.load %arg13[%11, %c0_11] : memref<32x32xf32, #tpu.memory_space<vmem>>, vector<4x32xf32>
    %13 = arith.index_cast %c0_i32 : i32 to index
    %c0_12 = arith.constant 0 : index
    %c0_13 = arith.constant 0 : index
    %14 = vector.load %arg14[%13, %c0_12, %c0_13] : memref<8x4x32xf32, #tpu.memory_space<vmem>>, vector<1x4x32xf32>
    %15 = vector.shape_cast %14 : vector<1x4x32xf32> to vector<4x32xf32>
    %16 = vector.shape_cast %8 : vector<4x32xf32> to vector<1x4x32xf32>
    tpu.vector_store %arg14[%13, %c0_12, %c0_13], %16 {strides = array<i32>} : memref<8x4x32xf32, #tpu.memory_space<vmem>>, vector<1x4x32xf32>,
    %cst_14 = arith.constant dense<0.000000e+00> : vector<4x32xf32>
    %17 = tpu.matmul %8, %7, %cst_14 {dimension_numbers = #tpu.dot_dimension_numbers<[1], [0], [0], [1], [0, 0, 1, 1], [], []>} : vector<4x32xf32>, vector<32x32xf32>, vector<4x32xf32> -> vector<4x32xf32>
    %18 = arith.addf %17, %12 : vector<4x32xf32>
    %cst_15 = arith.constant 0.000000e+00 : f32
    %19 = vector.broadcast %cst_15 : f32 to vector<4x32xf32>
    %20 = arith.maximumf %18, %19 : vector<4x32xf32>
    %c1_i32 = arith.constant 1 : i32
    %c4_i32_16 = arith.constant 4 : i32
    %21 = arith.muli %c1_i32, %c4_i32_16 : i32
    %22 = tpu.assume_multiple %21, 4 : i32
    %23 = arith.index_cast %22 : i32 to index
    %c0_17 = arith.constant 0 : index
    %24 = vector.load %arg13[%23, %c0_17] : memref<32x32xf32, #tpu.memory_space<vmem>>, vector<4x32xf32>
    %25 = arith.index_cast %c1_i32 : i32 to index
    %c0_18 = arith.constant 0 : index
    %c0_19 = arith.constant 0 : index
    %26 = vector.load %arg14[%25, %c0_18, %c0_19] : memref<8x4x32xf32, #tpu.memory_space<vmem>>, vector<1x4x32xf32>
    %27 = vector.shape_cast %26 : vector<1x4x32xf32> to vector<4x32xf32>
    %28 = vector.shape_cast %20 : vector<4x32xf32> to vector<1x4x32xf32>
    tpu.vector_store %arg14[%25, %c0_18, %c0_19], %28 {strides = array<i32>} : memref<8x4x32xf32, #tpu.memory_space<vmem>>, vector<1x4x32xf32>,
    %cst_20 = arith.constant dense<0.000000e+00> : vector<4x32xf32>
    %29 = tpu.matmul %20, %7, %cst_20 {dimension_numbers = #tpu.dot_dimension_numbers<[1], [0], [0], [1], [0, 0, 1, 1], [], []>} : vector<4x32xf32>, vector<32x32xf32>, vector<4x32xf32> -> vector<4x32xf32>
    %30 = arith.addf %29, %24 : vector<4x32xf32>
    %cst_21 = arith.constant 0.000000e+00 : f32
    %31 = vector.broadcast %cst_21 : f32 to vector<4x32xf32>
    %32 = arith.maximumf %30, %31 : vector<4x32xf32>
    %c2_i32 = arith.constant 2 : i32
    %c4_i32_22 = arith.constant 4 : i32
    %33 = arith.muli %c2_i32, %c4_i32_22 : i32
    %34 = tpu.assume_multiple %33, 4 : i32
    %35 = arith.index_cast %34 : i32 to index
    %c0_23 = arith.constant 0 : index
    %36 = vector.load %arg13[%35, %c0_23] : memref<32x32xf32, #tpu.memory_space<vmem>>, vector<4x32xf32>
    %37 = arith.index_cast %c2_i32 : i32 to index
    %c0_24 = arith.constant 0 : index
    %c0_25 = arith.constant 0 : index
    %38 = vector.load %arg14[%37, %c0_24, %c0_25] : memref<8x4x32xf32, #tpu.memory_space<vmem>>, vector<1x4x32xf32>
    %39 = vector.shape_cast %38 : vector<1x4x32xf32> to vector<4x32xf32>
    %40 = vector.shape_cast %32 : vector<4x32xf32> to vector<1x4x32xf32>
    tpu.vector_store %arg14[%37, %c0_24, %c0_25], %40 {strides = array<i32>} : memref<8x4x32xf32, #tpu.memory_space<vmem>>, vector<1x4x32xf32>,
    %cst_26 = arith.constant dense<0.000000e+00> : vector<4x32xf32>
    %41 = tpu.matmul %32, %7, %cst_26 {dimension_numbers = #tpu.dot_dimension_numbers<[1], [0], [0], [1], [0, 0, 1, 1], [], []>} : vector<4x32xf32>, vector<32x32xf32>, vector<4x32xf32> -> vector<4x32xf32>
    %42 = arith.addf %41, %36 : vector<4x32xf32>
    %cst_27 = arith.constant 0.000000e+00 : f32
    %43 = vector.broadcast %cst_27 : f32 to vector<4x32xf32>
    %44 = arith.maximumf %42, %43 : vector<4x32xf32>
    %c3_i32 = arith.constant 3 : i32
    %c4_i32_28 = arith.constant 4 : i32
    %45 = arith.muli %c3_i32, %c4_i32_28 : i32
    %46 = tpu.assume_multiple %45, 4 : i32
    %47 = arith.index_cast %46 : i32 to index
    %c0_29 = arith.constant 0 : index
    %48 = vector.load %arg13[%47, %c0_29] : memref<32x32xf32, #tpu.memory_space<vmem>>, vector<4x32xf32>
    %49 = arith.index_cast %c3_i32 : i32 to index
    %c0_30 = arith.constant 0 : index
    %c0_31 = arith.constant 0 : index
    %50 = vector.load %arg14[%49, %c0_30, %c0_31] : memref<8x4x32xf32, #tpu.memory_space<vmem>>, vector<1x4x32xf32>
    %51 = vector.shape_cast %50 : vector<1x4x32xf32> to vector<4x32xf32>
    %52 = vector.shape_cast %44 : vector<4x32xf32> to vector<1x4x32xf32>
    tpu.vector_store %arg14[%49, %c0_30, %c0_31], %52 {strides = array<i32>} : memref<8x4x32xf32, #tpu.memory_space<vmem>>, vector<1x4x32xf32>,
    %cst_32 = arith.constant dense<0.000000e+00> : vector<4x32xf32>
    %53 = tpu.matmul %44, %7, %cst_32 {dimension_numbers = #tpu.dot_dimension_numbers<[1], [0], [0], [1], [0, 0, 1, 1], [], []>} : vector<4x32xf32>, vector<32x32xf32>, vector<4x32xf32> -> vector<4x32xf32>
    %54 = arith.addf %53, %48 : vector<4x32xf32>
    %cst_33 = arith.constant 0.000000e+00 : f32
    %55 = vector.broadcast %cst_33 : f32 to vector<4x32xf32>
    %56 = arith.maximumf %54, %55 : vector<4x32xf32>
    %c4_i32_34 = arith.constant 4 : i32
    %c4_i32_35 = arith.constant 4 : i32
    %57 = arith.muli %c4_i32_34, %c4_i32_35 : i32
    %58 = tpu.assume_multiple %57, 4 : i32
    %59 = arith.index_cast %58 : i32 to index
    %c0_36 = arith.constant 0 : index
    %60 = vector.load %arg13[%59, %c0_36] : memref<32x32xf32, #tpu.memory_space<vmem>>, vector<4x32xf32>
    %61 = arith.index_cast %c4_i32_34 : i32 to index
    %c0_37 = arith.constant 0 : index
    %c0_38 = arith.constant 0 : index
    %62 = vector.load %arg14[%61, %c0_37, %c0_38] : memref<8x4x32xf32, #tpu.memory_space<vmem>>, vector<1x4x32xf32>
    %63 = vector.shape_cast %62 : vector<1x4x32xf32> to vector<4x32xf32>
    %64 = vector.shape_cast %56 : vector<4x32xf32> to vector<1x4x32xf32>
    tpu.vector_store %arg14[%61, %c0_37, %c0_38], %64 {strides = array<i32>} : memref<8x4x32xf32, #tpu.memory_space<vmem>>, vector<1x4x32xf32>,
    %cst_39 = arith.constant dense<0.000000e+00> : vector<4x32xf32>
    %65 = tpu.matmul %56, %7, %cst_39 {dimension_numbers = #tpu.dot_dimension_numbers<[1], [0], [0], [1], [0, 0, 1, 1], [], []>} : vector<4x32xf32>, vector<32x32xf32>, vector<4x32xf32> -> vector<4x32xf32>
    %66 = arith.addf %65, %60 : vector<4x32xf32>
    %cst_40 = arith.constant 0.000000e+00 : f32
    %67 = vector.broadcast %cst_40 : f32 to vector<4x32xf32>
    %68 = arith.maximumf %66, %67 : vector<4x32xf32>
    %c5_i32 = arith.constant 5 : i32
    %c4_i32_41 = arith.constant 4 : i32
    %69 = arith.muli %c5_i32, %c4_i32_41 : i32
    %70 = tpu.assume_multiple %69, 4 : i32
    %71 = arith.index_cast %70 : i32 to index
    %c0_42 = arith.constant 0 : index
    %72 = vector.load %arg13[%71, %c0_42] : memref<32x32xf32, #tpu.memory_space<vmem>>, vector<4x32xf32>
    %73 = arith.index_cast %c5_i32 : i32 to index
    %c0_43 = arith.constant 0 : index
    %c0_44 = arith.constant 0 : index
    %74 = vector.load %arg14[%73, %c0_43, %c0_44] : memref<8x4x32xf32, #tpu.memory_space<vmem>>, vector<1x4x32xf32>
    %75 = vector.shape_cast %74 : vector<1x4x32xf32> to vector<4x32xf32>
    %76 = vector.shape_cast %68 : vector<4x32xf32> to vector<1x4x32xf32>
    tpu.vector_store %arg14[%73, %c0_43, %c0_44], %76 {strides = array<i32>} : memref<8x4x32xf32, #tpu.memory_space<vmem>>, vector<1x4x32xf32>,
    %cst_45 = arith.constant dense<0.000000e+00> : vector<4x32xf32>
    %77 = tpu.matmul %68, %7, %cst_45 {dimension_numbers = #tpu.dot_dimension_numbers<[1], [0], [0], [1], [0, 0, 1, 1], [], []>} : vector<4x32xf32>, vector<32x32xf32>, vector<4x32xf32> -> vector<4x32xf32>
    %78 = arith.addf %77, %72 : vector<4x32xf32>
    %cst_46 = arith.constant 0.000000e+00 : f32
    %79 = vector.broadcast %cst_46 : f32 to vector<4x32xf32>
    %80 = arith.maximumf %78, %79 : vector<4x32xf32>
    %c6_i32 = arith.constant 6 : i32
    %c4_i32_47 = arith.constant 4 : i32
    %81 = arith.muli %c6_i32, %c4_i32_47 : i32
    %82 = tpu.assume_multiple %81, 4 : i32
    %83 = arith.index_cast %82 : i32 to index
    %c0_48 = arith.constant 0 : index
    %84 = vector.load %arg13[%83, %c0_48] : memref<32x32xf32, #tpu.memory_space<vmem>>, vector<4x32xf32>
    %85 = arith.index_cast %c6_i32 : i32 to index
    %c0_49 = arith.constant 0 : index
    %c0_50 = arith.constant 0 : index
    %86 = vector.load %arg14[%85, %c0_49, %c0_50] : memref<8x4x32xf32, #tpu.memory_space<vmem>>, vector<1x4x32xf32>
    %87 = vector.shape_cast %86 : vector<1x4x32xf32> to vector<4x32xf32>
    %88 = vector.shape_cast %80 : vector<4x32xf32> to vector<1x4x32xf32>
    tpu.vector_store %arg14[%85, %c0_49, %c0_50], %88 {strides = array<i32>} : memref<8x4x32xf32, #tpu.memory_space<vmem>>, vector<1x4x32xf32>,
    %cst_51 = arith.constant dense<0.000000e+00> : vector<4x32xf32>
    %89 = tpu.matmul %80, %7, %cst_51 {dimension_numbers = #tpu.dot_dimension_numbers<[1], [0], [0], [1], [0, 0, 1, 1], [], []>} : vector<4x32xf32>, vector<32x32xf32>, vector<4x32xf32> -> vector<4x32xf32>
    %90 = arith.addf %89, %84 : vector<4x32xf32>
    %cst_52 = arith.constant 0.000000e+00 : f32
    %91 = vector.broadcast %cst_52 : f32 to vector<4x32xf32>
    %92 = arith.maximumf %90, %91 : vector<4x32xf32>
    %c7_i32 = arith.constant 7 : i32
    %c4_i32_53 = arith.constant 4 : i32
    %93 = arith.muli %c7_i32, %c4_i32_53 : i32
    %94 = tpu.assume_multiple %93, 4 : i32
    %95 = arith.index_cast %94 : i32 to index
    %c0_54 = arith.constant 0 : index
    %96 = vector.load %arg13[%95, %c0_54] : memref<32x32xf32, #tpu.memory_space<vmem>>, vector<4x32xf32>
    %97 = arith.index_cast %c7_i32 : i32 to index
    %c0_55 = arith.constant 0 : index
    %c0_56 = arith.constant 0 : index
    %98 = vector.load %arg14[%97, %c0_55, %c0_56] : memref<8x4x32xf32, #tpu.memory_space<vmem>>, vector<1x4x32xf32>
    %99 = vector.shape_cast %98 : vector<1x4x32xf32> to vector<4x32xf32>
    %100 = vector.shape_cast %92 : vector<4x32xf32> to vector<1x4x32xf32>
    tpu.vector_store %arg14[%97, %c0_55, %c0_56], %100 {strides = array<i32>} : memref<8x4x32xf32, #tpu.memory_space<vmem>>, vector<1x4x32xf32>,
    %cst_57 = arith.constant dense<0.000000e+00> : vector<4x32xf32>
    %101 = tpu.matmul %92, %7, %cst_57 {dimension_numbers = #tpu.dot_dimension_numbers<[1], [0], [0], [1], [0, 0, 1, 1], [], []>} : vector<4x32xf32>, vector<32x32xf32>, vector<4x32xf32> -> vector<4x32xf32>
    %102 = arith.addf %101, %96 : vector<4x32xf32>
    %cst_58 = arith.constant 0.000000e+00 : f32
    %103 = vector.broadcast %cst_58 : f32 to vector<4x32xf32>
    %104 = arith.maximumf %102, %103 : vector<4x32xf32>
    %c8_i32 = arith.constant 8 : i32
    %c0_59 = arith.constant 0 : index
    %c0_60 = arith.constant 0 : index
    %105 = vector.load %arg12[%c0_59, %c0_60] : memref<4x32xf32, #tpu.memory_space<vmem>>, vector<4x32xf32>
    tpu.vector_store %arg12[%c0_59, %c0_60], %104 {strides = array<i32>} : memref<4x32xf32, #tpu.memory_space<vmem>>, vector<4x32xf32>,
    %c0_61 = arith.constant 0 : index
    %c0_62 = arith.constant 0 : index
    %c0_63 = arith.constant 0 : index
    %106 = vector.load %arg14[%c0_61, %c0_62, %c0_63] : memref<8x4x32xf32, #tpu.memory_space<vmem>>, vector<1x4x32xf32>
    %107 = vector.shape_cast %106 : vector<1x4x32xf32> to vector<4x32xf32>
    %c0_64 = arith.constant 0 : index
    %c0_65 = arith.constant 0 : index
    %108 = vector.load %arg15[%c0_64, %c0_65] : memref<32x32xf32, #tpu.memory_space<vmem>>, vector<4x32xf32>
    tpu.vector_store %arg15[%c0_64, %c0_65], %107 {strides = array<i32>} : memref<32x32xf32, #tpu.memory_space<vmem>>, vector<4x32xf32>,
    %c1 = arith.constant 1 : index
    %c0_66 = arith.constant 0 : index
    %c0_67 = arith.constant 0 : index
    %109 = vector.load %arg14[%c1, %c0_66, %c0_67] : memref<8x4x32xf32, #tpu.memory_space<vmem>>, vector<1x4x32xf32>
    %110 = vector.shape_cast %109 : vector<1x4x32xf32> to vector<4x32xf32>
    %c4 = arith.constant 4 : index
    %c0_68 = arith.constant 0 : index
    %111 = vector.load %arg15[%c4, %c0_68] : memref<32x32xf32, #tpu.memory_space<vmem>>, vector<4x32xf32>
    tpu.vector_store %arg15[%c4, %c0_68], %110 {strides = array<i32>} : memref<32x32xf32, #tpu.memory_space<vmem>>, vector<4x32xf32>,
    %c2 = arith.constant 2 : index
    %c0_69 = arith.constant 0 : index
    %c0_70 = arith.constant 0 : index
    %112 = vector.load %arg14[%c2, %c0_69, %c0_70] : memref<8x4x32xf32, #tpu.memory_space<vmem>>, vector<1x4x32xf32>
    %113 = vector.shape_cast %112 : vector<1x4x32xf32> to vector<4x32xf32>
    %c8 = arith.constant 8 : index
    %c0_71 = arith.constant 0 : index
    %114 = vector.load %arg15[%c8, %c0_71] : memref<32x32xf32, #tpu.memory_space<vmem>>, vector<4x32xf32>
    tpu.vector_store %arg15[%c8, %c0_71], %113 {strides = array<i32>} : memref<32x32xf32, #tpu.memory_space<vmem>>, vector<4x32xf32>,
    %c3 = arith.constant 3 : index
    %c0_72 = arith.constant 0 : index
    %c0_73 = arith.constant 0 : index
    %115 = vector.load %arg14[%c3, %c0_72, %c0_73] : memref<8x4x32xf32, #tpu.memory_space<vmem>>, vector<1x4x32xf32>
    %116 = vector.shape_cast %115 : vector<1x4x32xf32> to vector<4x32xf32>
    %c12 = arith.constant 12 : index
    %c0_74 = arith.constant 0 : index
    %117 = vector.load %arg15[%c12, %c0_74] : memref<32x32xf32, #tpu.memory_space<vmem>>, vector<4x32xf32>
    tpu.vector_store %arg15[%c12, %c0_74], %116 {strides = array<i32>} : memref<32x32xf32, #tpu.memory_space<vmem>>, vector<4x32xf32>,
    %c4_75 = arith.constant 4 : index
    %c0_76 = arith.constant 0 : index
    %c0_77 = arith.constant 0 : index
    %118 = vector.load %arg14[%c4_75, %c0_76, %c0_77] : memref<8x4x32xf32, #tpu.memory_space<vmem>>, vector<1x4x32xf32>
    %119 = vector.shape_cast %118 : vector<1x4x32xf32> to vector<4x32xf32>
    %c16 = arith.constant 16 : index
    %c0_78 = arith.constant 0 : index
    %120 = vector.load %arg15[%c16, %c0_78] : memref<32x32xf32, #tpu.memory_space<vmem>>, vector<4x32xf32>
    tpu.vector_store %arg15[%c16, %c0_78], %119 {strides = array<i32>} : memref<32x32xf32, #tpu.memory_space<vmem>>, vector<4x32xf32>,
    %c5 = arith.constant 5 : index
    %c0_79 = arith.constant 0 : index
    %c0_80 = arith.constant 0 : index
    %121 = vector.load %arg14[%c5, %c0_79, %c0_80] : memref<8x4x32xf32, #tpu.memory_space<vmem>>, vector<1x4x32xf32>
    %122 = vector.shape_cast %121 : vector<1x4x32xf32> to vector<4x32xf32>
    %c20 = arith.constant 20 : index
    %c0_81 = arith.constant 0 : index
    %123 = vector.load %arg15[%c20, %c0_81] : memref<32x32xf32, #tpu.memory_space<vmem>>, vector<4x32xf32>
    tpu.vector_store %arg15[%c20, %c0_81], %122 {strides = array<i32>} : memref<32x32xf32, #tpu.memory_space<vmem>>, vector<4x32xf32>,
    %c6 = arith.constant 6 : index
    %c0_82 = arith.constant 0 : index
    %c0_83 = arith.constant 0 : index
    %124 = vector.load %arg14[%c6, %c0_82, %c0_83] : memref<8x4x32xf32, #tpu.memory_space<vmem>>, vector<1x4x32xf32>
    %125 = vector.shape_cast %124 : vector<1x4x32xf32> to vector<4x32xf32>
    %c24 = arith.constant 24 : index
    %c0_84 = arith.constant 0 : index
    %126 = vector.load %arg15[%c24, %c0_84] : memref<32x32xf32, #tpu.memory_space<vmem>>, vector<4x32xf32>
    tpu.vector_store %arg15[%c24, %c0_84], %125 {strides = array<i32>} : memref<32x32xf32, #tpu.memory_space<vmem>>, vector<4x32xf32>,
    %c7 = arith.constant 7 : index
    %c0_85 = arith.constant 0 : index
    %c0_86 = arith.constant 0 : index
    %127 = vector.load %arg14[%c7, %c0_85, %c0_86] : memref<8x4x32xf32, #tpu.memory_space<vmem>>, vector<1x4x32xf32>
    %128 = vector.shape_cast %127 : vector<1x4x32xf32> to vector<4x32xf32>
    %c28 = arith.constant 28 : index
    %c0_87 = arith.constant 0 : index
    %129 = vector.load %arg15[%c28, %c0_87] : memref<32x32xf32, #tpu.memory_space<vmem>>, vector<4x32xf32>
    tpu.vector_store %arg15[%c28, %c0_87], %128 {strides = array<i32>} : memref<32x32xf32, #tpu.memory_space<vmem>>, vector<4x32xf32>,
    %130 = tpu.iota {dimensions = array<i32: 0>} : vector<1024x32xi32>
    %131 = tpu.iota {dimensions = array<i32: 1>} : vector<1024x32xi32>
    %c32_i32 = arith.constant 32 : i32
    %132 = vector.broadcast %c32_i32 : i32 to vector<1024x32xi32>
    %133 = arith.muli %131, %132 : vector<1024x32xi32>
    %134 = arith.subi %130, %133 : vector<1024x32xi32>
    %c0_i32_88 = arith.constant 0 : i32
    %135 = vector.broadcast %c0_i32_88 : i32 to vector<1024x32xi32>
    %136 = arith.cmpi sge, %134, %135 : vector<1024x32xi32>
    %c32_i32_89 = arith.constant 32 : i32
    %137 = vector.broadcast %c32_i32_89 : i32 to vector<1024x32xi32>
    %138 = arith.cmpi slt, %134, %137 : vector<1024x32xi32>
    %139 = arith.andi %136, %138 : vector<1024x32xi1>
    %140 = arith.extui %139 : vector<1024x32xi1> to vector<1024x32xi32>
    %141 = arith.sitofp %140 : vector<1024x32xi32> to vector<1024x32xf32>
    %c0_90 = arith.constant 0 : index
    %c0_91 = arith.constant 0 : index
    %142 = vector.load %arg15[%c0_90, %c0_91] : memref<32x32xf32, #tpu.memory_space<vmem>>, vector<32x32xf32>
    %c0_92 = arith.constant 0 : index
    %c0_93 = arith.constant 0 : index
    %143 = vector.load %arg1[%c0_92, %c0_93] : memref<32x16xf32, #tpu.memory_space<vmem>>, vector<32x16xf32>
    %c0_94 = arith.constant 0 : index
    %c0_95 = arith.constant 0 : index
    %144 = vector.load %arg6[%c0_94, %c0_95] : memref<32x1024xf32, #tpu.memory_space<vmem>>, vector<32x1024xf32>
    %cst_96 = arith.constant dense<0.000000e+00> : vector<32x1024xf32>
    %145 = tpu.matmul %142, %144, %cst_96 {dimension_numbers = #tpu.dot_dimension_numbers<[1], [0], [0], [1], [0, 0, 1, 1], [], []>} : vector<32x32xf32>, vector<32x1024xf32>, vector<32x1024xf32> -> vector<32x1024xf32>
    %c0_97 = arith.constant 0 : index
    %c0_98 = arith.constant 0 : index
    %146 = vector.load %arg7[%c0_97, %c0_98] : memref<1x1024xf32, #tpu.memory_space<vmem>>, vector<1x1024xf32>
    %147 = vector.broadcast %146 : vector<1x1024xf32> to vector<32x1024xf32>
    %148 = arith.addf %145, %147 : vector<32x1024xf32>
    %c0_99 = arith.constant 0 : index
    %c0_100 = arith.constant 0 : index
    %149 = vector.load %arg8[%c0_99, %c0_100] : memref<16x1024xf32, #tpu.memory_space<vmem>>, vector<16x1024xf32>
    %cst_101 = arith.constant dense<0.000000e+00> : vector<32x1024xf32>
    %150 = tpu.matmul %143, %149, %cst_101 {dimension_numbers = #tpu.dot_dimension_numbers<[1], [0], [0], [1], [0, 0, 1, 1], [], []>} : vector<32x16xf32>, vector<16x1024xf32>, vector<32x1024xf32> -> vector<32x1024xf32>
    %c0_102 = arith.constant 0 : index
    %c0_103 = arith.constant 0 : index
    %151 = vector.load %arg9[%c0_102, %c0_103] : memref<1x1024xf32, #tpu.memory_space<vmem>>, vector<1x1024xf32>
    %152 = vector.broadcast %151 : vector<1x1024xf32> to vector<32x1024xf32>
    %153 = arith.addf %150, %152 : vector<32x1024xf32>
    %154 = arith.mulf %148, %153 : vector<32x1024xf32>
    %cst_104 = arith.constant dense<0.000000e+00> : vector<32x32xf32>
    %155 = tpu.matmul %154, %141, %cst_104 {dimension_numbers = #tpu.dot_dimension_numbers<[1], [0], [0], [1], [0, 0, 1, 1], [], []>} : vector<32x1024xf32>, vector<1024x32xf32>, vector<32x32xf32> -> vector<32x32xf32>
    %c0_105 = arith.constant 0 : index
    %c0_106 = arith.constant 0 : index
    %156 = vector.load %arg10[%c0_105, %c0_106] : memref<32x32xf32, #tpu.memory_space<vmem>>, vector<32x32xf32>
    tpu.vector_store %arg10[%c0_105, %c0_106], %155 {strides = array<i32>} : memref<32x32xf32, #tpu.memory_space<vmem>>, vector<32x32xf32>,
    %157 = vector.extract_strided_slice %155 {offsets = [28, 0], sizes = [4, 32], strides = [1, 1]} : vector<32x32xf32> to vector<4x32xf32>
    %c0_107 = arith.constant 0 : index
    %c0_108 = arith.constant 0 : index
    %158 = vector.load %arg11[%c0_107, %c0_108] : memref<4x32xf32, #tpu.memory_space<vmem>>, vector<4x32xf32>
    tpu.vector_store %arg11[%c0_107, %c0_108], %157 {strides = array<i32>} : memref<4x32xf32, #tpu.memory_space<vmem>>, vector<4x32xf32>,
    return
  }
  func.func @transform_0(%arg0: i32) -> (i32, i32) {
    %c0_i32 = arith.constant 0 : i32
    %c0_i32_0 = arith.constant 0 : i32
    return %arg0, %c0_i32 : i32, i32
  }
  func.func @transform_1(%arg0: i32) -> (i32, i32) {
    %c0_i32 = arith.constant 0 : i32
    %c0_i32_0 = arith.constant 0 : i32
    return %arg0, %c0_i32 : i32, i32
  }
  func.func @transform_2(%arg0: i32) -> (i32, i32) {
    %c0_i32 = arith.constant 0 : i32
    %c0_i32_0 = arith.constant 0 : i32
    %c0_i32_1 = arith.constant 0 : i32
    return %c0_i32, %c0_i32_0 : i32, i32
  }
  func.func @transform_3(%arg0: i32) -> (i32, i32) {
    %c0_i32 = arith.constant 0 : i32
    %c0_i32_0 = arith.constant 0 : i32
    %c0_i32_1 = arith.constant 0 : i32
    return %c0_i32, %c0_i32_0 : i32, i32
  }
  func.func @transform_4(%arg0: i32) -> (i32, i32) {
    %c0_i32 = arith.constant 0 : i32
    %c0_i32_0 = arith.constant 0 : i32
    %c0_i32_1 = arith.constant 0 : i32
    return %c0_i32, %c0_i32_0 : i32, i32
  }
  func.func @transform_5(%arg0: i32) -> (i32, i32) {
    %c0_i32 = arith.constant 0 : i32
    %c0_i32_0 = arith.constant 0 : i32
    %c0_i32_1 = arith.constant 0 : i32
    return %c0_i32, %c0_i32_0 : i32, i32
  }
  func.func @transform_6(%arg0: i32) -> (i32, i32) {
    %c0_i32 = arith.constant 0 : i32
    %c0_i32_0 = arith.constant 0 : i32
    %c0_i32_1 = arith.constant 0 : i32
    return %c0_i32, %c0_i32_0 : i32, i32
  }
  func.func @transform_7(%arg0: i32) -> (i32, i32) {
    %c0_i32 = arith.constant 0 : i32
    %c0_i32_0 = arith.constant 0 : i32
    %c0_i32_1 = arith.constant 0 : i32
    return %c0_i32, %c0_i32_0 : i32, i32
  }
  func.func @transform_8(%arg0: i32) -> (i32, i32) {
    %c0_i32 = arith.constant 0 : i32
    %c0_i32_0 = arith.constant 0 : i32
    %c0_i32_1 = arith.constant 0 : i32
    return %c0_i32, %c0_i32_0 : i32, i32
  }
  func.func @transform_9(%arg0: i32) -> (i32, i32) {
    %c0_i32 = arith.constant 0 : i32
    %c0_i32_0 = arith.constant 0 : i32
    return %arg0, %c0_i32 : i32, i32
  }
  func.func @transform_10(%arg0: i32) -> (i32, i32) {
    %c0_i32 = arith.constant 0 : i32
    %c0_i32_0 = arith.constant 0 : i32
    return %arg0, %c0_i32 : i32, i32
  }
  func.func @transform_11(%arg0: i32) -> (i32, i32) {
    %c0_i32 = arith.constant 0 : i32
    %c0_i32_0 = arith.constant 0 : i32
    return %arg0, %c0_i32 : i32, i32
  }
}

</mosaic_0001>

<llo_original>
// kernel: tpu_custom_call.1
$region0: #{tpu_custom_call.1}
  #allocation0 [shape = 'u32[]', space=smem, size = 0x4, offset = 0x4, fixed_abs, tag = 'smem constant byte address 0x4 - core index']
  #allocation1 [shape = 'u32[144,128]{1,0:T(1,128)}', space=vmem, size = 0x12000, scoped, tag = 'internal scratch']
  #allocation2 [shape = 'f32[32,32]{1,0:T(8,128)}', space=vmem, size = 0x4000, scoped, tag = 'scratch operand']
  #allocation3 [shape = 'f32[8,4,32]{2,1,0:T(4,128)}', space=vmem, size = 0x4000, scoped, tag = 'scratch operand']
  #allocation4 [shape = 'f32[32,32]{1,0:T(8,128)}', space=vmem, size = 0x4000, scoped, tag = 'scratch operand']
  %s0 = inlined_call_operand.vmem [shape: f32[32,16], index: 0, kind: input, shape index: {}]
  %s1 = inlined_call_operand.hbm [shape: f32[4,32], index: 1, kind: input, shape index: {}]
  %s2 = inlined_call_operand.vmem [shape: f32[32,32], index: 2, kind: input, shape index: {}]
  %s3 = inlined_call_operand.vmem [shape: f32[16,32], index: 3, kind: input, shape index: {}]
  %s4 = inlined_call_operand.vmem [shape: f32[1,32], index: 4, kind: input, shape index: {}]
  %s5 = inlined_call_operand.hbm [shape: f32[32,1024], index: 5, kind: input, shape index: {}]
  %s6 = inlined_call_operand.vmem [shape: f32[1,1024], index: 6, kind: input, shape index: {}]
  %s7 = inlined_call_operand.hbm [shape: f32[16,1024], index: 7, kind: input, shape index: {}]
  %s8 = inlined_call_operand.hbm [shape: f32[1,1024], index: 8, kind: input, shape index: {}]
  %s9 = inlined_call_operand.hbm [shape: f32[32,32], index: 9, kind: output, shape index: {0}]
  %s10 = inlined_call_operand.hbm [shape: f32[4,32], index: 10, kind: output, shape index: {1}]
  %s11 = inlined_call_operand.hbm [shape: f32[4,32], index: 11, kind: output, shape index: {2}]
  %12 = xla_tuple %s9, %s10, %s11
  %s13 = sld [smem:[#allocation0]]
  $region78: #{tpu_custom_call.1} parent=0
    _
  %s15 = ssub.s32 1, %s13
  %s16 = scalar_select 0, %s15, %s13
  $region1: #{tpu_custom_call.1} parent=0
    #allocation5 [shape = 'u8[2048]{0}', space=vmem, size = 0x800, scoped, tag = 'input window, operand 1, single buffered']
    #allocation6 [shape = 's32[1]{0}', space=sflag, size = 0x4, scoped, tag = 'scoped memory for tpu_custom_call.1']
    #allocation7 [shape = 's32[1]{0}', space=sflag, size = 0x4, scoped, tag = 'scoped memory for tpu_custom_call.1']
    #allocation8 [shape = 'u8[131072]{0}', space=vmem, size = 0x20000, scoped, tag = 'input window, operand 5, single buffered']
    #allocation9 [shape = 's32[1]{0}', space=sflag, size = 0x4, scoped, tag = 'scoped memory for tpu_custom_call.1']
    #allocation10 [shape = 'u8[65536]{0}', space=vmem, size = 0x10000, scoped, tag = 'input window, operand 7, single buffered']
    #allocation11 [shape = 'u8[4096]{0}', space=vmem, size = 0x1000, scoped, tag = 'input window, operand 8, single buffered']
    #allocation12 [shape = 's32[1]{0}', space=sflag, size = 0x4, scoped, tag = 'scoped memory for tpu_custom_call.1']
    #allocation13 [shape = 'u8[16384]{0}', space=vmem, size = 0x4000, scoped, tag = 'output window, operand 0, single buffered']
    #allocation14 [shape = 'u8[2048]{0}', space=vmem, size = 0x800, scoped, tag = 'output window, operand 1, single buffered']
    #allocation15 [shape = 's32[1]{0}', space=sflag, size = 0x4, scoped, tag = 'scoped memory for tpu_custom_call.1']
    #allocation16 [shape = 'u8[2048]{0}', space=vmem, size = 0x800, scoped, tag = 'output window, operand 2, single buffered']
    %17 = vsyncpa [#allocation6], 0
    %18 = vsyncpa [#allocation9], 0
    %19 = vsyncpa [#allocation12], 0
    %20 = vsyncpa [#allocation7], 0
    %21 = vsyncpa [#allocation15], 0
    // Predicated region
    $region2: #{tpu_custom_call.1} parent=1 // pred_check
      _
    $region3: #{tpu_custom_call.1} parent=1 // pred_check_branch
      %23 = sbr.rel (0) target = $region5
    $region4: #{tpu_custom_call.1} parent=1 // pred_region
      _
    $region5: #{tpu_custom_call.1} parent=1 // pred_fallthru
      _
    // Predicated region
    $region6: #{tpu_custom_call.1} parent=1 // pred_check
      _
    $region7: #{tpu_custom_call.1} parent=1 // pred_check_branch
      %25 = sbr.rel (0) target = $region9
    $region8: #{tpu_custom_call.1} parent=1 // pred_region
      %s27 = ssub.s32 64, 64
      %28 = vsyncadd [#allocation6], %s27
      %s30 = sshll.u32 [#allocation5], 4
      %s31 = int_to_ptr.vmem [resolvable:$true] %s30
      %33 = dma.hbm_to_vmem [thread:$0]  %s1, 64, %s31, [#allocation6]
    $region9: #{tpu_custom_call.1} parent=1 // pred_fallthru
      _
    // Predicated region
    $region10: #{tpu_custom_call.1} parent=1 // pred_check
      _
    $region11: #{tpu_custom_call.1} parent=1 // pred_check_branch
      %35 = sbr.rel (0) target = $region13
    $region12: #{tpu_custom_call.1} parent=1 // pred_region
      _
    $region13: #{tpu_custom_call.1} parent=1 // pred_fallthru
      _
    // Predicated region
    $region14: #{tpu_custom_call.1} parent=1 // pred_check
      _
    $region15: #{tpu_custom_call.1} parent=1 // pred_check_branch
      %37 = sbr.rel (0) target = $region17
    $region16: #{tpu_custom_call.1} parent=1 // pred_region
      _
    $region17: #{tpu_custom_call.1} parent=1 // pred_fallthru
      _
    // Predicated region
    $region18: #{tpu_custom_call.1} parent=1 // pred_check
      _
    $region19: #{tpu_custom_call.1} parent=1 // pred_check_branch
      %39 = sbr.rel (0) target = $region21
    $region20: #{tpu_custom_call.1} parent=1 // pred_region
      _
    $region21: #{tpu_custom_call.1} parent=1 // pred_fallthru
      _
    // Predicated region
    $region22: #{tpu_custom_call.1} parent=1 // pred_check
      _
    $region23: #{tpu_custom_call.1} parent=1 // pred_check_branch
      %41 = sbr.rel (0) target = $region25
    $region24: #{tpu_custom_call.1} parent=1 // pred_region
      %s43 = ssub.s32 4096, 4096
      %44 = vsyncadd [#allocation9], %s43
      %s45 = sshll.u32 [#allocation8], 4
      %s46 = int_to_ptr.vmem [resolvable:$true] %s45
      %51 = dma.hbm_to_vmem [thread:$0]  %s5, 4096, %s46, [#allocation9], 1024, 1024, 64
    $region25: #{tpu_custom_call.1} parent=1 // pred_fallthru
      _
    // Predicated region
    $region26: #{tpu_custom_call.1} parent=1 // pred_check
      _
    $region27: #{tpu_custom_call.1} parent=1 // pred_check_branch
      %53 = sbr.rel (0) target = $region29
    $region28: #{tpu_custom_call.1} parent=1 // pred_region
      _
    $region29: #{tpu_custom_call.1} parent=1 // pred_fallthru
      _
    // Predicated region
    $region30: #{tpu_custom_call.1} parent=1 // pred_check
      _
    $region31: #{tpu_custom_call.1} parent=1 // pred_check_branch
      %55 = sbr.rel (0) target = $region33
    $region32: #{tpu_custom_call.1} parent=1 // pred_region
      %s57 = ssub.s32 2048, 2048
      %58 = vsyncadd [#allocation9], %s57
      %s59 = sshll.u32 [#allocation10], 4
      %s60 = int_to_ptr.vmem [resolvable:$true] %s59
      %65 = dma.hbm_to_vmem [thread:$0]  %s7, 2048, %s60, [#allocation9], 1024, 1024, 64
    $region33: #{tpu_custom_call.1} parent=1 // pred_fallthru
      _
    // Predicated region
    $region34: #{tpu_custom_call.1} parent=1 // pred_check
      _
    $region35: #{tpu_custom_call.1} parent=1 // pred_check_branch
      %67 = sbr.rel (0) target = $region37
    $region36: #{tpu_custom_call.1} parent=1 // pred_region
      %s69 = ssub.s32 128, 128
      %70 = vsyncadd [#allocation12], %s69
      %s72 = sshll.u32 [#allocation11], 4
      %s73 = int_to_ptr.vmem [resolvable:$true] %s72
      %75 = dma.hbm_to_vmem [thread:$0]  %s8, 128, %s73, [#allocation12]
    $region37: #{tpu_custom_call.1} parent=1 // pred_fallthru
      _
    // Predicated region
    $region38: #{tpu_custom_call.1} parent=1 // pred_check
      _
    $region39: #{tpu_custom_call.1} parent=1 // pred_check_branch
      %77 = sbr.rel (0) target = $region41
    $region40: #{tpu_custom_call.1} parent=1 // pred_region
      %78 = dma.done [#allocation6], 64
    $region41: #{tpu_custom_call.1} parent=1 // pred_fallthru
      _
    // Predicated region
    $region42: #{tpu_custom_call.1} parent=1 // pred_check
      _
    $region43: #{tpu_custom_call.1} parent=1 // pred_check_branch
      %80 = sbr.rel (0) target = $region45
    $region44: #{tpu_custom_call.1} parent=1 // pred_region
      %81 = dma.done [#allocation9], 4096
    $region45: #{tpu_custom_call.1} parent=1 // pred_fallthru
      _
    // Predicated region
    $region46: #{tpu_custom_call.1} parent=1 // pred_check
      _
    $region47: #{tpu_custom_call.1} parent=1 // pred_check_branch
      %83 = sbr.rel (0) target = $region49
    $region48: #{tpu_custom_call.1} parent=1 // pred_region
      %84 = dma.done [#allocation9], 2048
    $region49: #{tpu_custom_call.1} parent=1 // pred_fallthru
      _
    // Predicated region
    $region50: #{tpu_custom_call.1} parent=1 // pred_check
      _
    $region51: #{tpu_custom_call.1} parent=1 // pred_check_branch
      %86 = sbr.rel (0) target = $region53
    $region52: #{tpu_custom_call.1} parent=1 // pred_region
      %87 = dma.done [#allocation12], 128
    $region53: #{tpu_custom_call.1} parent=1 // pred_fallthru
      _
    %v88 = vld [vmem:[%s0] sm:$0xff]
    %v89 = vld [vmem:[%s0 + $0x8] sm:$0xff]
    %v90 = vld [vmem:[%s0 + $0x10] sm:$0xff]
    %v91 = vld [vmem:[%s0 + $0x18] sm:$0xff]
    %v92 = vld [vmem:[%s3] sm:$0xff]
    %v93 = vld [vmem:[%s3 + $0x8] sm:$0xff]
    %v94 = vld [vmem:[%s4] sm:$0x1]
    %v96 = vlaneseq
    %v97 = vshrl.u32 %v96, 7
    %v98 = vsub.s32 0, %v97
    %v99 = vrot.slane %v94, %v98
    %vm101 = vcmask 130048
    %v103 = vsel %vm101, %v88, 0
    %v106 = vsel %vm101, %v89, 0
    %v109 = vsel %vm101, %v90, 0
    %v112 = vsel %vm101, %v91, 0
    %114 = vmatprep.subr.mxu0 0.0
    %115 = vmatpush1.msra.mxu0 0.0
    %116 = vmatprep.subr.mxu0 0.0
    %117 = vmatpush1.msra.mxu0 0.0
    %118 = vmatprep.subr.mxu0 0.0
    %119 = vmatpush1.msra.mxu0 0.0
    %120 = vmatprep.subr.mxu0 0.0
    %121 = vmatpush1.msra.mxu0 0.0
    %122 = vmatprep.subr.mxu0 0.0
    %123 = vmatpush1.msra.mxu0 0.0
    %124 = vmatprep.subr.mxu0 0.0
    %125 = vmatpush1.msra.mxu0 0.0
    %126 = vmatprep.subr.mxu0 0.0
    %127 = vmatpush1.msra.mxu0 0.0
    %128 = vmatprep.subr.mxu0 0.0
    %129 = vmatpush1.msra.mxu0 0.0
    %130 = vmatprep.subr.mxu0 0.0
    %131 = vmatpush1.msra.mxu0 0.0
    %132 = vmatprep.subr.mxu0 0.0
    %133 = vmatpush1.msra.mxu0 0.0
    %134 = vmatprep.subr.mxu0 0.0
    %135 = vmatpush1.msra.mxu0 0.0
    %136 = vmatprep.subr.mxu0 0.0
    %137 = vmatpush1.msra.mxu0 0.0
    %138 = vmatprep.subr.mxu0 0.0
    %139 = vmatpush1.msra.mxu0 0.0
    %140 = vmatprep.subr.mxu0 0.0
    %141 = vmatpush1.msra.mxu0 0.0
    %142 = vmatprep.subr.mxu0 0.0
    %143 = vmatpush1.msra.mxu0 %v93
    %144 = vmatprep.subr.mxu0 0.0
    %145 = vmatpush1.msra.mxu0 %v92
    %146 = vmatprep.subr.mxu0 0.0
    %147 = vmatpush2.msra.mxu0 0.0
    %148 = vmatprep.subr.mxu0 0.0
    %149 = vmatpush2.msra.mxu0 0.0
    %150 = vmatprep.subr.mxu0 0.0
    %151 = vmatpush2.msra.mxu0 0.0
    %152 = vmatprep.subr.mxu0 0.0
    %153 = vmatpush2.msra.mxu0 0.0
    %154 = vmatprep.subr.mxu0 0.0
    %155 = vmatpush2.msra.mxu0 0.0
    %156 = vmatprep.subr.mxu0 0.0
    %157 = vmatpush2.msra.mxu0 0.0
    %158 = vmatprep.subr.mxu0 0.0
    %159 = vmatpush2.msra.mxu0 0.0
    %160 = vmatprep.subr.mxu0 0.0
    %161 = vmatpush2.msra.mxu0 0.0
    %162 = vmatprep.subr.mxu0 0.0
    %163 = vmatpush2.msra.mxu0 0.0
    %164 = vmatprep.subr.mxu0 0.0
    %165 = vmatpush2.msra.mxu0 0.0
    %166 = vmatprep.subr.mxu0 0.0
    %167 = vmatpush2.msra.mxu0 0.0
    %168 = vmatprep.subr.mxu0 0.0
    %169 = vmatpush2.msra.mxu0 0.0
    %170 = vmatprep.subr.mxu0 0.0
    %171 = vmatpush2.msra.mxu0 0.0
    %172 = vmatprep.subr.mxu0 0.0
    %173 = vmatpush2.msra.mxu0 0.0
    %174 = vmatprep.subr.mxu0 0.0
    %175 = vmatpush2.msra.mxu0 0.0
    %176 = vmatprep.subr.mxu0 0.0
    %177 = vmatpush2.msra.mxu0 0.0
    %178 = vmatprep.mubr.f32.mxu0 0.0
    %179 = vmatmul.mubr.f32.gmra.mxu0 %v103
    %v180 = vpop.f32.mrf.mxu0
    %v181 = vadd.f32 %v99, %v180
    %v182 = vpop.f32.mrf.mxu0
    %183 = vmatprep.mubr.f32.mxu0 0.0
    %184 = vmatmul.mubr.f32.gmra.mxu0 %v106
    %v185 = vpop.f32.mrf.mxu0
    %v186 = vadd.f32 %v99, %v185
    %v187 = vpop.f32.mrf.mxu0
    %188 = vmatprep.mubr.f32.mxu0 0.0
    %189 = vmatmul.mubr.f32.gmra.mxu0 %v109
    %v190 = vpop.f32.mrf.mxu0
    %v191 = vadd.f32 %v99, %v190
    %v192 = vpop.f32.mrf.mxu0
    %193 = vmatprep.mubr.f32.mxu0 0.0
    %194 = vmatmul.mubr.f32.gmra.mxu0 %v112
    %v195 = vpop.f32.mrf.mxu0
    %v196 = vadd.f32 %v99, %v195
    %v197 = vpop.f32.mrf.mxu0
    %198 = vdwg.mxu0
    %vm199 = vcmask 261120
    %200 = vst.msk [vmem:[#allocation2] sm:$0xff] %vm199, %v181
    %201 = vst.msk [vmem:[#allocation2 + $0x8] sm:$0xff] %vm199, %v186
    %202 = vst.msk [vmem:[#allocation2 + $0x10] sm:$0xff] %vm199, %v191
    %203 = vst.msk [vmem:[#allocation2 + $0x18] sm:$0xff] %vm199, %v196
    %v204 = vld [vmem:[%s2] sm:$0xff]
    %v205 = vld [vmem:[%s2 + $0x8] sm:$0xff]
    %v206 = vld [vmem:[%s2 + $0x10] sm:$0xff]
    %v207 = vld [vmem:[%s2 + $0x18] sm:$0xff]
    %v208 = vld [vmem:[#allocation5] sm:$0xf]
    %v209 = vld [vmem:[#allocation2] sm:$0xf]
    %vm210 = vcmask 257024
    %211 = vst.msk [vmem:[#allocation3] sm:$0xf] %vm210, %v208
    %v213 = vsel %vm199, %v208, 0
    %215 = vmatprep.subr.mxu0 0.0
    %216 = vmatpush1.msra.mxu0 0.0
    %217 = vmatprep.subr.mxu0 0.0
    %218 = vmatpush1.msra.mxu0 0.0
    %219 = vmatprep.subr.mxu0 0.0
    %220 = vmatpush1.msra.mxu0 0.0
    %221 = vmatprep.subr.mxu0 0.0
    %222 = vmatpush1.msra.mxu0 0.0
    %223 = vmatprep.subr.mxu0 0.0
    %224 = vmatpush1.msra.mxu0 0.0
    %225 = vmatprep.subr.mxu0 0.0
    %226 = vmatpush1.msra.mxu0 0.0
    %227 = vmatprep.subr.mxu0 0.0
    %228 = vmatpush1.msra.mxu0 0.0
    %229 = vmatprep.subr.mxu0 0.0
    %230 = vmatpush1.msra.mxu0 0.0
    %231 = vmatprep.subr.mxu0 0.0
    %232 = vmatpush1.msra.mxu0 0.0
    %233 = vmatprep.subr.mxu0 0.0
    %234 = vmatpush1.msra.mxu0 0.0
    %235 = vmatprep.subr.mxu0 0.0
    %236 = vmatpush1.msra.mxu0 0.0
    %237 = vmatprep.subr.mxu0 0.0
    %238 = vmatpush1.msra.mxu0 0.0
    %239 = vmatprep.subr.mxu0 0.0
    %240 = vmatpush1.msra.mxu0 %v207
    %241 = vmatprep.subr.mxu0 0.0
    %242 = vmatpush1.msra.mxu0 %v206
    %243 = vmatprep.subr.mxu0 0.0
    %244 = vmatpush1.msra.mxu0 %v205
    %245 = vmatprep.subr.mxu0 0.0
    %246 = vmatpush1.msra.mxu0 %v204
    %247 = vmatprep.subr.mxu0 0.0
    %248 = vmatpush2.msra.mxu0 0.0
    %249 = vmatprep.subr.mxu0 0.0
    %250 = vmatpush2.msra.mxu0 0.0
    %251 = vmatprep.subr.mxu0 0.0
    %252 = vmatpush2.msra.mxu0 0.0
    %253 = vmatprep.subr.mxu0 0.0
    %254 = vmatpush2.msra.mxu0 0.0
    %255 = vmatprep.subr.mxu0 0.0
    %256 = vmatpush2.msra.mxu0 0.0
    %257 = vmatprep.subr.mxu0 0.0
    %258 = vmatpush2.msra.mxu0 0.0
    %259 = vmatprep.subr.mxu0 0.0
    %260 = vmatpush2.msra.mxu0 0.0
    %261 = vmatprep.subr.mxu0 0.0
    %262 = vmatpush2.msra.mxu0 0.0
    %263 = vmatprep.subr.mxu0 0.0
    %264 = vmatpush2.msra.mxu0 0.0
    %265 = vmatprep.subr.mxu0 0.0
    %266 = vmatpush2.msra.mxu0 0.0
    %267 = vmatprep.subr.mxu0 0.0
    %268 = vmatpush2.msra.mxu0 0.0
    %269 = vmatprep.subr.mxu0 0.0
    %270 = vmatpush2.msra.mxu0 0.0
    %271 = vmatprep.subr.mxu0 0.0
    %272 = vmatpush2.msra.mxu0 0.0
    %273 = vmatprep.subr.mxu0 0.0
    %274 = vmatpush2.msra.mxu0 0.0
    %275 = vmatprep.subr.mxu0 0.0
    %276 = vmatpush2.msra.mxu0 0.0
    %277 = vmatprep.subr.mxu0 0.0
    %278 = vmatpush2.msra.mxu0 0.0
    %279 = vmatprep.mubr.f32.mxu0 0.0
    %280 = vmatmul.mubr.f32.gmra.mxu0 %v213
    %v281 = vpop.f32.mrf.mxu0
    %v282 = vadd.f32 %v209, %v281
    %v283 = vpop.f32.mrf.mxu0
    %284 = vdwg.mxu0
    %v285 = vmax.f32 %v282, 0.0
    %s286 = scalar_lea.vmem [#allocation2], 4
    %v287 = vld [vmem:[%s286] sm:$0xf]
    %s288 = scalar_lea.vmem [#allocation3], 4
    %289 = vst.msk [vmem:[%s288] sm:$0xf] %vm210, %v285
    %v291 = vsel %vm199, %v285, 0
    %293 = vmatprep.subr.mxu0 0.0
    %294 = vmatpush1.msra.mxu0 0.0
    %295 = vmatprep.subr.mxu0 0.0
    %296 = vmatpush1.msra.mxu0 0.0
    %297 = vmatprep.subr.mxu0 0.0
    %298 = vmatpush1.msra.mxu0 0.0
    %299 = vmatprep.subr.mxu0 0.0
    %300 = vmatpush1.msra.mxu0 0.0
    %301 = vmatprep.subr.mxu0 0.0
    %302 = vmatpush1.msra.mxu0 0.0
    %303 = vmatprep.subr.mxu0 0.0
    %304 = vmatpush1.msra.mxu0 0.0
    %305 = vmatprep.subr.mxu0 0.0
    %306 = vmatpush1.msra.mxu0 0.0
    %307 = vmatprep.subr.mxu0 0.0
    %308 = vmatpush1.msra.mxu0 0.0
    %309 = vmatprep.subr.mxu0 0.0
    %310 = vmatpush1.msra.mxu0 0.0
    %311 = vmatprep.subr.mxu0 0.0
    %312 = vmatpush1.msra.mxu0 0.0
    %313 = vmatprep.subr.mxu0 0.0
    %314 = vmatpush1.msra.mxu0 0.0
    %315 = vmatprep.subr.mxu0 0.0
    %316 = vmatpush1.msra.mxu0 0.0
    %317 = vmatprep.subr.mxu0 0.0
    %318 = vmatpush1.msra.mxu0 %v207
    %319 = vmatprep.subr.mxu0 0.0
    %320 = vmatpush1.msra.mxu0 %v206
    %321 = vmatprep.subr.mxu0 0.0
    %322 = vmatpush1.msra.mxu0 %v205
    %323 = vmatprep.subr.mxu0 0.0
    %324 = vmatpush1.msra.mxu0 %v204
    %325 = vmatprep.subr.mxu0 0.0
    %326 = vmatpush2.msra.mxu0 0.0
    %327 = vmatprep.subr.mxu0 0.0
    %328 = vmatpush2.msra.mxu0 0.0
    %329 = vmatprep.subr.mxu0 0.0
    %330 = vmatpush2.msra.mxu0 0.0
    %331 = vmatprep.subr.mxu0 0.0
    %332 = vmatpush2.msra.mxu0 0.0
    %333 = vmatprep.subr.mxu0 0.0
    %334 = vmatpush2.msra.mxu0 0.0
    %335 = vmatprep.subr.mxu0 0.0
    %336 = vmatpush2.msra.mxu0 0.0
    %337 = vmatprep.subr.mxu0 0.0
    %338 = vmatpush2.msra.mxu0 0.0
    %339 = vmatprep.subr.mxu0 0.0
    %340 = vmatpush2.msra.mxu0 0.0
    %341 = vmatprep.subr.mxu0 0.0
    %342 = vmatpush2.msra.mxu0 0.0
    %343 = vmatprep.subr.mxu0 0.0
    %344 = vmatpush2.msra.mxu0 0.0
    %345 = vmatprep.subr.mxu0 0.0
    %346 = vmatpush2.msra.mxu0 0.0
    %347 = vmatprep.subr.mxu0 0.0
    %348 = vmatpush2.msra.mxu0 0.0
    %349 = vmatprep.subr.mxu0 0.0
    %350 = vmatpush2.msra.mxu0 0.0
    %351 = vmatprep.subr.mxu0 0.0
    %352 = vmatpush2.msra.mxu0 0.0
    %353 = vmatprep.subr.mxu0 0.0
    %354 = vmatpush2.msra.mxu0 0.0
    %355 = vmatprep.subr.mxu0 0.0
    %356 = vmatpush2.msra.mxu0 0.0
    %357 = vmatprep.mubr.f32.mxu0 0.0
    %358 = vmatmul.mubr.f32.gmra.mxu0 %v291
    %v359 = vpop.f32.mrf.mxu0
    %v360 = vadd.f32 %v287, %v359
    %v361 = vpop.f32.mrf.mxu0
    %362 = vdwg.mxu0
    %v363 = vmax.f32 %v360, 0.0
    %s364 = scalar_lea.vmem [#allocation2], 8
    %v365 = vld [vmem:[%s364] sm:$0xf]
    %s366 = scalar_lea.vmem [#allocation3], 8
    %367 = vst.msk [vmem:[%s366] sm:$0xf] %vm210, %v363
    %v369 = vsel %vm199, %v363, 0
    %371 = vmatprep.subr.mxu0 0.0
    %372 = vmatpush1.msra.mxu0 0.0
    %373 = vmatprep.subr.mxu0 0.0
    %374 = vmatpush1.msra.mxu0 0.0
    %375 = vmatprep.subr.mxu0 0.0
    %376 = vmatpush1.msra.mxu0 0.0
    %377 = vmatprep.subr.mxu0 0.0
    %378 = vmatpush1.msra.mxu0 0.0
    %379 = vmatprep.subr.mxu0 0.0
    %380 = vmatpush1.msra.mxu0 0.0
    %381 = vmatprep.subr.mxu0 0.0
    %382 = vmatpush1.msra.mxu0 0.0
    %383 = vmatprep.subr.mxu0 0.0
    %384 = vmatpush1.msra.mxu0 0.0
    %385 = vmatprep.subr.mxu0 0.0
    %386 = vmatpush1.msra.mxu0 0.0
    %387 = vmatprep.subr.mxu0 0.0
    %388 = vmatpush1.msra.mxu0 0.0
    %389 = vmatprep.subr.mxu0 0.0
    %390 = vmatpush1.msra.mxu0 0.0
    %391 = vmatprep.subr.mxu0 0.0
    %392 = vmatpush1.msra.mxu0 0.0
    %393 = vmatprep.subr.mxu0 0.0
    %394 = vmatpush1.msra.mxu0 0.0
    %395 = vmatprep.subr.mxu0 0.0
    %396 = vmatpush1.msra.mxu0 %v207
    %397 = vmatprep.subr.mxu0 0.0
    %398 = vmatpush1.msra.mxu0 %v206
    %399 = vmatprep.subr.mxu0 0.0
    %400 = vmatpush1.msra.mxu0 %v205
    %401 = vmatprep.subr.mxu0 0.0
    %402 = vmatpush1.msra.mxu0 %v204
    %403 = vmatprep.subr.mxu0 0.0
    %404 = vmatpush2.msra.mxu0 0.0
    %405 = vmatprep.subr.mxu0 0.0
    %406 = vmatpush2.msra.mxu0 0.0
    %407 = vmatprep.subr.mxu0 0.0
    %408 = vmatpush2.msra.mxu0 0.0
    %409 = vmatprep.subr.mxu0 0.0
    %410 = vmatpush2.msra.mxu0 0.0
    %411 = vmatprep.subr.mxu0 0.0
    %412 = vmatpush2.msra.mxu0 0.0
    %413 = vmatprep.subr.mxu0 0.0
    %414 = vmatpush2.msra.mxu0 0.0
    %415 = vmatprep.subr.mxu0 0.0
    %416 = vmatpush2.msra.mxu0 0.0
    %417 = vmatprep.subr.mxu0 0.0
    %418 = vmatpush2.msra.mxu0 0.0
    %419 = vmatprep.subr.mxu0 0.0
    %420 = vmatpush2.msra.mxu0 0.0
    %421 = vmatprep.subr.mxu0 0.0
    %422 = vmatpush2.msra.mxu0 0.0
    %423 = vmatprep.subr.mxu0 0.0
    %424 = vmatpush2.msra.mxu0 0.0
    %425 = vmatprep.subr.mxu0 0.0
    %426 = vmatpush2.msra.mxu0 0.0
    %427 = vmatprep.subr.mxu0 0.0
    %428 = vmatpush2.msra.mxu0 0.0
    %429 = vmatprep.subr.mxu0 0.0
    %430 = vmatpush2.msra.mxu0 0.0
    %431 = vmatprep.subr.mxu0 0.0
    %432 = vmatpush2.msra.mxu0 0.0
    %433 = vmatprep.subr.mxu0 0.0
    %434 = vmatpush2.msra.mxu0 0.0
    %435 = vmatprep.mubr.f32.mxu0 0.0
    %436 = vmatmul.mubr.f32.gmra.mxu0 %v369
    %v437 = vpop.f32.mrf.mxu0
    %v438 = vadd.f32 %v365, %v437
    %v439 = vpop.f32.mrf.mxu0
    %440 = vdwg.mxu0
    %v441 = vmax.f32 %v438, 0.0
    %s442 = scalar_lea.vmem [#allocation2], 12
    %v443 = vld [vmem:[%s442] sm:$0xf]
    %s444 = scalar_lea.vmem [#allocation3], 12
    %445 = vst.msk [vmem:[%s444] sm:$0xf] %vm210, %v441
    %v447 = vsel %vm199, %v441, 0
    %449 = vmatprep.subr.mxu0 0.0
    %450 = vmatpush1.msra.mxu0 0.0
    %451 = vmatprep.subr.mxu0 0.0
    %452 = vmatpush1.msra.mxu0 0.0
    %453 = vmatprep.subr.mxu0 0.0
    %454 = vmatpush1.msra.mxu0 0.0
    %455 = vmatprep.subr.mxu0 0.0
    %456 = vmatpush1.msra.mxu0 0.0
    %457 = vmatprep.subr.mxu0 0.0
    %458 = vmatpush1.msra.mxu0 0.0
    %459 = vmatprep.subr.mxu0 0.0
    %460 = vmatpush1.msra.mxu0 0.0
    %461 = vmatprep.subr.mxu0 0.0
    %462 = vmatpush1.msra.mxu0 0.0
    %463 = vmatprep.subr.mxu0 0.0
    %464 = vmatpush1.msra.mxu0 0.0
    %465 = vmatprep.subr.mxu0 0.0
    %466 = vmatpush1.msra.mxu0 0.0
    %467 = vmatprep.subr.mxu0 0.0
    %468 = vmatpush1.msra.mxu0 0.0
    %469 = vmatprep.subr.mxu0 0.0
    %470 = vmatpush1.msra.mxu0 0.0
    %471 = vmatprep.subr.mxu0 0.0
    %472 = vmatpush1.msra.mxu0 0.0
    %473 = vmatprep.subr.mxu0 0.0
    %474 = vmatpush1.msra.mxu0 %v207
    %475 = vmatprep.subr.mxu0 0.0
    %476 = vmatpush1.msra.mxu0 %v206
    %477 = vmatprep.subr.mxu0 0.0
    %478 = vmatpush1.msra.mxu0 %v205
    %479 = vmatprep.subr.mxu0 0.0
    %480 = vmatpush1.msra.mxu0 %v204
    %481 = vmatprep.subr.mxu0 0.0
    %482 = vmatpush2.msra.mxu0 0.0
    %483 = vmatprep.subr.mxu0 0.0
    %484 = vmatpush2.msra.mxu0 0.0
    %485 = vmatprep.subr.mxu0 0.0
    %486 = vmatpush2.msra.mxu0 0.0
    %487 = vmatprep.subr.mxu0 0.0
    %488 = vmatpush2.msra.mxu0 0.0
    %489 = vmatprep.subr.mxu0 0.0
    %490 = vmatpush2.msra.mxu0 0.0
    %491 = vmatprep.subr.mxu0 0.0
    %492 = vmatpush2.msra.mxu0 0.0
    %493 = vmatprep.subr.mxu0 0.0
    %494 = vmatpush2.msra.mxu0 0.0
    %495 = vmatprep.subr.mxu0 0.0
    %496 = vmatpush2.msra.mxu0 0.0
    %497 = vmatprep.subr.mxu0 0.0
    %498 = vmatpush2.msra.mxu0 0.0
    %499 = vmatprep.subr.mxu0 0.0
    %500 = vmatpush2.msra.mxu0 0.0
    %501 = vmatprep.subr.mxu0 0.0
    %502 = vmatpush2.msra.mxu0 0.0
    %503 = vmatprep.subr.mxu0 0.0
    %504 = vmatpush2.msra.mxu0 0.0
    %505 = vmatprep.subr.mxu0 0.0
    %506 = vmatpush2.msra.mxu0 0.0
    %507 = vmatprep.subr.mxu0 0.0
    %508 = vmatpush2.msra.mxu0 0.0
    %509 = vmatprep.subr.mxu0 0.0
    %510 = vmatpush2.msra.mxu0 0.0
    %511 = vmatprep.subr.mxu0 0.0
    %512 = vmatpush2.msra.mxu0 0.0
    %513 = vmatprep.mubr.f32.mxu0 0.0
    %514 = vmatmul.mubr.f32.gmra.mxu0 %v447
    %v515 = vpop.f32.mrf.mxu0
    %v516 = vadd.f32 %v443, %v515
    %v517 = vpop.f32.mrf.mxu0
    %518 = vdwg.mxu0
    %v519 = vmax.f32 %v516, 0.0
    %s520 = scalar_lea.vmem [#allocation2], 16
    %v521 = vld [vmem:[%s520] sm:$0xf]
    %s522 = scalar_lea.vmem [#allocation3], 16
    %523 = vst.msk [vmem:[%s522] sm:$0xf] %vm210, %v519
    %v525 = vsel %vm199, %v519, 0
    %527 = vmatprep.subr.mxu0 0.0
    %528 = vmatpush1.msra.mxu0 0.0
    %529 = vmatprep.subr.mxu0 0.0
    %530 = vmatpush1.msra.mxu0 0.0
    %531 = vmatprep.subr.mxu0 0.0
    %532 = vmatpush1.msra.mxu0 0.0
    %533 = vmatprep.subr.mxu0 0.0
    %534 = vmatpush1.msra.mxu0 0.0
    %535 = vmatprep.subr.mxu0 0.0
    %536 = vmatpush1.msra.mxu0 0.0
    %537 = vmatprep.subr.mxu0 0.0
    %538 = vmatpush1.msra.mxu0 0.0
    %539 = vmatprep.subr.mxu0 0.0
    %540 = vmatpush1.msra.mxu0 0.0
    %541 = vmatprep.subr.mxu0 0.0
    %542 = vmatpush1.msra.mxu0 0.0
    %543 = vmatprep.subr.mxu0 0.0
    %544 = vmatpush1.msra.mxu0 0.0
    %545 = vmatprep.subr.mxu0 0.0
    %546 = vmatpush1.msra.mxu0 0.0
    %547 = vmatprep.subr.mxu0 0.0
    %548 = vmatpush1.msra.mxu0 0.0
    %549 = vmatprep.subr.mxu0 0.0
    %550 = vmatpush1.msra.mxu0 0.0
    %551 = vmatprep.subr.mxu0 0.0
    %552 = vmatpush1.msra.mxu0 %v207
    %553 = vmatprep.subr.mxu0 0.0
    %554 = vmatpush1.msra.mxu0 %v206
    %555 = vmatprep.subr.mxu0 0.0
    %556 = vmatpush1.msra.mxu0 %v205
    %557 = vmatprep.subr.mxu0 0.0
    %558 = vmatpush1.msra.mxu0 %v204
    %559 = vmatprep.subr.mxu0 0.0
    %560 = vmatpush2.msra.mxu0 0.0
    %561 = vmatprep.subr.mxu0 0.0
    %562 = vmatpush2.msra.mxu0 0.0
    %563 = vmatprep.subr.mxu0 0.0
    %564 = vmatpush2.msra.mxu0 0.0
    %565 = vmatprep.subr.mxu0 0.0
    %566 = vmatpush2.msra.mxu0 0.0
    %567 = vmatprep.subr.mxu0 0.0
    %568 = vmatpush2.msra.mxu0 0.0
    %569 = vmatprep.subr.mxu0 0.0
    %570 = vmatpush2.msra.mxu0 0.0
    %571 = vmatprep.subr.mxu0 0.0
    %572 = vmatpush2.msra.mxu0 0.0
    %573 = vmatprep.subr.mxu0 0.0
    %574 = vmatpush2.msra.mxu0 0.0
    %575 = vmatprep.subr.mxu0 0.0
    %576 = vmatpush2.msra.mxu0 0.0
    %577 = vmatprep.subr.mxu0 0.0
    %578 = vmatpush2.msra.mxu0 0.0
    %579 = vmatprep.subr.mxu0 0.0
    %580 = vmatpush2.msra.mxu0 0.0
    %581 = vmatprep.subr.mxu0 0.0
    %582 = vmatpush2.msra.mxu0 0.0
    %583 = vmatprep.subr.mxu0 0.0
    %584 = vmatpush2.msra.mxu0 0.0
    %585 = vmatprep.subr.mxu0 0.0
    %586 = vmatpush2.msra.mxu0 0.0
    %587 = vmatprep.subr.mxu0 0.0
    %588 = vmatpush2.msra.mxu0 0.0
    %589 = vmatprep.subr.mxu0 0.0
    %590 = vmatpush2.msra.mxu0 0.0
    %591 = vmatprep.mubr.f32.mxu0 0.0
    %592 = vmatmul.mubr.f32.gmra.mxu0 %v525
    %v593 = vpop.f32.mrf.mxu0
    %v594 = vadd.f32 %v521, %v593
    %v595 = vpop.f32.mrf.mxu0
    %596 = vdwg.mxu0
    %v597 = vmax.f32 %v594, 0.0
    %s598 = scalar_lea.vmem [#allocation2], 20
    %v599 = vld [vmem:[%s598] sm:$0xf]
    %s600 = scalar_lea.vmem [#allocation3], 20
    %601 = vst.msk [vmem:[%s600] sm:$0xf] %vm210, %v597
    %v603 = vsel %vm199, %v597, 0
    %605 = vmatprep.subr.mxu0 0.0
    %606 = vmatpush1.msra.mxu0 0.0
    %607 = vmatprep.subr.mxu0 0.0
    %608 = vmatpush1.msra.mxu0 0.0
    %609 = vmatprep.subr.mxu0 0.0
    %610 = vmatpush1.msra.mxu0 0.0
    %611 = vmatprep.subr.mxu0 0.0
    %612 = vmatpush1.msra.mxu0 0.0
    %613 = vmatprep.subr.mxu0 0.0
    %614 = vmatpush1.msra.mxu0 0.0
    %615 = vmatprep.subr.mxu0 0.0
    %616 = vmatpush1.msra.mxu0 0.0
    %617 = vmatprep.subr.mxu0 0.0
    %618 = vmatpush1.msra.mxu0 0.0
    %619 = vmatprep.subr.mxu0 0.0
    %620 = vmatpush1.msra.mxu0 0.0
    %621 = vmatprep.subr.mxu0 0.0
    %622 = vmatpush1.msra.mxu0 0.0
    %623 = vmatprep.subr.mxu0 0.0
    %624 = vmatpush1.msra.mxu0 0.0
    %625 = vmatprep.subr.mxu0 0.0
    %626 = vmatpush1.msra.mxu0 0.0
    %627 = vmatprep.subr.mxu0 0.0
    %628 = vmatpush1.msra.mxu0 0.0
    %629 = vmatprep.subr.mxu0 0.0
    %630 = vmatpush1.msra.mxu0 %v207
    %631 = vmatprep.subr.mxu0 0.0
    %632 = vmatpush1.msra.mxu0 %v206
    %633 = vmatprep.subr.mxu0 0.0
    %634 = vmatpush1.msra.mxu0 %v205
    %635 = vmatprep.subr.mxu0 0.0
    %636 = vmatpush1.msra.mxu0 %v204
    %637 = vmatprep.subr.mxu0 0.0
    %638 = vmatpush2.msra.mxu0 0.0
    %639 = vmatprep.subr.mxu0 0.0
    %640 = vmatpush2.msra.mxu0 0.0
    %641 = vmatprep.subr.mxu0 0.0
    %642 = vmatpush2.msra.mxu0 0.0
    %643 = vmatprep.subr.mxu0 0.0
    %644 = vmatpush2.msra.mxu0 0.0
    %645 = vmatprep.subr.mxu0 0.0
    %646 = vmatpush2.msra.mxu0 0.0
    %647 = vmatprep.subr.mxu0 0.0
    %648 = vmatpush2.msra.mxu0 0.0
    %649 = vmatprep.subr.mxu0 0.0
    %650 = vmatpush2.msra.mxu0 0.0
    %651 = vmatprep.subr.mxu0 0.0
    %652 = vmatpush2.msra.mxu0 0.0
    %653 = vmatprep.subr.mxu0 0.0
    %654 = vmatpush2.msra.mxu0 0.0
    %655 = vmatprep.subr.mxu0 0.0
    %656 = vmatpush2.msra.mxu0 0.0
    %657 = vmatprep.subr.mxu0 0.0
    %658 = vmatpush2.msra.mxu0 0.0
    %659 = vmatprep.subr.mxu0 0.0
    %660 = vmatpush2.msra.mxu0 0.0
    %661 = vmatprep.subr.mxu0 0.0
    %662 = vmatpush2.msra.mxu0 0.0
    %663 = vmatprep.subr.mxu0 0.0
    %664 = vmatpush2.msra.mxu0 0.0
    %665 = vmatprep.subr.mxu0 0.0
    %666 = vmatpush2.msra.mxu0 0.0
    %667 = vmatprep.subr.mxu0 0.0
    %668 = vmatpush2.msra.mxu0 0.0
    %669 = vmatprep.mubr.f32.mxu0 0.0
    %670 = vmatmul.mubr.f32.gmra.mxu0 %v603
    %v671 = vpop.f32.mrf.mxu0
    %v672 = vadd.f32 %v599, %v671
    %v673 = vpop.f32.mrf.mxu0
    %674 = vdwg.mxu0
    %v675 = vmax.f32 %v672, 0.0
    %s676 = scalar_lea.vmem [#allocation2], 24
    %v677 = vld [vmem:[%s676] sm:$0xf]
    %s678 = scalar_lea.vmem [#allocation3], 24
    %679 = vst.msk [vmem:[%s678] sm:$0xf] %vm210, %v675
    %v681 = vsel %vm199, %v675, 0
    %683 = vmatprep.subr.mxu0 0.0
    %684 = vmatpush1.msra.mxu0 0.0
    %685 = vmatprep.subr.mxu0 0.0
    %686 = vmatpush1.msra.mxu0 0.0
    %687 = vmatprep.subr.mxu0 0.0
    %688 = vmatpush1.msra.mxu0 0.0
    %689 = vmatprep.subr.mxu0 0.0
    %690 = vmatpush1.msra.mxu0 0.0
    %691 = vmatprep.subr.mxu0 0.0
    %692 = vmatpush1.msra.mxu0 0.0
    %693 = vmatprep.subr.mxu0 0.0
    %694 = vmatpush1.msra.mxu0 0.0
    %695 = vmatprep.subr.mxu0 0.0
    %696 = vmatpush1.msra.mxu0 0.0
    %697 = vmatprep.subr.mxu0 0.0
    %698 = vmatpush1.msra.mxu0 0.0
    %699 = vmatprep.subr.mxu0 0.0
    %700 = vmatpush1.msra.mxu0 0.0
    %701 = vmatprep.subr.mxu0 0.0
    %702 = vmatpush1.msra.mxu0 0.0
    %703 = vmatprep.subr.mxu0 0.0
    %704 = vmatpush1.msra.mxu0 0.0
    %705 = vmatprep.subr.mxu0 0.0
    %706 = vmatpush1.msra.mxu0 0.0
    %707 = vmatprep.subr.mxu0 0.0
    %708 = vmatpush1.msra.mxu0 %v207
    %709 = vmatprep.subr.mxu0 0.0
    %710 = vmatpush1.msra.mxu0 %v206
    %711 = vmatprep.subr.mxu0 0.0
    %712 = vmatpush1.msra.mxu0 %v205
    %713 = vmatprep.subr.mxu0 0.0
    %714 = vmatpush1.msra.mxu0 %v204
    %715 = vmatprep.subr.mxu0 0.0
    %716 = vmatpush2.msra.mxu0 0.0
    %717 = vmatprep.subr.mxu0 0.0
    %718 = vmatpush2.msra.mxu0 0.0
    %719 = vmatprep.subr.mxu0 0.0
    %720 = vmatpush2.msra.mxu0 0.0
    %721 = vmatprep.subr.mxu0 0.0
    %722 = vmatpush2.msra.mxu0 0.0
    %723 = vmatprep.subr.mxu0 0.0
    %724 = vmatpush2.msra.mxu0 0.0
    %725 = vmatprep.subr.mxu0 0.0
    %726 = vmatpush2.msra.mxu0 0.0
    %727 = vmatprep.subr.mxu0 0.0
    %728 = vmatpush2.msra.mxu0 0.0
    %729 = vmatprep.subr.mxu0 0.0
    %730 = vmatpush2.msra.mxu0 0.0
    %731 = vmatprep.subr.mxu0 0.0
    %732 = vmatpush2.msra.mxu0 0.0
    %733 = vmatprep.subr.mxu0 0.0
    %734 = vmatpush2.msra.mxu0 0.0
    %735 = vmatprep.subr.mxu0 0.0
    %736 = vmatpush2.msra.mxu0 0.0
    %737 = vmatprep.subr.mxu0 0.0
    %738 = vmatpush2.msra.mxu0 0.0
    %739 = vmatprep.subr.mxu0 0.0
    %740 = vmatpush2.msra.mxu0 0.0
    %741 = vmatprep.subr.mxu0 0.0
    %742 = vmatpush2.msra.mxu0 0.0
    %743 = vmatprep.subr.mxu0 0.0
    %744 = vmatpush2.msra.mxu0 0.0
    %745 = vmatprep.subr.mxu0 0.0
    %746 = vmatpush2.msra.mxu0 0.0
    %747 = vmatprep.mubr.f32.mxu0 0.0
    %748 = vmatmul.mubr.f32.gmra.mxu0 %v681
    %v749 = vpop.f32.mrf.mxu0
    %v750 = vadd.f32 %v677, %v749
    %v751 = vpop.f32.mrf.mxu0
    %752 = vdwg.mxu0
    %v753 = vmax.f32 %v750, 0.0
    %s754 = scalar_lea.vmem [#allocation2], 28
    %v755 = vld [vmem:[%s754] sm:$0xf]
    %s756 = scalar_lea.vmem [#allocation3], 28
    %757 = vst.msk [vmem:[%s756] sm:$0xf] %vm210, %v753
    %v759 = vsel %vm199, %v753, 0
    %761 = vmatprep.subr.mxu0 0.0
    %762 = vmatpush1.msra.mxu0 0.0
    %763 = vmatprep.subr.mxu0 0.0
    %764 = vmatpush1.msra.mxu0 0.0
    %765 = vmatprep.subr.mxu0 0.0
    %766 = vmatpush1.msra.mxu0 0.0
    %767 = vmatprep.subr.mxu0 0.0
    %768 = vmatpush1.msra.mxu0 0.0
    %769 = vmatprep.subr.mxu0 0.0
    %770 = vmatpush1.msra.mxu0 0.0
    %771 = vmatprep.subr.mxu0 0.0
    %772 = vmatpush1.msra.mxu0 0.0
    %773 = vmatprep.subr.mxu0 0.0
    %774 = vmatpush1.msra.mxu0 0.0
    %775 = vmatprep.subr.mxu0 0.0
    %776 = vmatpush1.msra.mxu0 0.0
    %777 = vmatprep.subr.mxu0 0.0
    %778 = vmatpush1.msra.mxu0 0.0
    %779 = vmatprep.subr.mxu0 0.0
    %780 = vmatpush1.msra.mxu0 0.0
    %781 = vmatprep.subr.mxu0 0.0
    %782 = vmatpush1.msra.mxu0 0.0
    %783 = vmatprep.subr.mxu0 0.0
    %784 = vmatpush1.msra.mxu0 0.0
    %785 = vmatprep.subr.mxu0 0.0
    %786 = vmatpush1.msra.mxu0 %v207
    %787 = vmatprep.subr.mxu0 0.0
    %788 = vmatpush1.msra.mxu0 %v206
    %789 = vmatprep.subr.mxu0 0.0
    %790 = vmatpush1.msra.mxu0 %v205
    %791 = vmatprep.subr.mxu0 0.0
    %792 = vmatpush1.msra.mxu0 %v204
    %793 = vmatprep.subr.mxu0 0.0
    %794 = vmatpush2.msra.mxu0 0.0
    %795 = vmatprep.subr.mxu0 0.0
    %796 = vmatpush2.msra.mxu0 0.0
    %797 = vmatprep.subr.mxu0 0.0
    %798 = vmatpush2.msra.mxu0 0.0
    %799 = vmatprep.subr.mxu0 0.0
    %800 = vmatpush2.msra.mxu0 0.0
    %801 = vmatprep.subr.mxu0 0.0
    %802 = vmatpush2.msra.mxu0 0.0
    %803 = vmatprep.subr.mxu0 0.0
    %804 = vmatpush2.msra.mxu0 0.0
    %805 = vmatprep.subr.mxu0 0.0
    %806 = vmatpush2.msra.mxu0 0.0
    %807 = vmatprep.subr.mxu0 0.0
    %808 = vmatpush2.msra.mxu0 0.0
    %809 = vmatprep.subr.mxu0 0.0
    %810 = vmatpush2.msra.mxu0 0.0
    %811 = vmatprep.subr.mxu0 0.0
    %812 = vmatpush2.msra.mxu0 0.0
    %813 = vmatprep.subr.mxu0 0.0
    %814 = vmatpush2.msra.mxu0 0.0
    %815 = vmatprep.subr.mxu0 0.0
    %816 = vmatpush2.msra.mxu0 0.0
    %817 = vmatprep.subr.mxu0 0.0
    %818 = vmatpush2.msra.mxu0 0.0
    %819 = vmatprep.subr.mxu0 0.0
    %820 = vmatpush2.msra.mxu0 0.0
    %821 = vmatprep.subr.mxu0 0.0
    %822 = vmatpush2.msra.mxu0 0.0
    %823 = vmatprep.subr.mxu0 0.0
    %824 = vmatpush2.msra.mxu0 0.0
    %825 = vmatprep.mubr.f32.mxu0 0.0
    %826 = vmatmul.mubr.f32.gmra.mxu0 %v759
    %v827 = vpop.f32.mrf.mxu0
    %v828 = vadd.f32 %v755, %v827
    %v829 = vpop.f32.mrf.mxu0
    %830 = vdwg.mxu0
    %v831 = vmax.f32 %v828, 0.0
    %832 = vst.msk [vmem:[#allocation16] sm:$0xf] %vm210, %v831
    %v833 = vld [vmem:[#allocation3] sm:$0xf]
    %834 = vst.msk [vmem:[#allocation4] sm:$0xf] %vm210, %v833
    %v835 = vld [vmem:[%s288] sm:$0xf]
    %836 = vst.msk [vmem:[#allocation4 + $0x4] sm:$0xf] %vm210, %v835
    %v837 = vld [vmem:[%s366] sm:$0xf]
    %838 = vst.msk [vmem:[#allocation4 + $0x8] sm:$0xf] %vm210, %v837
    %v839 = vld [vmem:[%s444] sm:$0xf]
    %840 = vst.msk [vmem:[#allocation4 + $0xc] sm:$0xf] %vm210, %v839
    %v841 = vld [vmem:[%s522] sm:$0xf]
    %842 = vst.msk [vmem:[#allocation4 + $0x10] sm:$0xf] %vm210, %v841
    %v843 = vld [vmem:[%s600] sm:$0xf]
    %844 = vst.msk [vmem:[#allocation4 + $0x14] sm:$0xf] %vm210, %v843
    %v845 = vld [vmem:[%s678] sm:$0xf]
    %846 = vst.msk [vmem:[#allocation4 + $0x18] sm:$0xf] %vm210, %v845
    %v847 = vld [vmem:[%s756] sm:$0xf]
    %848 = vst.msk [vmem:[#allocation4 + $0x1c] sm:$0xf] %vm210, %v847
    %v849 = vlaneseq
    %v850 = vshrl.u32 %v849, 7
    %v851 = vadd.s32 %v850, 8
    %v852 = vadd.s32 %v850, 16
    %v853 = vadd.s32 %v850, 24
    %v854 = vadd.s32 %v850, 32
    %v855 = vadd.s32 %v850, 40
    %v856 = vadd.s32 %v850, 48
    %v857 = vadd.s32 %v850, 56
    %v858 = vadd.s32 %v850, 64
    %v859 = vadd.s32 %v850, 72
    %v860 = vadd.s32 %v850, 80
    %v861 = vadd.s32 %v850, 88
    %v862 = vadd.s32 %v850, 96
    %v863 = vadd.s32 %v850, 104
    %v864 = vadd.s32 %v850, 112
    %v865 = vadd.s32 %v850, 120
    %v866 = vadd.s32 %v850, 128
    %v867 = vadd.s32 %v850, 136
    %v868 = vadd.s32 %v850, 144
    %v869 = vadd.s32 %v850, 152
    %v870 = vadd.s32 %v850, 160
    %v871 = vadd.s32 %v850, 168
    %v872 = vadd.s32 %v850, 176
    %v873 = vadd.s32 %v850, 184
    %v874 = vadd.s32 %v850, 192
    %v875 = vadd.s32 %v850, 200
    %v876 = vadd.s32 %v850, 208
    %v877 = vadd.s32 %v850, 216
    %v878 = vadd.s32 %v850, 224
    %v879 = vadd.s32 %v850, 232
    %v880 = vadd.s32 %v850, 240
    %v881 = vadd.s32 %v850, 248
    %v882 = vadd.s32 %v850, 256
    %v883 = vadd.s32 %v850, 264
    %v884 = vadd.s32 %v850, 272
    %v885 = vadd.s32 %v850, 280
    %v886 = vadd.s32 %v850, 288
    %v887 = vadd.s32 %v850, 296
    %v888 = vadd.s32 %v850, 304
    %v889 = vadd.s32 %v850, 312
    %v890 = vadd.s32 %v850, 320
    %v891 = vadd.s32 %v850, 328
    %v892 = vadd.s32 %v850, 336
    %v893 = vadd.s32 %v850, 344
    %v894 = vadd.s32 %v850, 352
    %v895 = vadd.s32 %v850, 360
    %v896 = vadd.s32 %v850, 368
    %v897 = vadd.s32 %v850, 376
    %v898 = vadd.s32 %v850, 384
    %v899 = vadd.s32 %v850, 392
    %v900 = vadd.s32 %v850, 400
    %v901 = vadd.s32 %v850, 408
    %v902 = vadd.s32 %v850, 416
    %v903 = vadd.s32 %v850, 424
    %v904 = vadd.s32 %v850, 432
    %v905 = vadd.s32 %v850, 440
    %v906 = vadd.s32 %v850, 448
    %v907 = vadd.s32 %v850, 456
    %v908 = vadd.s32 %v850, 464
    %v909 = vadd.s32 %v850, 472
    %v910 = vadd.s32 %v850, 480
    %v911 = vadd.s32 %v850, 488
    %v912 = vadd.s32 %v850, 496
    %v913 = vadd.s32 %v850, 504
    %v914 = vadd.s32 %v850, 512
    %v915 = vadd.s32 %v850, 520
    %v916 = vadd.s32 %v850, 528
    %v917 = vadd.s32 %v850, 536
    %v918 = vadd.s32 %v850, 544
    %v919 = vadd.s32 %v850, 552
    %v920 = vadd.s32 %v850, 560
    %v921 = vadd.s32 %v850, 568
    %v922 = vadd.s32 %v850, 576
    %v923 = vadd.s32 %v850, 584
    %v924 = vadd.s32 %v850, 592
    %v925 = vadd.s32 %v850, 600
    %v926 = vadd.s32 %v850, 608
    %v927 = vadd.s32 %v850, 616
    %v928 = vadd.s32 %v850, 624
    %v929 = vadd.s32 %v850, 632
    %v930 = vadd.s32 %v850, 640
    %v931 = vadd.s32 %v850, 648
    %v932 = vadd.s32 %v850, 656
    %v933 = vadd.s32 %v850, 664
    %v934 = vadd.s32 %v850, 672
    %v935 = vadd.s32 %v850, 680
    %v936 = vadd.s32 %v850, 688
    %v937 = vadd.s32 %v850, 696
    %v938 = vadd.s32 %v850, 704
    %v939 = vadd.s32 %v850, 712
    %v940 = vadd.s32 %v850, 720
    %v941 = vadd.s32 %v850, 728
    %v942 = vadd.s32 %v850, 736
    %v943 = vadd.s32 %v850, 744
    %v944 = vadd.s32 %v850, 752
    %v945 = vadd.s32 %v850, 760
    %v946 = vadd.s32 %v850, 768
    %v947 = vadd.s32 %v850, 776
    %v948 = vadd.s32 %v850, 784
    %v949 = vadd.s32 %v850, 792
    %v950 = vadd.s32 %v850, 800
    %v951 = vadd.s32 %v850, 808
    %v952 = vadd.s32 %v850, 816
    %v953 = vadd.s32 %v850, 824
    %v954 = vadd.s32 %v850, 832
    %v955 = vadd.s32 %v850, 840
    %v956 = vadd.s32 %v850, 848
    %v957 = vadd.s32 %v850, 856
    %v958 = vadd.s32 %v850, 864
    %v959 = vadd.s32 %v850, 872
    %v960 = vadd.s32 %v850, 880
    %v961 = vadd.s32 %v850, 888
    %v962 = vadd.s32 %v850, 896
    %v963 = vadd.s32 %v850, 904
    %v964 = vadd.s32 %v850, 912
    %v965 = vadd.s32 %v850, 920
    %v966 = vadd.s32 %v850, 928
    %v967 = vadd.s32 %v850, 936
    %v968 = vadd.s32 %v850, 944
    %v969 = vadd.s32 %v850, 952
    %v970 = vadd.s32 %v850, 960
    %v971 = vadd.s32 %v850, 968
    %v972 = vadd.s32 %v850, 976
    %v973 = vadd.s32 %v850, 984
    %v974 = vadd.s32 %v850, 992
    %v975 = vadd.s32 %v850, 1000
    %v976 = vadd.s32 %v850, 1008
    %v977 = vadd.s32 %v850, 1016
    %v978 = vlaneseq
    %v979 = vand.u32 %v978, 127
    %v980 = vmul.u32 %v979, 32
    %v981 = vsub.s32 %v850, %v980
    %v982 = vsub.s32 %v851, %v980
    %v983 = vsub.s32 %v852, %v980
    %v984 = vsub.s32 %v853, %v980
    %v985 = vsub.s32 %v854, %v980
    %v986 = vsub.s32 %v855, %v980
    %v987 = vsub.s32 %v856, %v980
    %v988 = vsub.s32 %v857, %v980
    %v989 = vsub.s32 %v858, %v980
    %v990 = vsub.s32 %v859, %v980
    %v991 = vsub.s32 %v860, %v980
    %v992 = vsub.s32 %v861, %v980
    %v993 = vsub.s32 %v862, %v980
    %v994 = vsub.s32 %v863, %v980
    %v995 = vsub.s32 %v864, %v980
    %v996 = vsub.s32 %v865, %v980
    %v997 = vsub.s32 %v866, %v980
    %v998 = vsub.s32 %v867, %v980
    %v999 = vsub.s32 %v868, %v980
    %v1000 = vsub.s32 %v869, %v980
    %v1001 = vsub.s32 %v870, %v980
    %v1002 = vsub.s32 %v871, %v980
    %v1003 = vsub.s32 %v872, %v980
    %v1004 = vsub.s32 %v873, %v980
    %v1005 = vsub.s32 %v874, %v980
    %v1006 = vsub.s32 %v875, %v980
    %v1007 = vsub.s32 %v876, %v980
    %v1008 = vsub.s32 %v877, %v980
    %v1009 = vsub.s32 %v878, %v980
    %v1010 = vsub.s32 %v879, %v980
    %v1011 = vsub.s32 %v880, %v980
    %v1012 = vsub.s32 %v881, %v980
    %v1013 = vsub.s32 %v882, %v980
    %v1014 = vsub.s32 %v883, %v980
    %v1015 = vsub.s32 %v884, %v980
    %v1016 = vsub.s32 %v885, %v980
    %v1017 = vsub.s32 %v886, %v980
    %v1018 = vsub.s32 %v887, %v980
    %v1019 = vsub.s32 %v888, %v980
    %v1020 = vsub.s32 %v889, %v980
    %v1021 = vsub.s32 %v890, %v980
    %v1022 = vsub.s32 %v891, %v980
    %v1023 = vsub.s32 %v892, %v980
    %v1024 = vsub.s32 %v893, %v980
    %v1025 = vsub.s32 %v894, %v980
    %v1026 = vsub.s32 %v895, %v980
    %v1027 = vsub.s32 %v896, %v980
    %v1028 = vsub.s32 %v897, %v980
    %v1029 = vsub.s32 %v898, %v980
    %v1030 = vsub.s32 %v899, %v980
    %v1031 = vsub.s32 %v900, %v980
    %v1032 = vsub.s32 %v901, %v980
    %v1033 = vsub.s32 %v902, %v980
    %v1034 = vsub.s32 %v903, %v980
    %v1035 = vsub.s32 %v904, %v980
    %v1036 = vsub.s32 %v905, %v980
    %v1037 = vsub.s32 %v906, %v980
    %v1038 = vsub.s32 %v907, %v980
    %v1039 = vsub.s32 %v908, %v980
    %v1040 = vsub.s32 %v909, %v980
    %v1041 = vsub.s32 %v910, %v980
    %v1042 = vsub.s32 %v911, %v980
    %v1043 = vsub.s32 %v912, %v980
    %v1044 = vsub.s32 %v913, %v980
    %v1045 = vsub.s32 %v914, %v980
    %v1046 = vsub.s32 %v915, %v980
    %v1047 = vsub.s32 %v916, %v980
    %v1048 = vsub.s32 %v917, %v980
    %v1049 = vsub.s32 %v918, %v980
    %v1050 = vsub.s32 %v919, %v980
    %v1051 = vsub.s32 %v920, %v980
    %v1052 = vsub.s32 %v921, %v980
    %v1053 = vsub.s32 %v922, %v980
    %v1054 = vsub.s32 %v923, %v980
    %v1055 = vsub.s32 %v924, %v980
    %v1056 = vsub.s32 %v925, %v980
    %v1057 = vsub.s32 %v926, %v980
    %v1058 = vsub.s32 %v927, %v980
    %v1059 = vsub.s32 %v928, %v980
    %v1060 = vsub.s32 %v929, %v980
    %v1061 = vsub.s32 %v930, %v980
    %v1062 = vsub.s32 %v931, %v980
    %v1063 = vsub.s32 %v932, %v980
    %v1064 = vsub.s32 %v933, %v980
    %v1065 = vsub.s32 %v934, %v980
    %v1066 = vsub.s32 %v935, %v980
    %v1067 = vsub.s32 %v936, %v980
    %v1068 = vsub.s32 %v937, %v980
    %v1069 = vsub.s32 %v938, %v980
    %v1070 = vsub.s32 %v939, %v980
    %v1071 = vsub.s32 %v940, %v980
    %v1072 = vsub.s32 %v941, %v980
    %v1073 = vsub.s32 %v942, %v980
    %v1074 = vsub.s32 %v943, %v980
    %v1075 = vsub.s32 %v944, %v980
    %v1076 = vsub.s32 %v945, %v980
    %v1077 = vsub.s32 %v946, %v980
    %v1078 = vsub.s32 %v947, %v980
    %v1079 = vsub.s32 %v948, %v980
    %v1080 = vsub.s32 %v949, %v980
    %v1081 = vsub.s32 %v950, %v980
    %v1082 = vsub.s32 %v951, %v980
    %v1083 = vsub.s32 %v952, %v980
    %v1084 = vsub.s32 %v953, %v980
    %v1085 = vsub.s32 %v954, %v980
    %v1086 = vsub.s32 %v955, %v980
    %v1087 = vsub.s32 %v956, %v980
    %v1088 = vsub.s32 %v957, %v980
    %v1089 = vsub.s32 %v958, %v980
    %v1090 = vsub.s32 %v959, %v980
    %v1091 = vsub.s32 %v960, %v980
    %v1092 = vsub.s32 %v961, %v980
    %v1093 = vsub.s32 %v962, %v980
    %v1094 = vsub.s32 %v963, %v980
    %v1095 = vsub.s32 %v964, %v980
    %v1096 = vsub.s32 %v965, %v980
    %v1097 = vsub.s32 %v966, %v980
    %v1098 = vsub.s32 %v967, %v980
    %v1099 = vsub.s32 %v968, %v980
    %v1100 = vsub.s32 %v969, %v980
    %v1101 = vsub.s32 %v970, %v980
    %v1102 = vsub.s32 %v971, %v980
    %v1103 = vsub.s32 %v972, %v980
    %v1104 = vsub.s32 %v973, %v980
    %v1105 = vsub.s32 %v974, %v980
    %v1106 = vsub.s32 %v975, %v980
    %v1107 = vsub.s32 %v976, %v980
    %v1108 = vsub.s32 %v977, %v980
    %vm1109 = vcmp.ge.s32.totalorder %v981, 0
    %vm1110 = vcmp.ge.s32.totalorder %v982, 0
    %vm1111 = vcmp.ge.s32.totalorder %v983, 0
    %vm1112 = vcmp.ge.s32.totalorder %v984, 0
    %vm1113 = vcmp.ge.s32.totalorder %v985, 0
    %vm1114 = vcmp.ge.s32.totalorder %v986, 0
    %vm1115 = vcmp.ge.s32.totalorder %v987, 0
    %vm1116 = vcmp.ge.s32.totalorder %v988, 0
    %vm1117 = vcmp.ge.s32.totalorder %v989, 0
    %vm1118 = vcmp.ge.s32.totalorder %v990, 0
    %vm1119 = vcmp.ge.s32.totalorder %v991, 0
    %vm1120 = vcmp.ge.s32.totalorder %v992, 0
    %vm1121 = vcmp.ge.s32.totalorder %v993, 0
    %vm1122 = vcmp.ge.s32.totalorder %v994, 0
    %vm1123 = vcmp.ge.s32.totalorder %v995, 0
    %vm1124 = vcmp.ge.s32.totalorder %v996, 0
    %vm1125 = vcmp.ge.s32.totalorder %v997, 0
    %vm1126 = vcmp.ge.s32.totalorder %v998, 0
    %vm1127 = vcmp.ge.s32.totalorder %v999, 0
    %vm1128 = vcmp.ge.s32.totalorder %v1000, 0
    %vm1129 = vcmp.ge.s32.totalorder %v1001, 0
    %vm1130 = vcmp.ge.s32.totalorder %v1002, 0
    %vm1131 = vcmp.ge.s32.totalorder %v1003, 0
    %vm1132 = vcmp.ge.s32.totalorder %v1004, 0
    %vm1133 = vcmp.ge.s32.totalorder %v1005, 0
    %vm1134 = vcmp.ge.s32.totalorder %v1006, 0
    %vm1135 = vcmp.ge.s32.totalorder %v1007, 0
    %vm1136 = vcmp.ge.s32.totalorder %v1008, 0
    %vm1137 = vcmp.ge.s32.totalorder %v1009, 0
    %vm1138 = vcmp.ge.s32.totalorder %v1010, 0
    %vm1139 = vcmp.ge.s32.totalorder %v1011, 0
    %vm1140 = vcmp.ge.s32.totalorder %v1012, 0
    %vm1141 = vcmp.ge.s32.totalorder %v1013, 0
    %vm1142 = vcmp.ge.s32.totalorder %v1014, 0
    %vm1143 = vcmp.ge.s32.totalorder %v1015, 0
    %vm1144 = vcmp.ge.s32.totalorder %v1016, 0
    %vm1145 = vcmp.ge.s32.totalorder %v1017, 0
    %vm1146 = vcmp.ge.s32.totalorder %v1018, 0
    %vm1147 = vcmp.ge.s32.totalorder %v1019, 0
    %vm1148 = vcmp.ge.s32.totalorder %v1020, 0
    %vm1149 = vcmp.ge.s32.totalorder %v1021, 0
    %vm1150 = vcmp.ge.s32.totalorder %v1022, 0
    %vm1151 = vcmp.ge.s32.totalorder %v1023, 0
    %vm1152 = vcmp.ge.s32.totalorder %v1024, 0
    %vm1153 = vcmp.ge.s32.totalorder %v1025, 0
    %vm1154 = vcmp.ge.s32.totalorder %v1026, 0
    %vm1155 = vcmp.ge.s32.totalorder %v1027, 0
    %vm1156 = vcmp.ge.s32.totalorder %v1028, 0
    %vm1157 = vcmp.ge.s32.totalorder %v1029, 0
    %vm1158 = vcmp.ge.s32.totalorder %v1030, 0
    %vm1159 = vcmp.ge.s32.totalorder %v1031, 0
    %vm1160 = vcmp.ge.s32.totalorder %v1032, 0
    %vm1161 = vcmp.ge.s32.totalorder %v1033, 0
    %vm1162 = vcmp.ge.s32.totalorder %v1034, 0
    %vm1163 = vcmp.ge.s32.totalorder %v1035, 0
    %vm1164 = vcmp.ge.s32.totalorder %v1036, 0
    %vm1165 = vcmp.ge.s32.totalorder %v1037, 0
    %vm1166 = vcmp.ge.s32.totalorder %v1038, 0
    %vm1167 = vcmp.ge.s32.totalorder %v1039, 0
    %vm1168 = vcmp.ge.s32.totalorder %v1040, 0
    %vm1169 = vcmp.ge.s32.totalorder %v1041, 0
    %vm1170 = vcmp.ge.s32.totalorder %v1042, 0
    %vm1171 = vcmp.ge.s32.totalorder %v1043, 0
    %vm1172 = vcmp.ge.s32.totalorder %v1044, 0
    %vm1173 = vcmp.ge.s32.totalorder %v1045, 0
    %vm1174 = vcmp.ge.s32.totalorder %v1046, 0
    %vm1175 = vcmp.ge.s32.totalorder %v1047, 0
    %vm1176 = vcmp.ge.s32.totalorder %v1048, 0
    %vm1177 = vcmp.ge.s32.totalorder %v1049, 0
    %vm1178 = vcmp.ge.s32.totalorder %v1050, 0
    %vm1179 = vcmp.ge.s32.totalorder %v1051, 0
    %vm1180 = vcmp.ge.s32.totalorder %v1052, 0
    %vm1181 = vcmp.ge.s32.totalorder %v1053, 0
    %vm1182 = vcmp.ge.s32.totalorder %v1054, 0
    %vm1183 = vcmp.ge.s32.totalorder %v1055, 0
    %vm1184 = vcmp.ge.s32.totalorder %v1056, 0
    %vm1185 = vcmp.ge.s32.totalorder %v1057, 0
    %vm1186 = vcmp.ge.s32.totalorder %v1058, 0
    %vm1187 = vcmp.ge.s32.totalorder %v1059, 0
    %vm1188 = vcmp.ge.s32.totalorder %v1060, 0
    %vm1189 = vcmp.ge.s32.totalorder %v1061, 0
    %vm1190 = vcmp.ge.s32.totalorder %v1062, 0
    %vm1191 = vcmp.ge.s32.totalorder %v1063, 0
    %vm1192 = vcmp.ge.s32.totalorder %v1064, 0
    %vm1193 = vcmp.ge.s32.totalorder %v1065, 0
    %vm1194 = vcmp.ge.s32.totalorder %v1066, 0
    %vm1195 = vcmp.ge.s32.totalorder %v1067, 0
    %vm1196 = vcmp.ge.s32.totalorder %v1068, 0
    %vm1197 = vcmp.ge.s32.totalorder %v1069, 0
    %vm1198 = vcmp.ge.s32.totalorder %v1070, 0
    %vm1199 = vcmp.ge.s32.totalorder %v1071, 0
    %vm1200 = vcmp.ge.s32.totalorder %v1072, 0
    %vm1201 = vcmp.ge.s32.totalorder %v1073, 0
    %vm1202 = vcmp.ge.s32.totalorder %v1074, 0
    %vm1203 = vcmp.ge.s32.totalorder %v1075, 0
    %vm1204 = vcmp.ge.s32.totalorder %v1076, 0
    %vm1205 = vcmp.ge.s32.totalorder %v1077, 0
    %vm1206 = vcmp.ge.s32.totalorder %v1078, 0
    %vm1207 = vcmp.ge.s32.totalorder %v1079, 0
    %vm1208 = vcmp.ge.s32.totalorder %v1080, 0
    %vm1209 = vcmp.ge.s32.totalorder %v1081, 0
    %vm1210 = vcmp.ge.s32.totalorder %v1082, 0
    %vm1211 = vcmp.ge.s32.totalorder %v1083, 0
    %vm1212 = vcmp.ge.s32.totalorder %v1084, 0
    %vm1213 = vcmp.ge.s32.totalorder %v1085, 0
    %vm1214 = vcmp.ge.s32.totalorder %v1086, 0
    %vm1215 = vcmp.ge.s32.totalorder %v1087, 0
    %vm1216 = vcmp.ge.s32.totalorder %v1088, 0
    %vm1217 = vcmp.ge.s32.totalorder %v1089, 0
    %vm1218 = vcmp.ge.s32.totalorder %v1090, 0
    %vm1219 = vcmp.ge.s32.totalorder %v1091, 0
    %vm1220 = vcmp.ge.s32.totalorder %v1092, 0
    %vm1221 = vcmp.ge.s32.totalorder %v1093, 0
    %vm1222 = vcmp.ge.s32.totalorder %v1094, 0
    %vm1223 = vcmp.ge.s32.totalorder %v1095, 0
    %vm1224 = vcmp.ge.s32.totalorder %v1096, 0
    %vm1225 = vcmp.ge.s32.totalorder %v1097, 0
    %vm1226 = vcmp.ge.s32.totalorder %v1098, 0
    %vm1227 = vcmp.ge.s32.totalorder %v1099, 0
    %vm1228 = vcmp.ge.s32.totalorder %v1100, 0
    %vm1229 = vcmp.ge.s32.totalorder %v1101, 0
    %vm1230 = vcmp.ge.s32.totalorder %v1102, 0
    %vm1231 = vcmp.ge.s32.totalorder %v1103, 0
    %vm1232 = vcmp.ge.s32.totalorder %v1104, 0
    %vm1233 = vcmp.ge.s32.totalorder %v1105, 0
    %vm1234 = vcmp.ge.s32.totalorder %v1106, 0
    %vm1235 = vcmp.ge.s32.totalorder %v1107, 0
    %vm1236 = vcmp.ge.s32.totalorder %v1108, 0
    %vm1237 = vcmp.lt.s32.totalorder %v981, 32
    %vm1238 = vcmp.lt.s32.totalorder %v982, 32
    %vm1239 = vcmp.lt.s32.totalorder %v983, 32
    %vm1240 = vcmp.lt.s32.totalorder %v984, 32
    %vm1241 = vcmp.lt.s32.totalorder %v985, 32
    %vm1242 = vcmp.lt.s32.totalorder %v986, 32
    %vm1243 = vcmp.lt.s32.totalorder %v987, 32
    %vm1244 = vcmp.lt.s32.totalorder %v988, 32
    %vm1245 = vcmp.lt.s32.totalorder %v989, 32
    %vm1246 = vcmp.lt.s32.totalorder %v990, 32
    %vm1247 = vcmp.lt.s32.totalorder %v991, 32
    %vm1248 = vcmp.lt.s32.totalorder %v992, 32
    %vm1249 = vcmp.lt.s32.totalorder %v993, 32
    %vm1250 = vcmp.lt.s32.totalorder %v994, 32
    %vm1251 = vcmp.lt.s32.totalorder %v995, 32
    %vm1252 = vcmp.lt.s32.totalorder %v996, 32
    %vm1253 = vcmp.lt.s32.totalorder %v997, 32
    %vm1254 = vcmp.lt.s32.totalorder %v998, 32
    %vm1255 = vcmp.lt.s32.totalorder %v999, 32
    %vm1256 = vcmp.lt.s32.totalorder %v1000, 32
    %vm1257 = vcmp.lt.s32.totalorder %v1001, 32
    %vm1258 = vcmp.lt.s32.totalorder %v1002, 32
    %vm1259 = vcmp.lt.s32.totalorder %v1003, 32
    %vm1260 = vcmp.lt.s32.totalorder %v1004, 32
    %vm1261 = vcmp.lt.s32.totalorder %v1005, 32
    %vm1262 = vcmp.lt.s32.totalorder %v1006, 32
    %vm1263 = vcmp.lt.s32.totalorder %v1007, 32
    %vm1264 = vcmp.lt.s32.totalorder %v1008, 32
    %vm1265 = vcmp.lt.s32.totalorder %v1009, 32
    %vm1266 = vcmp.lt.s32.totalorder %v1010, 32
    %vm1267 = vcmp.lt.s32.totalorder %v1011, 32
    %vm1268 = vcmp.lt.s32.totalorder %v1012, 32
    %vm1269 = vcmp.lt.s32.totalorder %v1013, 32
    %vm1270 = vcmp.lt.s32.totalorder %v1014, 32
    %vm1271 = vcmp.lt.s32.totalorder %v1015, 32
    %vm1272 = vcmp.lt.s32.totalorder %v1016, 32
    %vm1273 = vcmp.lt.s32.totalorder %v1017, 32
    %vm1274 = vcmp.lt.s32.totalorder %v1018, 32
    %vm1275 = vcmp.lt.s32.totalorder %v1019, 32
    %vm1276 = vcmp.lt.s32.totalorder %v1020, 32
    %vm1277 = vcmp.lt.s32.totalorder %v1021, 32
    %vm1278 = vcmp.lt.s32.totalorder %v1022, 32
    %vm1279 = vcmp.lt.s32.totalorder %v1023, 32
    %vm1280 = vcmp.lt.s32.totalorder %v1024, 32
    %vm1281 = vcmp.lt.s32.totalorder %v1025, 32
    %vm1282 = vcmp.lt.s32.totalorder %v1026, 32
    %vm1283 = vcmp.lt.s32.totalorder %v1027, 32
    %vm1284 = vcmp.lt.s32.totalorder %v1028, 32
    %vm1285 = vcmp.lt.s32.totalorder %v1029, 32
    %vm1286 = vcmp.lt.s32.totalorder %v1030, 32
    %vm1287 = vcmp.lt.s32.totalorder %v1031, 32
    %vm1288 = vcmp.lt.s32.totalorder %v1032, 32
    %vm1289 = vcmp.lt.s32.totalorder %v1033, 32
    %vm1290 = vcmp.lt.s32.totalorder %v1034, 32
    %vm1291 = vcmp.lt.s32.totalorder %v1035, 32
    %vm1292 = vcmp.lt.s32.totalorder %v1036, 32
    %vm1293 = vcmp.lt.s32.totalorder %v1037, 32
    %vm1294 = vcmp.lt.s32.totalorder %v1038, 32
    %vm1295 = vcmp.lt.s32.totalorder %v1039, 32
    %vm1296 = vcmp.lt.s32.totalorder %v1040, 32
    %vm1297 = vcmp.lt.s32.totalorder %v1041, 32
    %vm1298 = vcmp.lt.s32.totalorder %v1042, 32
    %vm1299 = vcmp.lt.s32.totalorder %v1043, 32
    %vm1300 = vcmp.lt.s32.totalorder %v1044, 32
    %vm1301 = vcmp.lt.s32.totalorder %v1045, 32
    %vm1302 = vcmp.lt.s32.totalorder %v1046, 32
    %vm1303 = vcmp.lt.s32.totalorder %v1047, 32
    %vm1304 = vcmp.lt.s32.totalorder %v1048, 32
    %vm1305 = vcmp.lt.s32.totalorder %v1049, 32
    %vm1306 = vcmp.lt.s32.totalorder %v1050, 32
    %vm1307 = vcmp.lt.s32.totalorder %v1051, 32
    %vm1308 = vcmp.lt.s32.totalorder %v1052, 32
    %vm1309 = vcmp.lt.s32.totalorder %v1053, 32
    %vm1310 = vcmp.lt.s32.totalorder %v1054, 32
    %vm1311 = vcmp.lt.s32.totalorder %v1055, 32
    %vm1312 = vcmp.lt.s32.totalorder %v1056, 32
    %vm1313 = vcmp.lt.s32.totalorder %v1057, 32
    %vm1314 = vcmp.lt.s32.totalorder %v1058, 32
    %vm1315 = vcmp.lt.s32.totalorder %v1059, 32
    %vm1316 = vcmp.lt.s32.totalorder %v1060, 32
    %vm1317 = vcmp.lt.s32.totalorder %v1061, 32
    %vm1318 = vcmp.lt.s32.totalorder %v1062, 32
    %vm1319 = vcmp.lt.s32.totalorder %v1063, 32
    %vm1320 = vcmp.lt.s32.totalorder %v1064, 32
    %vm1321 = vcmp.lt.s32.totalorder %v1065, 32
    %vm1322 = vcmp.lt.s32.totalorder %v1066, 32
    %vm1323 = vcmp.lt.s32.totalorder %v1067, 32
    %vm1324 = vcmp.lt.s32.totalorder %v1068, 32
    %vm1325 = vcmp.lt.s32.totalorder %v1069, 32
    %vm1326 = vcmp.lt.s32.totalorder %v1070, 32
    %vm1327 = vcmp.lt.s32.totalorder %v1071, 32
    %vm1328 = vcmp.lt.s32.totalorder %v1072, 32
    %vm1329 = vcmp.lt.s32.totalorder %v1073, 32
    %vm1330 = vcmp.lt.s32.totalorder %v1074, 32
    %vm1331 = vcmp.lt.s32.totalorder %v1075, 32
    %vm1332 = vcmp.lt.s32.totalorder %v1076, 32
    %vm1333 = vcmp.lt.s32.totalorder %v1077, 32
    %vm1334 = vcmp.lt.s32.totalorder %v1078, 32
    %vm1335 = vcmp.lt.s32.totalorder %v1079, 32
    %vm1336 = vcmp.lt.s32.totalorder %v1080, 32
    %vm1337 = vcmp.lt.s32.totalorder %v1081, 32
    %vm1338 = vcmp.lt.s32.totalorder %v1082, 32
    %vm1339 = vcmp.lt.s32.totalorder %v1083, 32
    %vm1340 = vcmp.lt.s32.totalorder %v1084, 32
    %vm1341 = vcmp.lt.s32.totalorder %v1085, 32
    %vm1342 = vcmp.lt.s32.totalorder %v1086, 32
    %vm1343 = vcmp.lt.s32.totalorder %v1087, 32
    %vm1344 = vcmp.lt.s32.totalorder %v1088, 32
    %vm1345 = vcmp.lt.s32.totalorder %v1089, 32
    %vm1346 = vcmp.lt.s32.totalorder %v1090, 32
    %vm1347 = vcmp.lt.s32.totalorder %v1091, 32
    %vm1348 = vcmp.lt.s32.totalorder %v1092, 32
    %vm1349 = vcmp.lt.s32.totalorder %v1093, 32
    %vm1350 = vcmp.lt.s32.totalorder %v1094, 32
    %vm1351 = vcmp.lt.s32.totalorder %v1095, 32
    %vm1352 = vcmp.lt.s32.totalorder %v1096, 32
    %vm1353 = vcmp.lt.s32.totalorder %v1097, 32
    %vm1354 = vcmp.lt.s32.totalorder %v1098, 32
    %vm1355 = vcmp.lt.s32.totalorder %v1099, 32
    %vm1356 = vcmp.lt.s32.totalorder %v1100, 32
    %vm1357 = vcmp.lt.s32.totalorder %v1101, 32
    %vm1358 = vcmp.lt.s32.totalorder %v1102, 32
    %vm1359 = vcmp.lt.s32.totalorder %v1103, 32
    %vm1360 = vcmp.lt.s32.totalorder %v1104, 32
    %vm1361 = vcmp.lt.s32.totalorder %v1105, 32
    %vm1362 = vcmp.lt.s32.totalorder %v1106, 32
    %vm1363 = vcmp.lt.s32.totalorder %v1107, 32
    %vm1364 = vcmp.lt.s32.totalorder %v1108, 32
    %vm1365 = vmand %vm1109, %vm1237
    %vm1366 = vmand %vm1110, %vm1238
    %vm1367 = vmand %vm1111, %vm1239
    %vm1368 = vmand %vm1112, %vm1240
    %vm1369 = vmand %vm1113, %vm1241
    %vm1370 = vmand %vm1114, %vm1242
    %vm1371 = vmand %vm1115, %vm1243
    %vm1372 = vmand %vm1116, %vm1244
    %vm1373 = vmand %vm1117, %vm1245
    %vm1374 = vmand %vm1118, %vm1246
    %vm1375 = vmand %vm1119, %vm1247
    %vm1376 = vmand %vm1120, %vm1248
    %vm1377 = vmand %vm1121, %vm1249
    %vm1378 = vmand %vm1122, %vm1250
    %vm1379 = vmand %vm1123, %vm1251
    %vm1380 = vmand %vm1124, %vm1252
    %vm1381 = vmand %vm1125, %vm1253
    %vm1382 = vmand %vm1126, %vm1254
    %vm1383 = vmand %vm1127, %vm1255
    %vm1384 = vmand %vm1128, %vm1256
    %vm1385 = vmand %vm1129, %vm1257
    %vm1386 = vmand %vm1130, %vm1258
    %vm1387 = vmand %vm1131, %vm1259
    %vm1388 = vmand %vm1132, %vm1260
    %vm1389 = vmand %vm1133, %vm1261
    %vm1390 = vmand %vm1134, %vm1262
    %vm1391 = vmand %vm1135, %vm1263
    %vm1392 = vmand %vm1136, %vm1264
    %vm1393 = vmand %vm1137, %vm1265
    %vm1394 = vmand %vm1138, %vm1266
    %vm1395 = vmand %vm1139, %vm1267
    %vm1396 = vmand %vm1140, %vm1268
    %vm1397 = vmand %vm1141, %vm1269
    %vm1398 = vmand %vm1142, %vm1270
    %vm1399 = vmand %vm1143, %vm1271
    %vm1400 = vmand %vm1144, %vm1272
    %vm1401 = vmand %vm1145, %vm1273
    %vm1402 = vmand %vm1146, %vm1274
    %vm1403 = vmand %vm1147, %vm1275
    %vm1404 = vmand %vm1148, %vm1276
    %vm1405 = vmand %vm1149, %vm1277
    %vm1406 = vmand %vm1150, %vm1278
    %vm1407 = vmand %vm1151, %vm1279
    %vm1408 = vmand %vm1152, %vm1280
    %vm1409 = vmand %vm1153, %vm1281
    %vm1410 = vmand %vm1154, %vm1282
    %vm1411 = vmand %vm1155, %vm1283
    %vm1412 = vmand %vm1156, %vm1284
    %vm1413 = vmand %vm1157, %vm1285
    %vm1414 = vmand %vm1158, %vm1286
    %vm1415 = vmand %vm1159, %vm1287
    %vm1416 = vmand %vm1160, %vm1288
    %vm1417 = vmand %vm1161, %vm1289
    %vm1418 = vmand %vm1162, %vm1290
    %vm1419 = vmand %vm1163, %vm1291
    %vm1420 = vmand %vm1164, %vm1292
    %vm1421 = vmand %vm1165, %vm1293
    %vm1422 = vmand %vm1166, %vm1294
    %vm1423 = vmand %vm1167, %vm1295
    %vm1424 = vmand %vm1168, %vm1296
    %vm1425 = vmand %vm1169, %vm1297
    %vm1426 = vmand %vm1170, %vm1298
    %vm1427 = vmand %vm1171, %vm1299
    %vm1428 = vmand %vm1172, %vm1300
    %vm1429 = vmand %vm1173, %vm1301
    %vm1430 = vmand %vm1174, %vm1302
    %vm1431 = vmand %vm1175, %vm1303
    %vm1432 = vmand %vm1176, %vm1304
    %vm1433 = vmand %vm1177, %vm1305
    %vm1434 = vmand %vm1178, %vm1306
    %vm1435 = vmand %vm1179, %vm1307
    %vm1436 = vmand %vm1180, %vm1308
    %vm1437 = vmand %vm1181, %vm1309
    %vm1438 = vmand %vm1182, %vm1310
    %vm1439 = vmand %vm1183, %vm1311
    %vm1440 = vmand %vm1184, %vm1312
    %vm1441 = vmand %vm1185, %vm1313
    %vm1442 = vmand %vm1186, %vm1314
    %vm1443 = vmand %vm1187, %vm1315
    %vm1444 = vmand %vm1188, %vm1316
    %vm1445 = vmand %vm1189, %vm1317
    %vm1446 = vmand %vm1190, %vm1318
    %vm1447 = vmand %vm1191, %vm1319
    %vm1448 = vmand %vm1192, %vm1320
    %vm1449 = vmand %vm1193, %vm1321
    %vm1450 = vmand %vm1194, %vm1322
    %vm1451 = vmand %vm1195, %vm1323
    %vm1452 = vmand %vm1196, %vm1324
    %vm1453 = vmand %vm1197, %vm1325
    %vm1454 = vmand %vm1198, %vm1326
    %vm1455 = vmand %vm1199, %vm1327
    %vm1456 = vmand %vm1200, %vm1328
    %vm1457 = vmand %vm1201, %vm1329
    %vm1458 = vmand %vm1202, %vm1330
    %vm1459 = vmand %vm1203, %vm1331
    %vm1460 = vmand %vm1204, %vm1332
    %vm1461 = vmand %vm1205, %vm1333
    %vm1462 = vmand %vm1206, %vm1334
    %vm1463 = vmand %vm1207, %vm1335
    %vm1464 = vmand %vm1208, %vm1336
    %vm1465 = vmand %vm1209, %vm1337
    %vm1466 = vmand %vm1210, %vm1338
    %vm1467 = vmand %vm1211, %vm1339
    %vm1468 = vmand %vm1212, %vm1340
    %vm1469 = vmand %vm1213, %vm1341
    %vm1470 = vmand %vm1214, %vm1342
    %vm1471 = vmand %vm1215, %vm1343
    %vm1472 = vmand %vm1216, %vm1344
    %vm1473 = vmand %vm1217, %vm1345
    %vm1474 = vmand %vm1218, %vm1346
    %vm1475 = vmand %vm1219, %vm1347
    %vm1476 = vmand %vm1220, %vm1348
    %vm1477 = vmand %vm1221, %vm1349
    %vm1478 = vmand %vm1222, %vm1350
    %vm1479 = vmand %vm1223, %vm1351
    %vm1480 = vmand %vm1224, %vm1352
    %vm1481 = vmand %vm1225, %vm1353
    %vm1482 = vmand %vm1226, %vm1354
    %vm1483 = vmand %vm1227, %vm1355
    %vm1484 = vmand %vm1228, %vm1356
    %vm1485 = vmand %vm1229, %vm1357
    %vm1486 = vmand %vm1230, %vm1358
    %vm1487 = vmand %vm1231, %vm1359
    %vm1488 = vmand %vm1232, %vm1360
    %vm1489 = vmand %vm1233, %vm1361
    %vm1490 = vmand %vm1234, %vm1362
    %vm1491 = vmand %vm1235, %vm1363
    %vm1492 = vmand %vm1236, %vm1364
    %v1493 = vsel %vm1365, 1, 0
    %v1494 = vsel %vm1366, 1, 0
    %v1495 = vsel %vm1367, 1, 0
    %v1496 = vsel %vm1368, 1, 0
    %v1497 = vsel %vm1369, 1, 0
    %v1498 = vsel %vm1370, 1, 0
    %v1499 = vsel %vm1371, 1, 0
    %v1500 = vsel %vm1372, 1, 0
    %v1501 = vsel %vm1373, 1, 0
    %v1502 = vsel %vm1374, 1, 0
    %v1503 = vsel %vm1375, 1, 0
    %v1504 = vsel %vm1376, 1, 0
    %v1505 = vsel %vm1377, 1, 0
    %v1506 = vsel %vm1378, 1, 0
    %v1507 = vsel %vm1379, 1, 0
    %v1508 = vsel %vm1380, 1, 0
    %v1509 = vsel %vm1381, 1, 0
    %v1510 = vsel %vm1382, 1, 0
    %v1511 = vsel %vm1383, 1, 0
    %v1512 = vsel %vm1384, 1, 0
    %v1513 = vsel %vm1385, 1, 0
    %v1514 = vsel %vm1386, 1, 0
    %v1515 = vsel %vm1387, 1, 0
    %v1516 = vsel %vm1388, 1, 0
    %v1517 = vsel %vm1389, 1, 0
    %v1518 = vsel %vm1390, 1, 0
    %v1519 = vsel %vm1391, 1, 0
    %v1520 = vsel %vm1392, 1, 0
    %v1521 = vsel %vm1393, 1, 0
    %v1522 = vsel %vm1394, 1, 0
    %v1523 = vsel %vm1395, 1, 0
    %v1524 = vsel %vm1396, 1, 0
    %v1525 = vsel %vm1397, 1, 0
    %v1526 = vsel %vm1398, 1, 0
    %v1527 = vsel %vm1399, 1, 0
    %v1528 = vsel %vm1400, 1, 0
    %v1529 = vsel %vm1401, 1, 0
    %v1530 = vsel %vm1402, 1, 0
    %v1531 = vsel %vm1403, 1, 0
    %v1532 = vsel %vm1404, 1, 0
    %v1533 = vsel %vm1405, 1, 0
    %v1534 = vsel %vm1406, 1, 0
    %v1535 = vsel %vm1407, 1, 0
    %v1536 = vsel %vm1408, 1, 0
    %v1537 = vsel %vm1409, 1, 0
    %v1538 = vsel %vm1410, 1, 0
    %v1539 = vsel %vm1411, 1, 0
    %v1540 = vsel %vm1412, 1, 0
    %v1541 = vsel %vm1413, 1, 0
    %v1542 = vsel %vm1414, 1, 0
    %v1543 = vsel %vm1415, 1, 0
    %v1544 = vsel %vm1416, 1, 0
    %v1545 = vsel %vm1417, 1, 0
    %v1546 = vsel %vm1418, 1, 0
    %v1547 = vsel %vm1419, 1, 0
    %v1548 = vsel %vm1420, 1, 0
    %v1549 = vsel %vm1421, 1, 0
    %v1550 = vsel %vm1422, 1, 0
    %v1551 = vsel %vm1423, 1, 0
    %v1552 = vsel %vm1424, 1, 0
    %v1553 = vsel %vm1425, 1, 0
    %v1554 = vsel %vm1426, 1, 0
    %v1555 = vsel %vm1427, 1, 0
    %v1556 = vsel %vm1428, 1, 0
    %v1557 = vsel %vm1429, 1, 0
    %v1558 = vsel %vm1430, 1, 0
    %v1559 = vsel %vm1431, 1, 0
    %v1560 = vsel %vm1432, 1, 0
    %v1561 = vsel %vm1433, 1, 0
    %v1562 = vsel %vm1434, 1, 0
    %v1563 = vsel %vm1435, 1, 0
    %v1564 = vsel %vm1436, 1, 0
    %v1565 = vsel %vm1437, 1, 0
    %v1566 = vsel %vm1438, 1, 0
    %v1567 = vsel %vm1439, 1, 0
    %v1568 = vsel %vm1440, 1, 0
    %v1569 = vsel %vm1441, 1, 0
    %v1570 = vsel %vm1442, 1, 0
    %v1571 = vsel %vm1443, 1, 0
    %v1572 = vsel %vm1444, 1, 0
    %v1573 = vsel %vm1445, 1, 0
    %v1574 = vsel %vm1446, 1, 0
    %v1575 = vsel %vm1447, 1, 0
    %v1576 = vsel %vm1448, 1, 0
    %v1577 = vsel %vm1449, 1, 0
    %v1578 = vsel %vm1450, 1, 0
    %v1579 = vsel %vm1451, 1, 0
    %v1580 = vsel %vm1452, 1, 0
    %v1581 = vsel %vm1453, 1, 0
    %v1582 = vsel %vm1454, 1, 0
    %v1583 = vsel %vm1455, 1, 0
    %v1584 = vsel %vm1456, 1, 0
    %v1585 = vsel %vm1457, 1, 0
    %v1586 = vsel %vm1458, 1, 0
    %v1587 = vsel %vm1459, 1, 0
    %v1588 = vsel %vm1460, 1, 0
    %v1589 = vsel %vm1461, 1, 0
    %v1590 = vsel %vm1462, 1, 0
    %v1591 = vsel %vm1463, 1, 0
    %v1592 = vsel %vm1464, 1, 0
    %v1593 = vsel %vm1465, 1, 0
    %v1594 = vsel %vm1466, 1, 0
    %v1595 = vsel %vm1467, 1, 0
    %v1596 = vsel %vm1468, 1, 0
    %v1597 = vsel %vm1469, 1, 0
    %v1598 = vsel %vm1470, 1, 0
    %v1599 = vsel %vm1471, 1, 0
    %v1600 = vsel %vm1472, 1, 0
    %v1601 = vsel %vm1473, 1, 0
    %v1602 = vsel %vm1474, 1, 0
    %v1603 = vsel %vm1475, 1, 0
    %v1604 = vsel %vm1476, 1, 0
    %v1605 = vsel %vm1477, 1, 0
    %v1606 = vsel %vm1478, 1, 0
    %v1607 = vsel %vm1479, 1, 0
    %v1608 = vsel %vm1480, 1, 0
    %v1609 = vsel %vm1481, 1, 0
    %v1610 = vsel %vm1482, 1, 0
    %v1611 = vsel %vm1483, 1, 0
    %v1612 = vsel %vm1484, 1, 0
    %v1613 = vsel %vm1485, 1, 0
    %v1614 = vsel %vm1486, 1, 0
    %v1615 = vsel %vm1487, 1, 0
    %v1616 = vsel %vm1488, 1, 0
    %v1617 = vsel %vm1489, 1, 0
    %v1618 = vsel %vm1490, 1, 0
    %v1619 = vsel %vm1491, 1, 0
    %v1620 = vsel %vm1492, 1, 0
    %v1621 = vcvt.s32.f32 %v1493
    %v1622 = vcvt.s32.f32 %v1494
    %v1623 = vcvt.s32.f32 %v1495
    %v1624 = vcvt.s32.f32 %v1496
    %v1625 = vcvt.s32.f32 %v1497
    %v1626 = vcvt.s32.f32 %v1498
    %v1627 = vcvt.s32.f32 %v1499
    %v1628 = vcvt.s32.f32 %v1500
    %v1629 = vcvt.s32.f32 %v1501
    %v1630 = vcvt.s32.f32 %v1502
    %v1631 = vcvt.s32.f32 %v1503
    %v1632 = vcvt.s32.f32 %v1504
    %v1633 = vcvt.s32.f32 %v1505
    %v1634 = vcvt.s32.f32 %v1506
    %v1635 = vcvt.s32.f32 %v1507
    %v1636 = vcvt.s32.f32 %v1508
    %v1637 = vcvt.s32.f32 %v1509
    %v1638 = vcvt.s32.f32 %v1510
    %v1639 = vcvt.s32.f32 %v1511
    %v1640 = vcvt.s32.f32 %v1512
    %v1641 = vcvt.s32.f32 %v1513
    %v1642 = vcvt.s32.f32 %v1514
    %v1643 = vcvt.s32.f32 %v1515
    %v1644 = vcvt.s32.f32 %v1516
    %v1645 = vcvt.s32.f32 %v1517
    %v1646 = vcvt.s32.f32 %v1518
    %v1647 = vcvt.s32.f32 %v1519
    %v1648 = vcvt.s32.f32 %v1520
    %v1649 = vcvt.s32.f32 %v1521
    %v1650 = vcvt.s32.f32 %v1522
    %v1651 = vcvt.s32.f32 %v1523
    %v1652 = vcvt.s32.f32 %v1524
    %v1653 = vcvt.s32.f32 %v1525
    %v1654 = vcvt.s32.f32 %v1526
    %v1655 = vcvt.s32.f32 %v1527
    %v1656 = vcvt.s32.f32 %v1528
    %v1657 = vcvt.s32.f32 %v1529
    %v1658 = vcvt.s32.f32 %v1530
    %v1659 = vcvt.s32.f32 %v1531
    %v1660 = vcvt.s32.f32 %v1532
    %v1661 = vcvt.s32.f32 %v1533
    %v1662 = vcvt.s32.f32 %v1534
    %v1663 = vcvt.s32.f32 %v1535
    %v1664 = vcvt.s32.f32 %v1536
    %v1665 = vcvt.s32.f32 %v1537
    %v1666 = vcvt.s32.f32 %v1538
    %v1667 = vcvt.s32.f32 %v1539
    %v1668 = vcvt.s32.f32 %v1540
    %v1669 = vcvt.s32.f32 %v1541
    %v1670 = vcvt.s32.f32 %v1542
    %v1671 = vcvt.s32.f32 %v1543
    %v1672 = vcvt.s32.f32 %v1544
    %v1673 = vcvt.s32.f32 %v1545
    %v1674 = vcvt.s32.f32 %v1546
    %v1675 = vcvt.s32.f32 %v1547
    %v1676 = vcvt.s32.f32 %v1548
    %v1677 = vcvt.s32.f32 %v1549
    %v1678 = vcvt.s32.f32 %v1550
    %v1679 = vcvt.s32.f32 %v1551
    %v1680 = vcvt.s32.f32 %v1552
    %v1681 = vcvt.s32.f32 %v1553
    %v1682 = vcvt.s32.f32 %v1554
    %v1683 = vcvt.s32.f32 %v1555
    %v1684 = vcvt.s32.f32 %v1556
    %v1685 = vcvt.s32.f32 %v1557
    %v1686 = vcvt.s32.f32 %v1558
    %v1687 = vcvt.s32.f32 %v1559
    %v1688 = vcvt.s32.f32 %v1560
    %v1689 = vcvt.s32.f32 %v1561
    %v1690 = vcvt.s32.f32 %v1562
    %v1691 = vcvt.s32.f32 %v1563
    %v1692 = vcvt.s32.f32 %v1564
    %v1693 = vcvt.s32.f32 %v1565
    %v1694 = vcvt.s32.f32 %v1566
    %v1695 = vcvt.s32.f32 %v1567
    %v1696 = vcvt.s32.f32 %v1568
    %v1697 = vcvt.s32.f32 %v1569
    %v1698 = vcvt.s32.f32 %v1570
    %v1699 = vcvt.s32.f32 %v1571
    %v1700 = vcvt.s32.f32 %v1572
    %v1701 = vcvt.s32.f32 %v1573
    %v1702 = vcvt.s32.f32 %v1574
    %v1703 = vcvt.s32.f32 %v1575
    %v1704 = vcvt.s32.f32 %v1576
    %v1705 = vcvt.s32.f32 %v1577
    %v1706 = vcvt.s32.f32 %v1578
    %v1707 = vcvt.s32.f32 %v1579
    %v1708 = vcvt.s32.f32 %v1580
    %v1709 = vcvt.s32.f32 %v1581
    %v1710 = vcvt.s32.f32 %v1582
    %v1711 = vcvt.s32.f32 %v1583
    %v1712 = vcvt.s32.f32 %v1584
    %v1713 = vcvt.s32.f32 %v1585
    %v1714 = vcvt.s32.f32 %v1586
    %v1715 = vcvt.s32.f32 %v1587
    %v1716 = vcvt.s32.f32 %v1588
    %v1717 = vcvt.s32.f32 %v1589
    %v1718 = vcvt.s32.f32 %v1590
    %v1719 = vcvt.s32.f32 %v1591
    %v1720 = vcvt.s32.f32 %v1592
    %v1721 = vcvt.s32.f32 %v1593
    %v1722 = vcvt.s32.f32 %v1594
    %v1723 = vcvt.s32.f32 %v1595
    %v1724 = vcvt.s32.f32 %v1596
    %v1725 = vcvt.s32.f32 %v1597
    %v1726 = vcvt.s32.f32 %v1598
    %v1727 = vcvt.s32.f32 %v1599
    %v1728 = vcvt.s32.f32 %v1600
    %v1729 = vcvt.s32.f32 %v1601
    %v1730 = vcvt.s32.f32 %v1602
    %v1731 = vcvt.s32.f32 %v1603
    %v1732 = vcvt.s32.f32 %v1604
    %v1733 = vcvt.s32.f32 %v1605
    %v1734 = vcvt.s32.f32 %v1606
    %v1735 = vcvt.s32.f32 %v1607
    %v1736 = vcvt.s32.f32 %v1608
    %v1737 = vcvt.s32.f32 %v1609
    %v1738 = vcvt.s32.f32 %v1610
    %v1739 = vcvt.s32.f32 %v1611
    %v1740 = vcvt.s32.f32 %v1612
    %v1741 = vcvt.s32.f32 %v1613
    %v1742 = vcvt.s32.f32 %v1614
    %v1743 = vcvt.s32.f32 %v1615
    %v1744 = vcvt.s32.f32 %v1616
    %v1745 = vcvt.s32.f32 %v1617
    %v1746 = vcvt.s32.f32 %v1618
    %v1747 = vcvt.s32.f32 %v1619
    %v1748 = vcvt.s32.f32 %v1620
    %v1749 = vld [vmem:[#allocation4] sm:$0xff]
    %v1750 = vld [vmem:[#allocation4 + $0x8] sm:$0xff]
    %v1751 = vld [vmem:[#allocation4 + $0x10] sm:$0xff]
    %v1752 = vld [vmem:[#allocation4 + $0x18] sm:$0xff]
    %v1753 = vld [vmem:[%s0] sm:$0xff]
    %v1754 = vld [vmem:[%s0 + $0x8] sm:$0xff]
    %v1755 = vld [vmem:[%s0 + $0x10] sm:$0xff]
    %v1756 = vld [vmem:[%s0 + $0x18] sm:$0xff]
    %v1757 = vld [vmem:[#allocation8] sm:$0xff]
    %v1758 = vld [vmem:[#allocation8 + $0x8] sm:$0xff]
    %v1759 = vld [vmem:[#allocation8 + $0x10] sm:$0xff]
    %v1760 = vld [vmem:[#allocation8 + $0x18] sm:$0xff]
    %v1761 = vld [vmem:[#allocation8 + $0x20] sm:$0xff]
    %v1762 = vld [vmem:[#allocation8 + $0x28] sm:$0xff]
    %v1763 = vld [vmem:[#allocation8 + $0x30] sm:$0xff]
    %v1764 = vld [vmem:[#allocation8 + $0x38] sm:$0xff]
    %v1765 = vld [vmem:[#allocation8 + $0x40] sm:$0xff]
    %v1766 = vld [vmem:[#allocation8 + $0x48] sm:$0xff]
    %v1767 = vld [vmem:[#allocation8 + $0x50] sm:$0xff]
    %v1768 = vld [vmem:[#allocation8 + $0x58] sm:$0xff]
    %v1769 = vld [vmem:[#allocation8 + $0x60] sm:$0xff]
    %v1770 = vld [vmem:[#allocation8 + $0x68] sm:$0xff]
    %v1771 = vld [vmem:[#allocation8 + $0x70] sm:$0xff]
    %v1772 = vld [vmem:[#allocation8 + $0x78] sm:$0xff]
    %v1773 = vld [vmem:[#allocation8 + $0x80] sm:$0xff]
    %v1774 = vld [vmem:[#allocation8 + $0x88] sm:$0xff]
    %v1775 = vld [vmem:[#allocation8 + $0x90] sm:$0xff]
    %v1776 = vld [vmem:[#allocation8 + $0x98] sm:$0xff]
    %v1777 = vld [vmem:[#allocation8 + $0xa0] sm:$0xff]
    %v1778 = vld [vmem:[#allocation8 + $0xa8] sm:$0xff]
    %v1779 = vld [vmem:[#allocation8 + $0xb0] sm:$0xff]
    %v1780 = vld [vmem:[#allocation8 + $0xb8] sm:$0xff]
    %v1781 = vld [vmem:[#allocation8 + $0xc0] sm:$0xff]
    %v1782 = vld [vmem:[#allocation8 + $0xc8] sm:$0xff]
    %v1783 = vld [vmem:[#allocation8 + $0xd0] sm:$0xff]
    %v1784 = vld [vmem:[#allocation8 + $0xd8] sm:$0xff]
    %v1785 = vld [vmem:[#allocation8 + $0xe0] sm:$0xff]
    %v1786 = vld [vmem:[#allocation8 + $0xe8] sm:$0xff]
    %v1787 = vld [vmem:[#allocation8 + $0xf0] sm:$0xff]
    %v1788 = vld [vmem:[#allocation8 + $0xf8] sm:$0xff]
    %v1789 = vld [vmem:[%s6] sm:$0xff]
    %v1791 = vlaneseq
    %v1792 = vshrl.u32 %v1791, 7
    %v1793 = vsub.s32 0, %v1792
    %v1794 = vrot.slane %v1789, %v1793
    %v1795 = vlaneseq
    %v1796 = vshrl.u32 %v1795, 7
    %v1797 = vsub.s32 1, %v1796
    %v1798 = vrot.slane %v1789, %v1797
    %v1799 = vlaneseq
    %v1800 = vshrl.u32 %v1799, 7
    %v1801 = vsub.s32 2, %v1800
    %v1802 = vrot.slane %v1789, %v1801
    %v1803 = vlaneseq
    %v1804 = vshrl.u32 %v1803, 7
    %v1805 = vsub.s32 3, %v1804
    %v1806 = vrot.slane %v1789, %v1805
    %v1807 = vlaneseq
    %v1808 = vshrl.u32 %v1807, 7
    %v1809 = vsub.s32 4, %v1808
    %v1810 = vrot.slane %v1789, %v1809
    %v1811 = vlaneseq
    %v1812 = vshrl.u32 %v1811, 7
    %v1813 = vsub.s32 5, %v1812
    %v1814 = vrot.slane %v1789, %v1813
    %v1815 = vlaneseq
    %v1816 = vshrl.u32 %v1815, 7
    %v1817 = vsub.s32 6, %v1816
    %v1818 = vrot.slane %v1789, %v1817
    %v1819 = vlaneseq
    %v1820 = vshrl.u32 %v1819, 7
    %v1821 = vsub.s32 7, %v1820
    %v1822 = vrot.slane %v1789, %v1821
    %v1832 = vsel %vm199, %v1749, 0
    %v1835 = vsel %vm199, %v1750, 0
    %v1838 = vsel %vm199, %v1751, 0
    %v1841 = vsel %vm199, %v1752, 0
    %1843 = vmatprep.subr.mxu0 0.0
    %1844 = vmatpush1.msra.mxu0 0.0
    %1845 = vmatprep.subr.mxu0 0.0
    %1846 = vmatpush1.msra.mxu0 0.0
    %1847 = vmatprep.subr.mxu0 0.0
    %1848 = vmatpush1.msra.mxu0 0.0
    %1849 = vmatprep.subr.mxu0 0.0
    %1850 = vmatpush1.msra.mxu0 0.0
    %1851 = vmatprep.subr.mxu0 0.0
    %1852 = vmatpush1.msra.mxu0 0.0
    %1853 = vmatprep.subr.mxu0 0.0
    %1854 = vmatpush1.msra.mxu0 0.0
    %1855 = vmatprep.subr.mxu0 0.0
    %1856 = vmatpush1.msra.mxu0 0.0
    %1857 = vmatprep.subr.mxu0 0.0
    %1858 = vmatpush1.msra.mxu0 0.0
    %1859 = vmatprep.subr.mxu0 0.0
    %1860 = vmatpush1.msra.mxu0 0.0
    %1861 = vmatprep.subr.mxu0 0.0
    %1862 = vmatpush1.msra.mxu0 0.0
    %1863 = vmatprep.subr.mxu0 0.0
    %1864 = vmatpush1.msra.mxu0 0.0
    %1865 = vmatprep.subr.mxu0 0.0
    %1866 = vmatpush1.msra.mxu0 0.0
    %1867 = vmatprep.subr.mxu0 %v1782
    %1868 = vmatpush1.msra.mxu0 %v1781
    %1869 = vmatprep.subr.mxu0 %v1774
    %1870 = vmatpush1.msra.mxu0 %v1773
    %1871 = vmatprep.subr.mxu0 %v1766
    %1872 = vmatpush1.msra.mxu0 %v1765
    %1873 = vmatprep.subr.mxu0 %v1758
    %1874 = vmatpush1.msra.mxu0 %v1757
    %1875 = vmatprep.subr.mxu0 0.0
    %1876 = vmatpush2.msra.mxu0 0.0
    %1877 = vmatprep.subr.mxu0 0.0
    %1878 = vmatpush2.msra.mxu0 0.0
    %1879 = vmatprep.subr.mxu0 0.0
    %1880 = vmatpush2.msra.mxu0 0.0
    %1881 = vmatprep.subr.mxu0 0.0
    %1882 = vmatpush2.msra.mxu0 0.0
    %1883 = vmatprep.subr.mxu0 0.0
    %1884 = vmatpush2.msra.mxu0 0.0
    %1885 = vmatprep.subr.mxu0 0.0
    %1886 = vmatpush2.msra.mxu0 0.0
    %1887 = vmatprep.subr.mxu0 0.0
    %1888 = vmatpush2.msra.mxu0 0.0
    %1889 = vmatprep.subr.mxu0 0.0
    %1890 = vmatpush2.msra.mxu0 0.0
    %1891 = vmatprep.subr.mxu0 0.0
    %1892 = vmatpush2.msra.mxu0 0.0
    %1893 = vmatprep.subr.mxu0 0.0
    %1894 = vmatpush2.msra.mxu0 0.0
    %1895 = vmatprep.subr.mxu0 0.0
    %1896 = vmatpush2.msra.mxu0 0.0
    %1897 = vmatprep.subr.mxu0 0.0
    %1898 = vmatpush2.msra.mxu0 0.0
    %1899 = vmatprep.subr.mxu0 0.0
    %1900 = vmatpush2.msra.mxu0 0.0
    %1901 = vmatprep.subr.mxu0 0.0
    %1902 = vmatpush2.msra.mxu0 0.0
    %1903 = vmatprep.subr.mxu0 0.0
    %1904 = vmatpush2.msra.mxu0 0.0
    %1905 = vmatprep.subr.mxu0 0.0
    %1906 = vmatpush2.msra.mxu0 0.0
    %1907 = vmatprep.mubr.f32.mxu0 0.0
    %1908 = vmatmul.mubr.f32.gmra.mxu0 %v1832
    %v1909 = vpop.f32.mrf.mxu0
    %v1910 = vadd.f32 %v1794, %v1909
    %v1911 = vpop.f32.mrf.mxu0
    %v1912 = vadd.f32 %v1798, %v1911
    %1913 = vmatprep.mubr.f32.mxu0 0.0
    %1914 = vmatmul.mubr.f32.gmra.mxu0 %v1835
    %v1915 = vpop.f32.mrf.mxu0
    %v1916 = vadd.f32 %v1794, %v1915
    %v1917 = vpop.f32.mrf.mxu0
    %v1918 = vadd.f32 %v1798, %v1917
    %1919 = vmatprep.mubr.f32.mxu0 0.0
    %1920 = vmatmul.mubr.f32.gmra.mxu0 %v1838
    %v1921 = vpop.f32.mrf.mxu0
    %v1922 = vadd.f32 %v1794, %v1921
    %v1923 = vpop.f32.mrf.mxu0
    %v1924 = vadd.f32 %v1798, %v1923
    %1925 = vmatprep.mubr.f32.mxu0 0.0
    %1926 = vmatmul.mubr.f32.gmra.mxu0 %v1841
    %v1927 = vpop.f32.mrf.mxu0
    %v1928 = vadd.f32 %v1794, %v1927
    %v1929 = vpop.f32.mrf.mxu0
    %v1930 = vadd.f32 %v1798, %v1929
    %1931 = vdwg.mxu0
    %1932 = vmatprep.subr.mxu0 0.0
    %1933 = vmatpush1.msra.mxu0 0.0
    %1934 = vmatprep.subr.mxu0 0.0
    %1935 = vmatpush1.msra.mxu0 0.0
    %1936 = vmatprep.subr.mxu0 0.0
    %1937 = vmatpush1.msra.mxu0 0.0
    %1938 = vmatprep.subr.mxu0 0.0
    %1939 = vmatpush1.msra.mxu0 0.0
    %1940 = vmatprep.subr.mxu0 0.0
    %1941 = vmatpush1.msra.mxu0 0.0
    %1942 = vmatprep.subr.mxu0 0.0
    %1943 = vmatpush1.msra.mxu0 0.0
    %1944 = vmatprep.subr.mxu0 0.0
    %1945 = vmatpush1.msra.mxu0 0.0
    %1946 = vmatprep.subr.mxu0 0.0
    %1947 = vmatpush1.msra.mxu0 0.0
    %1948 = vmatprep.subr.mxu0 0.0
    %1949 = vmatpush1.msra.mxu0 0.0
    %1950 = vmatprep.subr.mxu0 0.0
    %1951 = vmatpush1.msra.mxu0 0.0
    %1952 = vmatprep.subr.mxu0 0.0
    %1953 = vmatpush1.msra.mxu0 0.0
    %1954 = vmatprep.subr.mxu0 0.0
    %1955 = vmatpush1.msra.mxu0 0.0
    %1956 = vmatprep.subr.mxu0 %v1784
    %1957 = vmatpush1.msra.mxu0 %v1783
    %1958 = vmatprep.subr.mxu0 %v1776
    %1959 = vmatpush1.msra.mxu0 %v1775
    %1960 = vmatprep.subr.mxu0 %v1768
    %1961 = vmatpush1.msra.mxu0 %v1767
    %1962 = vmatprep.subr.mxu0 %v1760
    %1963 = vmatpush1.msra.mxu0 %v1759
    %1964 = vmatprep.subr.mxu0 0.0
    %1965 = vmatpush2.msra.mxu0 0.0
    %1966 = vmatprep.subr.mxu0 0.0
    %1967 = vmatpush2.msra.mxu0 0.0
    %1968 = vmatprep.subr.mxu0 0.0
    %1969 = vmatpush2.msra.mxu0 0.0
    %1970 = vmatprep.subr.mxu0 0.0
    %1971 = vmatpush2.msra.mxu0 0.0
    %1972 = vmatprep.subr.mxu0 0.0
    %1973 = vmatpush2.msra.mxu0 0.0
    %1974 = vmatprep.subr.mxu0 0.0
    %1975 = vmatpush2.msra.mxu0 0.0
    %1976 = vmatprep.subr.mxu0 0.0
    %1977 = vmatpush2.msra.mxu0 0.0
    %1978 = vmatprep.subr.mxu0 0.0
    %1979 = vmatpush2.msra.mxu0 0.0
    %1980 = vmatprep.subr.mxu0 0.0
    %1981 = vmatpush2.msra.mxu0 0.0
    %1982 = vmatprep.subr.mxu0 0.0
    %1983 = vmatpush2.msra.mxu0 0.0
    %1984 = vmatprep.subr.mxu0 0.0
    %1985 = vmatpush2.msra.mxu0 0.0
    %1986 = vmatprep.subr.mxu0 0.0
    %1987 = vmatpush2.msra.mxu0 0.0
    %1988 = vmatprep.subr.mxu0 0.0
    %1989 = vmatpush2.msra.mxu0 0.0
    %1990 = vmatprep.subr.mxu0 0.0
    %1991 = vmatpush2.msra.mxu0 0.0
    %1992 = vmatprep.subr.mxu0 0.0
    %1993 = vmatpush2.msra.mxu0 0.0
    %1994 = vmatprep.subr.mxu0 0.0
    %1995 = vmatpush2.msra.mxu0 0.0
    %1996 = vmatprep.mubr.f32.mxu0 0.0
    %1997 = vmatmul.mubr.f32.gmra.mxu0 %v1832
    %v1998 = vpop.f32.mrf.mxu0
    %v1999 = vadd.f32 %v1802, %v1998
    %v2000 = vpop.f32.mrf.mxu0
    %v2001 = vadd.f32 %v1806, %v2000
    %2002 = vmatprep.mubr.f32.mxu0 0.0
    %2003 = vmatmul.mubr.f32.gmra.mxu0 %v1835
    %v2004 = vpop.f32.mrf.mxu0
    %v2005 = vadd.f32 %v1802, %v2004
    %v2006 = vpop.f32.mrf.mxu0
    %v2007 = vadd.f32 %v1806, %v2006
    %2008 = vmatprep.mubr.f32.mxu0 0.0
    %2009 = vmatmul.mubr.f32.gmra.mxu0 %v1838
    %v2010 = vpop.f32.mrf.mxu0
    %v2011 = vadd.f32 %v1802, %v2010
    %v2012 = vpop.f32.mrf.mxu0
    %v2013 = vadd.f32 %v1806, %v2012
    %2014 = vmatprep.mubr.f32.mxu0 0.0
    %2015 = vmatmul.mubr.f32.gmra.mxu0 %v1841
    %v2016 = vpop.f32.mrf.mxu0
    %v2017 = vadd.f32 %v1802, %v2016
    %v2018 = vpop.f32.mrf.mxu0
    %v2019 = vadd.f32 %v1806, %v2018
    %2020 = vdwg.mxu0
    %2021 = vmatprep.subr.mxu0 0.0
    %2022 = vmatpush1.msra.mxu0 0.0
    %2023 = vmatprep.subr.mxu0 0.0
    %2024 = vmatpush1.msra.mxu0 0.0
    %2025 = vmatprep.subr.mxu0 0.0
    %2026 = vmatpush1.msra.mxu0 0.0
    %2027 = vmatprep.subr.mxu0 0.0
    %2028 = vmatpush1.msra.mxu0 0.0
    %2029 = vmatprep.subr.mxu0 0.0
    %2030 = vmatpush1.msra.mxu0 0.0
    %2031 = vmatprep.subr.mxu0 0.0
    %2032 = vmatpush1.msra.mxu0 0.0
    %2033 = vmatprep.subr.mxu0 0.0
    %2034 = vmatpush1.msra.mxu0 0.0
    %2035 = vmatprep.subr.mxu0 0.0
    %2036 = vmatpush1.msra.mxu0 0.0
    %2037 = vmatprep.subr.mxu0 0.0
    %2038 = vmatpush1.msra.mxu0 0.0
    %2039 = vmatprep.subr.mxu0 0.0
    %2040 = vmatpush1.msra.mxu0 0.0
    %2041 = vmatprep.subr.mxu0 0.0
    %2042 = vmatpush1.msra.mxu0 0.0
    %2043 = vmatprep.subr.mxu0 0.0
    %2044 = vmatpush1.msra.mxu0 0.0
    %2045 = vmatprep.subr.mxu0 %v1786
    %2046 = vmatpush1.msra.mxu0 %v1785
    %2047 = vmatprep.subr.mxu0 %v1778
    %2048 = vmatpush1.msra.mxu0 %v1777
    %2049 = vmatprep.subr.mxu0 %v1770
    %2050 = vmatpush1.msra.mxu0 %v1769
    %2051 = vmatprep.subr.mxu0 %v1762
    %2052 = vmatpush1.msra.mxu0 %v1761
    %2053 = vmatprep.subr.mxu0 0.0
    %2054 = vmatpush2.msra.mxu0 0.0
    %2055 = vmatprep.subr.mxu0 0.0
    %2056 = vmatpush2.msra.mxu0 0.0
    %2057 = vmatprep.subr.mxu0 0.0
    %2058 = vmatpush2.msra.mxu0 0.0
    %2059 = vmatprep.subr.mxu0 0.0
    %2060 = vmatpush2.msra.mxu0 0.0
    %2061 = vmatprep.subr.mxu0 0.0
    %2062 = vmatpush2.msra.mxu0 0.0
    %2063 = vmatprep.subr.mxu0 0.0
    %2064 = vmatpush2.msra.mxu0 0.0
    %2065 = vmatprep.subr.mxu0 0.0
    %2066 = vmatpush2.msra.mxu0 0.0
    %2067 = vmatprep.subr.mxu0 0.0
    %2068 = vmatpush2.msra.mxu0 0.0
    %2069 = vmatprep.subr.mxu0 0.0
    %2070 = vmatpush2.msra.mxu0 0.0
    %2071 = vmatprep.subr.mxu0 0.0
    %2072 = vmatpush2.msra.mxu0 0.0
    %2073 = vmatprep.subr.mxu0 0.0
    %2074 = vmatpush2.msra.mxu0 0.0
    %2075 = vmatprep.subr.mxu0 0.0
    %2076 = vmatpush2.msra.mxu0 0.0
    %2077 = vmatprep.subr.mxu0 0.0
    %2078 = vmatpush2.msra.mxu0 0.0
    %2079 = vmatprep.subr.mxu0 0.0
    %2080 = vmatpush2.msra.mxu0 0.0
    %2081 = vmatprep.subr.mxu0 0.0
    %2082 = vmatpush2.msra.mxu0 0.0
    %2083 = vmatprep.subr.mxu0 0.0
    %2084 = vmatpush2.msra.mxu0 0.0
    %2085 = vmatprep.mubr.f32.mxu0 0.0
    %2086 = vmatmul.mubr.f32.gmra.mxu0 %v1832
    %v2087 = vpop.f32.mrf.mxu0
    %v2088 = vadd.f32 %v1810, %v2087
    %v2089 = vpop.f32.mrf.mxu0
    %v2090 = vadd.f32 %v1814, %v2089
    %2091 = vmatprep.mubr.f32.mxu0 0.0
    %2092 = vmatmul.mubr.f32.gmra.mxu0 %v1835
    %v2093 = vpop.f32.mrf.mxu0
    %v2094 = vadd.f32 %v1810, %v2093
    %v2095 = vpop.f32.mrf.mxu0
    %v2096 = vadd.f32 %v1814, %v2095
    %2097 = vmatprep.mubr.f32.mxu0 0.0
    %2098 = vmatmul.mubr.f32.gmra.mxu0 %v1838
    %v2099 = vpop.f32.mrf.mxu0
    %v2100 = vadd.f32 %v1810, %v2099
    %v2101 = vpop.f32.mrf.mxu0
    %v2102 = vadd.f32 %v1814, %v2101
    %2103 = vmatprep.mubr.f32.mxu0 0.0
    %2104 = vmatmul.mubr.f32.gmra.mxu0 %v1841
    %v2105 = vpop.f32.mrf.mxu0
    %v2106 = vadd.f32 %v1810, %v2105
    %v2107 = vpop.f32.mrf.mxu0
    %v2108 = vadd.f32 %v1814, %v2107
    %2109 = vdwg.mxu0
    %2110 = vmatprep.subr.mxu0 0.0
    %2111 = vmatpush1.msra.mxu0 0.0
    %2112 = vmatprep.subr.mxu0 0.0
    %2113 = vmatpush1.msra.mxu0 0.0
    %2114 = vmatprep.subr.mxu0 0.0
    %2115 = vmatpush1.msra.mxu0 0.0
    %2116 = vmatprep.subr.mxu0 0.0
    %2117 = vmatpush1.msra.mxu0 0.0
    %2118 = vmatprep.subr.mxu0 0.0
    %2119 = vmatpush1.msra.mxu0 0.0
    %2120 = vmatprep.subr.mxu0 0.0
    %2121 = vmatpush1.msra.mxu0 0.0
    %2122 = vmatprep.subr.mxu0 0.0
    %2123 = vmatpush1.msra.mxu0 0.0
    %2124 = vmatprep.subr.mxu0 0.0
    %2125 = vmatpush1.msra.mxu0 0.0
    %2126 = vmatprep.subr.mxu0 0.0
    %2127 = vmatpush1.msra.mxu0 0.0
    %2128 = vmatprep.subr.mxu0 0.0
    %2129 = vmatpush1.msra.mxu0 0.0
    %2130 = vmatprep.subr.mxu0 0.0
    %2131 = vmatpush1.msra.mxu0 0.0
    %2132 = vmatprep.subr.mxu0 0.0
    %2133 = vmatpush1.msra.mxu0 0.0
    %2134 = vmatprep.subr.mxu0 %v1788
    %2135 = vmatpush1.msra.mxu0 %v1787
    %2136 = vmatprep.subr.mxu0 %v1780
    %2137 = vmatpush1.msra.mxu0 %v1779
    %2138 = vmatprep.subr.mxu0 %v1772
    %2139 = vmatpush1.msra.mxu0 %v1771
    %2140 = vmatprep.subr.mxu0 %v1764
    %2141 = vmatpush1.msra.mxu0 %v1763
    %2142 = vmatprep.subr.mxu0 0.0
    %2143 = vmatpush2.msra.mxu0 0.0
    %2144 = vmatprep.subr.mxu0 0.0
    %2145 = vmatpush2.msra.mxu0 0.0
    %2146 = vmatprep.subr.mxu0 0.0
    %2147 = vmatpush2.msra.mxu0 0.0
    %2148 = vmatprep.subr.mxu0 0.0
    %2149 = vmatpush2.msra.mxu0 0.0
    %2150 = vmatprep.subr.mxu0 0.0
    %2151 = vmatpush2.msra.mxu0 0.0
    %2152 = vmatprep.subr.mxu0 0.0
    %2153 = vmatpush2.msra.mxu0 0.0
    %2154 = vmatprep.subr.mxu0 0.0
    %2155 = vmatpush2.msra.mxu0 0.0
    %2156 = vmatprep.subr.mxu0 0.0
    %2157 = vmatpush2.msra.mxu0 0.0
    %2158 = vmatprep.subr.mxu0 0.0
    %2159 = vmatpush2.msra.mxu0 0.0
    %2160 = vmatprep.subr.mxu0 0.0
    %2161 = vmatpush2.msra.mxu0 0.0
    %2162 = vmatprep.subr.mxu0 0.0
    %2163 = vmatpush2.msra.mxu0 0.0
    %2164 = vmatprep.subr.mxu0 0.0
    %2165 = vmatpush2.msra.mxu0 0.0
    %2166 = vmatprep.subr.mxu0 0.0
    %2167 = vmatpush2.msra.mxu0 0.0
    %2168 = vmatprep.subr.mxu0 0.0
    %2169 = vmatpush2.msra.mxu0 0.0
    %2170 = vmatprep.subr.mxu0 0.0
    %2171 = vmatpush2.msra.mxu0 0.0
    %2172 = vmatprep.subr.mxu0 0.0
    %2173 = vmatpush2.msra.mxu0 0.0
    %2174 = vmatprep.mubr.f32.mxu0 0.0
    %2175 = vmatmul.mubr.f32.gmra.mxu0 %v1832
    %v2176 = vpop.f32.mrf.mxu0
    %v2177 = vadd.f32 %v1818, %v2176
    %v2178 = vpop.f32.mrf.mxu0
    %v2179 = vadd.f32 %v1822, %v2178
    %2180 = vmatprep.mubr.f32.mxu0 0.0
    %2181 = vmatmul.mubr.f32.gmra.mxu0 %v1835
    %v2182 = vpop.f32.mrf.mxu0
    %v2183 = vadd.f32 %v1818, %v2182
    %v2184 = vpop.f32.mrf.mxu0
    %v2185 = vadd.f32 %v1822, %v2184
    %2186 = vmatprep.mubr.f32.mxu0 0.0
    %2187 = vmatmul.mubr.f32.gmra.mxu0 %v1838
    %v2188 = vpop.f32.mrf.mxu0
    %v2189 = vadd.f32 %v1818, %v2188
    %v2190 = vpop.f32.mrf.mxu0
    %v2191 = vadd.f32 %v1822, %v2190
    %2192 = vmatprep.mubr.f32.mxu0 0.0
    %2193 = vmatmul.mubr.f32.gmra.mxu0 %v1841
    %v2194 = vpop.f32.mrf.mxu0
    %v2195 = vadd.f32 %v1818, %v2194
    %v2196 = vpop.f32.mrf.mxu0
    %v2197 = vadd.f32 %v1822, %v2196
    %2198 = vdwg.mxu0
    %v2199 = vld [vmem:[#allocation10] sm:$0xff]
    %v2200 = vld [vmem:[#allocation10 + $0x8] sm:$0xff]
    %v2201 = vld [vmem:[#allocation10 + $0x10] sm:$0xff]
    %v2202 = vld [vmem:[#allocation10 + $0x18] sm:$0xff]
    %v2203 = vld [vmem:[#allocation10 + $0x20] sm:$0xff]
    %v2204 = vld [vmem:[#allocation10 + $0x28] sm:$0xff]
    %v2205 = vld [vmem:[#allocation10 + $0x30] sm:$0xff]
    %v2206 = vld [vmem:[#allocation10 + $0x38] sm:$0xff]
    %v2207 = vld [vmem:[#allocation10 + $0x40] sm:$0xff]
    %v2208 = vld [vmem:[#allocation10 + $0x48] sm:$0xff]
    %v2209 = vld [vmem:[#allocation10 + $0x50] sm:$0xff]
    %v2210 = vld [vmem:[#allocation10 + $0x58] sm:$0xff]
    %v2211 = vld [vmem:[#allocation10 + $0x60] sm:$0xff]
    %v2212 = vld [vmem:[#allocation10 + $0x68] sm:$0xff]
    %v2213 = vld [vmem:[#allocation10 + $0x70] sm:$0xff]
    %v2214 = vld [vmem:[#allocation10 + $0x78] sm:$0xff]
    %v2215 = vld [vmem:[#allocation11] sm:$0xff]
    %v2217 = vlaneseq
    %v2218 = vshrl.u32 %v2217, 7
    %v2219 = vsub.s32 0, %v2218
    %v2220 = vrot.slane %v2215, %v2219
    %v2221 = vlaneseq
    %v2222 = vshrl.u32 %v2221, 7
    %v2223 = vsub.s32 1, %v2222
    %v2224 = vrot.slane %v2215, %v2223
    %v2225 = vlaneseq
    %v2226 = vshrl.u32 %v2225, 7
    %v2227 = vsub.s32 2, %v2226
    %v2228 = vrot.slane %v2215, %v2227
    %v2229 = vlaneseq
    %v2230 = vshrl.u32 %v2229, 7
    %v2231 = vsub.s32 3, %v2230
    %v2232 = vrot.slane %v2215, %v2231
    %v2233 = vlaneseq
    %v2234 = vshrl.u32 %v2233, 7
    %v2235 = vsub.s32 4, %v2234
    %v2236 = vrot.slane %v2215, %v2235
    %v2237 = vlaneseq
    %v2238 = vshrl.u32 %v2237, 7
    %v2239 = vsub.s32 5, %v2238
    %v2240 = vrot.slane %v2215, %v2239
    %v2241 = vlaneseq
    %v2242 = vshrl.u32 %v2241, 7
    %v2243 = vsub.s32 6, %v2242
    %v2244 = vrot.slane %v2215, %v2243
    %v2245 = vlaneseq
    %v2246 = vshrl.u32 %v2245, 7
    %v2247 = vsub.s32 7, %v2246
    %v2248 = vrot.slane %v2215, %v2247
    %v2258 = vsel %vm101, %v1753, 0
    %v2261 = vsel %vm101, %v1754, 0
    %v2264 = vsel %vm101, %v1755, 0
    %v2267 = vsel %vm101, %v1756, 0
    %2269 = vmatprep.subr.mxu0 0.0
    %2270 = vmatpush1.msra.mxu0 0.0
    %2271 = vmatprep.subr.mxu0 0.0
    %2272 = vmatpush1.msra.mxu0 0.0
    %2273 = vmatprep.subr.mxu0 0.0
    %2274 = vmatpush1.msra.mxu0 0.0
    %2275 = vmatprep.subr.mxu0 0.0
    %2276 = vmatpush1.msra.mxu0 0.0
    %2277 = vmatprep.subr.mxu0 0.0
    %2278 = vmatpush1.msra.mxu0 0.0
    %2279 = vmatprep.subr.mxu0 0.0
    %2280 = vmatpush1.msra.mxu0 0.0
    %2281 = vmatprep.subr.mxu0 0.0
    %2282 = vmatpush1.msra.mxu0 0.0
    %2283 = vmatprep.subr.mxu0 0.0
    %2284 = vmatpush1.msra.mxu0 0.0
    %2285 = vmatprep.subr.mxu0 0.0
    %2286 = vmatpush1.msra.mxu0 0.0
    %2287 = vmatprep.subr.mxu0 0.0
    %2288 = vmatpush1.msra.mxu0 0.0
    %2289 = vmatprep.subr.mxu0 0.0
    %2290 = vmatpush1.msra.mxu0 0.0
    %2291 = vmatprep.subr.mxu0 0.0
    %2292 = vmatpush1.msra.mxu0 0.0
    %2293 = vmatprep.subr.mxu0 0.0
    %2294 = vmatpush1.msra.mxu0 0.0
    %2295 = vmatprep.subr.mxu0 0.0
    %2296 = vmatpush1.msra.mxu0 0.0
    %2297 = vmatprep.subr.mxu0 %v2208
    %2298 = vmatpush1.msra.mxu0 %v2207
    %2299 = vmatprep.subr.mxu0 %v2200
    %2300 = vmatpush1.msra.mxu0 %v2199
    %2301 = vmatprep.subr.mxu0 0.0
    %2302 = vmatpush2.msra.mxu0 0.0
    %2303 = vmatprep.subr.mxu0 0.0
    %2304 = vmatpush2.msra.mxu0 0.0
    %2305 = vmatprep.subr.mxu0 0.0
    %2306 = vmatpush2.msra.mxu0 0.0
    %2307 = vmatprep.subr.mxu0 0.0
    %2308 = vmatpush2.msra.mxu0 0.0
    %2309 = vmatprep.subr.mxu0 0.0
    %2310 = vmatpush2.msra.mxu0 0.0
    %2311 = vmatprep.subr.mxu0 0.0
    %2312 = vmatpush2.msra.mxu0 0.0
    %2313 = vmatprep.subr.mxu0 0.0
    %2314 = vmatpush2.msra.mxu0 0.0
    %2315 = vmatprep.subr.mxu0 0.0
    %2316 = vmatpush2.msra.mxu0 0.0
    %2317 = vmatprep.subr.mxu0 0.0
    %2318 = vmatpush2.msra.mxu0 0.0
    %2319 = vmatprep.subr.mxu0 0.0
    %2320 = vmatpush2.msra.mxu0 0.0
    %2321 = vmatprep.subr.mxu0 0.0
    %2322 = vmatpush2.msra.mxu0 0.0
    %2323 = vmatprep.subr.mxu0 0.0
    %2324 = vmatpush2.msra.mxu0 0.0
    %2325 = vmatprep.subr.mxu0 0.0
    %2326 = vmatpush2.msra.mxu0 0.0
    %2327 = vmatprep.subr.mxu0 0.0
    %2328 = vmatpush2.msra.mxu0 0.0
    %2329 = vmatprep.subr.mxu0 0.0
    %2330 = vmatpush2.msra.mxu0 0.0
    %2331 = vmatprep.subr.mxu0 0.0
    %2332 = vmatpush2.msra.mxu0 0.0
    %2333 = vmatprep.mubr.f32.mxu0 0.0
    %2334 = vmatmul.mubr.f32.gmra.mxu0 %v2258
    %v2335 = vpop.f32.mrf.mxu0
    %v2336 = vadd.f32 %v2220, %v2335
    %v2337 = vpop.f32.mrf.mxu0
    %v2338 = vadd.f32 %v2224, %v2337
    %2339 = vmatprep.mubr.f32.mxu0 0.0
    %2340 = vmatmul.mubr.f32.gmra.mxu0 %v2261
    %v2341 = vpop.f32.mrf.mxu0
    %v2342 = vadd.f32 %v2220, %v2341
    %v2343 = vpop.f32.mrf.mxu0
    %v2344 = vadd.f32 %v2224, %v2343
    %2345 = vmatprep.mubr.f32.mxu0 0.0
    %2346 = vmatmul.mubr.f32.gmra.mxu0 %v2264
    %v2347 = vpop.f32.mrf.mxu0
    %v2348 = vadd.f32 %v2220, %v2347
    %v2349 = vpop.f32.mrf.mxu0
    %v2350 = vadd.f32 %v2224, %v2349
    %2351 = vmatprep.mubr.f32.mxu0 0.0
    %2352 = vmatmul.mubr.f32.gmra.mxu0 %v2267
    %v2353 = vpop.f32.mrf.mxu0
    %v2354 = vadd.f32 %v2220, %v2353
    %v2355 = vpop.f32.mrf.mxu0
    %v2356 = vadd.f32 %v2224, %v2355
    %2357 = vdwg.mxu0
    %2358 = vmatprep.subr.mxu0 0.0
    %2359 = vmatpush1.msra.mxu0 0.0
    %2360 = vmatprep.subr.mxu0 0.0
    %2361 = vmatpush1.msra.mxu0 0.0
    %2362 = vmatprep.subr.mxu0 0.0
    %2363 = vmatpush1.msra.mxu0 0.0
    %2364 = vmatprep.subr.mxu0 0.0
    %2365 = vmatpush1.msra.mxu0 0.0
    %2366 = vmatprep.subr.mxu0 0.0
    %2367 = vmatpush1.msra.mxu0 0.0
    %2368 = vmatprep.subr.mxu0 0.0
    %2369 = vmatpush1.msra.mxu0 0.0
    %2370 = vmatprep.subr.mxu0 0.0
    %2371 = vmatpush1.msra.mxu0 0.0
    %2372 = vmatprep.subr.mxu0 0.0
    %2373 = vmatpush1.msra.mxu0 0.0
    %2374 = vmatprep.subr.mxu0 0.0
    %2375 = vmatpush1.msra.mxu0 0.0
    %2376 = vmatprep.subr.mxu0 0.0
    %2377 = vmatpush1.msra.mxu0 0.0
    %2378 = vmatprep.subr.mxu0 0.0
    %2379 = vmatpush1.msra.mxu0 0.0
    %2380 = vmatprep.subr.mxu0 0.0
    %2381 = vmatpush1.msra.mxu0 0.0
    %2382 = vmatprep.subr.mxu0 0.0
    %2383 = vmatpush1.msra.mxu0 0.0
    %2384 = vmatprep.subr.mxu0 0.0
    %2385 = vmatpush1.msra.mxu0 0.0
    %2386 = vmatprep.subr.mxu0 %v2210
    %2387 = vmatpush1.msra.mxu0 %v2209
    %2388 = vmatprep.subr.mxu0 %v2202
    %2389 = vmatpush1.msra.mxu0 %v2201
    %2390 = vmatprep.subr.mxu0 0.0
    %2391 = vmatpush2.msra.mxu0 0.0
    %2392 = vmatprep.subr.mxu0 0.0
    %2393 = vmatpush2.msra.mxu0 0.0
    %2394 = vmatprep.subr.mxu0 0.0
    %2395 = vmatpush2.msra.mxu0 0.0
    %2396 = vmatprep.subr.mxu0 0.0
    %2397 = vmatpush2.msra.mxu0 0.0
    %2398 = vmatprep.subr.mxu0 0.0
    %2399 = vmatpush2.msra.mxu0 0.0
    %2400 = vmatprep.subr.mxu0 0.0
    %2401 = vmatpush2.msra.mxu0 0.0
    %2402 = vmatprep.subr.mxu0 0.0
    %2403 = vmatpush2.msra.mxu0 0.0
    %2404 = vmatprep.subr.mxu0 0.0
    %2405 = vmatpush2.msra.mxu0 0.0
    %2406 = vmatprep.subr.mxu0 0.0
    %2407 = vmatpush2.msra.mxu0 0.0
    %2408 = vmatprep.subr.mxu0 0.0
    %2409 = vmatpush2.msra.mxu0 0.0
    %2410 = vmatprep.subr.mxu0 0.0
    %2411 = vmatpush2.msra.mxu0 0.0
    %2412 = vmatprep.subr.mxu0 0.0
    %2413 = vmatpush2.msra.mxu0 0.0
    %2414 = vmatprep.subr.mxu0 0.0
    %2415 = vmatpush2.msra.mxu0 0.0
    %2416 = vmatprep.subr.mxu0 0.0
    %2417 = vmatpush2.msra.mxu0 0.0
    %2418 = vmatprep.subr.mxu0 0.0
    %2419 = vmatpush2.msra.mxu0 0.0
    %2420 = vmatprep.subr.mxu0 0.0
    %2421 = vmatpush2.msra.mxu0 0.0
    %2422 = vmatprep.mubr.f32.mxu0 0.0
    %2423 = vmatmul.mubr.f32.gmra.mxu0 %v2258
    %v2424 = vpop.f32.mrf.mxu0
    %v2425 = vadd.f32 %v2228, %v2424
    %v2426 = vpop.f32.mrf.mxu0
    %v2427 = vadd.f32 %v2232, %v2426
    %2428 = vmatprep.mubr.f32.mxu0 0.0
    %2429 = vmatmul.mubr.f32.gmra.mxu0 %v2261
    %v2430 = vpop.f32.mrf.mxu0
    %v2431 = vadd.f32 %v2228, %v2430
    %v2432 = vpop.f32.mrf.mxu0
    %v2433 = vadd.f32 %v2232, %v2432
    %2434 = vmatprep.mubr.f32.mxu0 0.0
    %2435 = vmatmul.mubr.f32.gmra.mxu0 %v2264
    %v2436 = vpop.f32.mrf.mxu0
    %v2437 = vadd.f32 %v2228, %v2436
    %v2438 = vpop.f32.mrf.mxu0
    %v2439 = vadd.f32 %v2232, %v2438
    %2440 = vmatprep.mubr.f32.mxu0 0.0
    %2441 = vmatmul.mubr.f32.gmra.mxu0 %v2267
    %v2442 = vpop.f32.mrf.mxu0
    %v2443 = vadd.f32 %v2228, %v2442
    %v2444 = vpop.f32.mrf.mxu0
    %v2445 = vadd.f32 %v2232, %v2444
    %2446 = vdwg.mxu0
    %2447 = vmatprep.subr.mxu0 0.0
    %2448 = vmatpush1.msra.mxu0 0.0
    %2449 = vmatprep.subr.mxu0 0.0
    %2450 = vmatpush1.msra.mxu0 0.0
    %2451 = vmatprep.subr.mxu0 0.0
    %2452 = vmatpush1.msra.mxu0 0.0
    %2453 = vmatprep.subr.mxu0 0.0
    %2454 = vmatpush1.msra.mxu0 0.0
    %2455 = vmatprep.subr.mxu0 0.0
    %2456 = vmatpush1.msra.mxu0 0.0
    %2457 = vmatprep.subr.mxu0 0.0
    %2458 = vmatpush1.msra.mxu0 0.0
    %2459 = vmatprep.subr.mxu0 0.0
    %2460 = vmatpush1.msra.mxu0 0.0
    %2461 = vmatprep.subr.mxu0 0.0
    %2462 = vmatpush1.msra.mxu0 0.0
    %2463 = vmatprep.subr.mxu0 0.0
    %2464 = vmatpush1.msra.mxu0 0.0
    %2465 = vmatprep.subr.mxu0 0.0
    %2466 = vmatpush1.msra.mxu0 0.0
    %2467 = vmatprep.subr.mxu0 0.0
    %2468 = vmatpush1.msra.mxu0 0.0
    %2469 = vmatprep.subr.mxu0 0.0
    %2470 = vmatpush1.msra.mxu0 0.0
    %2471 = vmatprep.subr.mxu0 0.0
    %2472 = vmatpush1.msra.mxu0 0.0
    %2473 = vmatprep.subr.mxu0 0.0
    %2474 = vmatpush1.msra.mxu0 0.0
    %2475 = vmatprep.subr.mxu0 %v2212
    %2476 = vmatpush1.msra.mxu0 %v2211
    %2477 = vmatprep.subr.mxu0 %v2204
    %2478 = vmatpush1.msra.mxu0 %v2203
    %2479 = vmatprep.subr.mxu0 0.0
    %2480 = vmatpush2.msra.mxu0 0.0
    %2481 = vmatprep.subr.mxu0 0.0
    %2482 = vmatpush2.msra.mxu0 0.0
    %2483 = vmatprep.subr.mxu0 0.0
    %2484 = vmatpush2.msra.mxu0 0.0
    %2485 = vmatprep.subr.mxu0 0.0
    %2486 = vmatpush2.msra.mxu0 0.0
    %2487 = vmatprep.subr.mxu0 0.0
    %2488 = vmatpush2.msra.mxu0 0.0
    %2489 = vmatprep.subr.mxu0 0.0
    %2490 = vmatpush2.msra.mxu0 0.0
    %2491 = vmatprep.subr.mxu0 0.0
    %2492 = vmatpush2.msra.mxu0 0.0
    %2493 = vmatprep.subr.mxu0 0.0
    %2494 = vmatpush2.msra.mxu0 0.0
    %2495 = vmatprep.subr.mxu0 0.0
    %2496 = vmatpush2.msra.mxu0 0.0
    %2497 = vmatprep.subr.mxu0 0.0
    %2498 = vmatpush2.msra.mxu0 0.0
    %2499 = vmatprep.subr.mxu0 0.0
    %2500 = vmatpush2.msra.mxu0 0.0
    %2501 = vmatprep.subr.mxu0 0.0
    %2502 = vmatpush2.msra.mxu0 0.0
    %2503 = vmatprep.subr.mxu0 0.0
    %2504 = vmatpush2.msra.mxu0 0.0
    %2505 = vmatprep.subr.mxu0 0.0
    %2506 = vmatpush2.msra.mxu0 0.0
    %2507 = vmatprep.subr.mxu0 0.0
    %2508 = vmatpush2.msra.mxu0 0.0
    %2509 = vmatprep.subr.mxu0 0.0
    %2510 = vmatpush2.msra.mxu0 0.0
    %2511 = vmatprep.mubr.f32.mxu0 0.0
    %2512 = vmatmul.mubr.f32.gmra.mxu0 %v2258
    %v2513 = vpop.f32.mrf.mxu0
    %v2514 = vadd.f32 %v2236, %v2513
    %v2515 = vpop.f32.mrf.mxu0
    %v2516 = vadd.f32 %v2240, %v2515
    %2517 = vmatprep.mubr.f32.mxu0 0.0
    %2518 = vmatmul.mubr.f32.gmra.mxu0 %v2261
    %v2519 = vpop.f32.mrf.mxu0
    %v2520 = vadd.f32 %v2236, %v2519
    %v2521 = vpop.f32.mrf.mxu0
    %v2522 = vadd.f32 %v2240, %v2521
    %2523 = vmatprep.mubr.f32.mxu0 0.0
    %2524 = vmatmul.mubr.f32.gmra.mxu0 %v2264
    %v2525 = vpop.f32.mrf.mxu0
    %v2526 = vadd.f32 %v2236, %v2525
    %v2527 = vpop.f32.mrf.mxu0
    %v2528 = vadd.f32 %v2240, %v2527
    %2529 = vmatprep.mubr.f32.mxu0 0.0
    %2530 = vmatmul.mubr.f32.gmra.mxu0 %v2267
    %v2531 = vpop.f32.mrf.mxu0
    %v2532 = vadd.f32 %v2236, %v2531
    %v2533 = vpop.f32.mrf.mxu0
    %v2534 = vadd.f32 %v2240, %v2533
    %2535 = vdwg.mxu0
    %2536 = vmatprep.subr.mxu0 0.0
    %2537 = vmatpush1.msra.mxu0 0.0
    %2538 = vmatprep.subr.mxu0 0.0
    %2539 = vmatpush1.msra.mxu0 0.0
    %2540 = vmatprep.subr.mxu0 0.0
    %2541 = vmatpush1.msra.mxu0 0.0
    %2542 = vmatprep.subr.mxu0 0.0
    %2543 = vmatpush1.msra.mxu0 0.0
    %2544 = vmatprep.subr.mxu0 0.0
    %2545 = vmatpush1.msra.mxu0 0.0
    %2546 = vmatprep.subr.mxu0 0.0
    %2547 = vmatpush1.msra.mxu0 0.0
    %2548 = vmatprep.subr.mxu0 0.0
    %2549 = vmatpush1.msra.mxu0 0.0
    %2550 = vmatprep.subr.mxu0 0.0
    %2551 = vmatpush1.msra.mxu0 0.0
    %2552 = vmatprep.subr.mxu0 0.0
    %2553 = vmatpush1.msra.mxu0 0.0
    %2554 = vmatprep.subr.mxu0 0.0
    %2555 = vmatpush1.msra.mxu0 0.0
    %2556 = vmatprep.subr.mxu0 0.0
    %2557 = vmatpush1.msra.mxu0 0.0
    %2558 = vmatprep.subr.mxu0 0.0
    %2559 = vmatpush1.msra.mxu0 0.0
    %2560 = vmatprep.subr.mxu0 0.0
    %2561 = vmatpush1.msra.mxu0 0.0
    %2562 = vmatprep.subr.mxu0 0.0
    %2563 = vmatpush1.msra.mxu0 0.0
    %2564 = vmatprep.subr.mxu0 %v2214
    %2565 = vmatpush1.msra.mxu0 %v2213
    %2566 = vmatprep.subr.mxu0 %v2206
    %2567 = vmatpush1.msra.mxu0 %v2205
    %2568 = vmatprep.subr.mxu0 0.0
    %2569 = vmatpush2.msra.mxu0 0.0
    %2570 = vmatprep.subr.mxu0 0.0
    %2571 = vmatpush2.msra.mxu0 0.0
    %2572 = vmatprep.subr.mxu0 0.0
    %2573 = vmatpush2.msra.mxu0 0.0
    %2574 = vmatprep.subr.mxu0 0.0
    %2575 = vmatpush2.msra.mxu0 0.0
    %2576 = vmatprep.subr.mxu0 0.0
    %2577 = vmatpush2.msra.mxu0 0.0
    %2578 = vmatprep.subr.mxu0 0.0
    %2579 = vmatpush2.msra.mxu0 0.0
    %2580 = vmatprep.subr.mxu0 0.0
    %2581 = vmatpush2.msra.mxu0 0.0
    %2582 = vmatprep.subr.mxu0 0.0
    %2583 = vmatpush2.msra.mxu0 0.0
    %2584 = vmatprep.subr.mxu0 0.0
    %2585 = vmatpush2.msra.mxu0 0.0
    %2586 = vmatprep.subr.mxu0 0.0
    %2587 = vmatpush2.msra.mxu0 0.0
    %2588 = vmatprep.subr.mxu0 0.0
    %2589 = vmatpush2.msra.mxu0 0.0
    %2590 = vmatprep.subr.mxu0 0.0
    %2591 = vmatpush2.msra.mxu0 0.0
    %2592 = vmatprep.subr.mxu0 0.0
    %2593 = vmatpush2.msra.mxu0 0.0
    %2594 = vmatprep.subr.mxu0 0.0
    %2595 = vmatpush2.msra.mxu0 0.0
    %2596 = vmatprep.subr.mxu0 0.0
    %2597 = vmatpush2.msra.mxu0 0.0
    %2598 = vmatprep.subr.mxu0 0.0
    %2599 = vmatpush2.msra.mxu0 0.0
    %2600 = vmatprep.mubr.f32.mxu0 0.0
    %2601 = vmatmul.mubr.f32.gmra.mxu0 %v2258
    %v2602 = vpop.f32.mrf.mxu0
    %v2603 = vadd.f32 %v2244, %v2602
    %v2604 = vpop.f32.mrf.mxu0
    %v2605 = vadd.f32 %v2248, %v2604
    %2606 = vmatprep.mubr.f32.mxu0 0.0
    %2607 = vmatmul.mubr.f32.gmra.mxu0 %v2261
    %v2608 = vpop.f32.mrf.mxu0
    %v2609 = vadd.f32 %v2244, %v2608
    %v2610 = vpop.f32.mrf.mxu0
    %v2611 = vadd.f32 %v2248, %v2610
    %2612 = vmatprep.mubr.f32.mxu0 0.0
    %2613 = vmatmul.mubr.f32.gmra.mxu0 %v2264
    %v2614 = vpop.f32.mrf.mxu0
    %v2615 = vadd.f32 %v2244, %v2614
    %v2616 = vpop.f32.mrf.mxu0
    %v2617 = vadd.f32 %v2248, %v2616
    %2618 = vmatprep.mubr.f32.mxu0 0.0
    %2619 = vmatmul.mubr.f32.gmra.mxu0 %v2267
    %v2620 = vpop.f32.mrf.mxu0
    %v2621 = vadd.f32 %v2244, %v2620
    %v2622 = vpop.f32.mrf.mxu0
    %v2623 = vadd.f32 %v2248, %v2622
    %2624 = vdwg.mxu0
    %v2625 = vmul.f32 %v1910, %v2336
    %v2626 = vmul.f32 %v1912, %v2338
    %v2627 = vmul.f32 %v1999, %v2425
    %v2628 = vmul.f32 %v2001, %v2427
    %v2629 = vmul.f32 %v2088, %v2514
    %v2630 = vmul.f32 %v2090, %v2516
    %v2631 = vmul.f32 %v2177, %v2603
    %v2632 = vmul.f32 %v2179, %v2605
    %v2633 = vmul.f32 %v1916, %v2342
    %v2634 = vmul.f32 %v1918, %v2344
    %v2635 = vmul.f32 %v2005, %v2431
    %v2636 = vmul.f32 %v2007, %v2433
    %v2637 = vmul.f32 %v2094, %v2520
    %v2638 = vmul.f32 %v2096, %v2522
    %v2639 = vmul.f32 %v2183, %v2609
    %v2640 = vmul.f32 %v2185, %v2611
    %v2641 = vmul.f32 %v1922, %v2348
    %v2642 = vmul.f32 %v1924, %v2350
    %v2643 = vmul.f32 %v2011, %v2437
    %v2644 = vmul.f32 %v2013, %v2439
    %v2645 = vmul.f32 %v2100, %v2526
    %v2646 = vmul.f32 %v2102, %v2528
    %v2647 = vmul.f32 %v2189, %v2615
    %v2648 = vmul.f32 %v2191, %v2617
    %v2649 = vmul.f32 %v1928, %v2354
    %v2650 = vmul.f32 %v1930, %v2356
    %v2651 = vmul.f32 %v2017, %v2443
    %v2652 = vmul.f32 %v2019, %v2445
    %v2653 = vmul.f32 %v2106, %v2532
    %v2654 = vmul.f32 %v2108, %v2534
    %v2655 = vmul.f32 %v2195, %v2621
    %v2656 = vmul.f32 %v2197, %v2623
    %2657 = vmatprep.subr.mxu0 0.0
    %2658 = vmatpush1.msra.mxu0 %v1636
    %2659 = vmatprep.subr.mxu0 0.0
    %2660 = vmatpush1.msra.mxu0 %v1635
    %2661 = vmatprep.subr.mxu0 0.0
    %2662 = vmatpush1.msra.mxu0 %v1634
    %2663 = vmatprep.subr.mxu0 0.0
    %2664 = vmatpush1.msra.mxu0 %v1633
    %2665 = vmatprep.subr.mxu0 0.0
    %2666 = vmatpush1.msra.mxu0 %v1632
    %2667 = vmatprep.subr.mxu0 0.0
    %2668 = vmatpush1.msra.mxu0 %v1631
    %2669 = vmatprep.subr.mxu0 0.0
    %2670 = vmatpush1.msra.mxu0 %v1630
    %2671 = vmatprep.subr.mxu0 0.0
    %2672 = vmatpush1.msra.mxu0 %v1629
    %2673 = vmatprep.subr.mxu0 0.0
    %2674 = vmatpush1.msra.mxu0 %v1628
    %2675 = vmatprep.subr.mxu0 0.0
    %2676 = vmatpush1.msra.mxu0 %v1627
    %2677 = vmatprep.subr.mxu0 0.0
    %2678 = vmatpush1.msra.mxu0 %v1626
    %2679 = vmatprep.subr.mxu0 0.0
    %2680 = vmatpush1.msra.mxu0 %v1625
    %2681 = vmatprep.subr.mxu0 0.0
    %2682 = vmatpush1.msra.mxu0 %v1624
    %2683 = vmatprep.subr.mxu0 0.0
    %2684 = vmatpush1.msra.mxu0 %v1623
    %2685 = vmatprep.subr.mxu0 0.0
    %2686 = vmatpush1.msra.mxu0 %v1622
    %2687 = vmatprep.subr.mxu0 0.0
    %2688 = vmatpush1.msra.mxu0 %v1621
    %2689 = vmatprep.subr.mxu0 0.0
    %2690 = vmatpush2.msra.mxu0 %v1652
    %2691 = vmatprep.subr.mxu0 0.0
    %2692 = vmatpush2.msra.mxu0 %v1651
    %2693 = vmatprep.subr.mxu0 0.0
    %2694 = vmatpush2.msra.mxu0 %v1650
    %2695 = vmatprep.subr.mxu0 0.0
    %2696 = vmatpush2.msra.mxu0 %v1649
    %2697 = vmatprep.subr.mxu0 0.0
    %2698 = vmatpush2.msra.mxu0 %v1648
    %2699 = vmatprep.subr.mxu0 0.0
    %2700 = vmatpush2.msra.mxu0 %v1647
    %2701 = vmatprep.subr.mxu0 0.0
    %2702 = vmatpush2.msra.mxu0 %v1646
    %2703 = vmatprep.subr.mxu0 0.0
    %2704 = vmatpush2.msra.mxu0 %v1645
    %2705 = vmatprep.subr.mxu0 0.0
    %2706 = vmatpush2.msra.mxu0 %v1644
    %2707 = vmatprep.subr.mxu0 0.0
    %2708 = vmatpush2.msra.mxu0 %v1643
    %2709 = vmatprep.subr.mxu0 0.0
    %2710 = vmatpush2.msra.mxu0 %v1642
    %2711 = vmatprep.subr.mxu0 0.0
    %2712 = vmatpush2.msra.mxu0 %v1641
    %2713 = vmatprep.subr.mxu0 0.0
    %2714 = vmatpush2.msra.mxu0 %v1640
    %2715 = vmatprep.subr.mxu0 0.0
    %2716 = vmatpush2.msra.mxu0 %v1639
    %2717 = vmatprep.subr.mxu0 0.0
    %2718 = vmatpush2.msra.mxu0 %v1638
    %2719 = vmatprep.subr.mxu0 0.0
    %2720 = vmatpush2.msra.mxu0 %v1637
    %2721 = vmatprep.mubr.f32.mxu0 %v2626
    %2722 = vmatmul.mubr.f32.gmra.mxu0 %v2625
    %v2723 = vpop.f32.mrf.mxu0
    %v2724 = vadd.f32 0.0, %v2723
    %v2725 = vpop.f32.mrf.mxu0
    %2726 = vmatprep.mubr.f32.mxu0 %v2634
    %2727 = vmatmul.mubr.f32.gmra.mxu0 %v2633
    %v2728 = vpop.f32.mrf.mxu0
    %v2729 = vadd.f32 0.0, %v2728
    %v2730 = vpop.f32.mrf.mxu0
    %2731 = vmatprep.mubr.f32.mxu0 %v2642
    %2732 = vmatmul.mubr.f32.gmra.mxu0 %v2641
    %v2733 = vpop.f32.mrf.mxu0
    %v2734 = vadd.f32 0.0, %v2733
    %v2735 = vpop.f32.mrf.mxu0
    %2736 = vmatprep.mubr.f32.mxu0 %v2650
    %2737 = vmatmul.mubr.f32.gmra.mxu0 %v2649
    %v2738 = vpop.f32.mrf.mxu0
    %v2739 = vadd.f32 0.0, %v2738
    %v2740 = vpop.f32.mrf.mxu0
    %2741 = vdwg.mxu0
    %2742 = vmatprep.subr.mxu0 0.0
    %2743 = vmatpush1.msra.mxu0 %v1668
    %2744 = vmatprep.subr.mxu0 0.0
    %2745 = vmatpush1.msra.mxu0 %v1667
    %2746 = vmatprep.subr.mxu0 0.0
    %2747 = vmatpush1.msra.mxu0 %v1666
    %2748 = vmatprep.subr.mxu0 0.0
    %2749 = vmatpush1.msra.mxu0 %v1665
    %2750 = vmatprep.subr.mxu0 0.0
    %2751 = vmatpush1.msra.mxu0 %v1664
    %2752 = vmatprep.subr.mxu0 0.0
    %2753 = vmatpush1.msra.mxu0 %v1663
    %2754 = vmatprep.subr.mxu0 0.0
    %2755 = vmatpush1.msra.mxu0 %v1662
    %2756 = vmatprep.subr.mxu0 0.0
    %2757 = vmatpush1.msra.mxu0 %v1661
    %2758 = vmatprep.subr.mxu0 0.0
    %2759 = vmatpush1.msra.mxu0 %v1660
    %2760 = vmatprep.subr.mxu0 0.0
    %2761 = vmatpush1.msra.mxu0 %v1659
    %2762 = vmatprep.subr.mxu0 0.0
    %2763 = vmatpush1.msra.mxu0 %v1658
    %2764 = vmatprep.subr.mxu0 0.0
    %2765 = vmatpush1.msra.mxu0 %v1657
    %2766 = vmatprep.subr.mxu0 0.0
    %2767 = vmatpush1.msra.mxu0 %v1656
    %2768 = vmatprep.subr.mxu0 0.0
    %2769 = vmatpush1.msra.mxu0 %v1655
    %2770 = vmatprep.subr.mxu0 0.0
    %2771 = vmatpush1.msra.mxu0 %v1654
    %2772 = vmatprep.subr.mxu0 0.0
    %2773 = vmatpush1.msra.mxu0 %v1653
    %2774 = vmatprep.subr.mxu0 0.0
    %2775 = vmatpush2.msra.mxu0 %v1684
    %2776 = vmatprep.subr.mxu0 0.0
    %2777 = vmatpush2.msra.mxu0 %v1683
    %2778 = vmatprep.subr.mxu0 0.0
    %2779 = vmatpush2.msra.mxu0 %v1682
    %2780 = vmatprep.subr.mxu0 0.0
    %2781 = vmatpush2.msra.mxu0 %v1681
    %2782 = vmatprep.subr.mxu0 0.0
    %2783 = vmatpush2.msra.mxu0 %v1680
    %2784 = vmatprep.subr.mxu0 0.0
    %2785 = vmatpush2.msra.mxu0 %v1679
    %2786 = vmatprep.subr.mxu0 0.0
    %2787 = vmatpush2.msra.mxu0 %v1678
    %2788 = vmatprep.subr.mxu0 0.0
    %2789 = vmatpush2.msra.mxu0 %v1677
    %2790 = vmatprep.subr.mxu0 0.0
    %2791 = vmatpush2.msra.mxu0 %v1676
    %2792 = vmatprep.subr.mxu0 0.0
    %2793 = vmatpush2.msra.mxu0 %v1675
    %2794 = vmatprep.subr.mxu0 0.0
    %2795 = vmatpush2.msra.mxu0 %v1674
    %2796 = vmatprep.subr.mxu0 0.0
    %2797 = vmatpush2.msra.mxu0 %v1673
    %2798 = vmatprep.subr.mxu0 0.0
    %2799 = vmatpush2.msra.mxu0 %v1672
    %2800 = vmatprep.subr.mxu0 0.0
    %2801 = vmatpush2.msra.mxu0 %v1671
    %2802 = vmatprep.subr.mxu0 0.0
    %2803 = vmatpush2.msra.mxu0 %v1670
    %2804 = vmatprep.subr.mxu0 0.0
    %2805 = vmatpush2.msra.mxu0 %v1669
    %2806 = vmatprep.mubr.f32.mxu0 %v2628
    %2807 = vmatmul.mubr.f32.gmra.mxu0 %v2627
    %v2808 = vpop.f32.mrf.mxu0
    %v2809 = vadd.f32 %v2724, %v2808
    %v2810 = vpop.f32.mrf.mxu0
    %2811 = vmatprep.mubr.f32.mxu0 %v2636
    %2812 = vmatmul.mubr.f32.gmra.mxu0 %v2635
    %v2813 = vpop.f32.mrf.mxu0
    %v2814 = vadd.f32 %v2729, %v2813
    %v2815 = vpop.f32.mrf.mxu0
    %2816 = vmatprep.mubr.f32.mxu0 %v2644
    %2817 = vmatmul.mubr.f32.gmra.mxu0 %v2643
    %v2818 = vpop.f32.mrf.mxu0
    %v2819 = vadd.f32 %v2734, %v2818
    %v2820 = vpop.f32.mrf.mxu0
    %2821 = vmatprep.mubr.f32.mxu0 %v2652
    %2822 = vmatmul.mubr.f32.gmra.mxu0 %v2651
    %v2823 = vpop.f32.mrf.mxu0
    %v2824 = vadd.f32 %v2739, %v2823
    %v2825 = vpop.f32.mrf.mxu0
    %2826 = vdwg.mxu0
    %2827 = vmatprep.subr.mxu0 0.0
    %2828 = vmatpush1.msra.mxu0 %v1700
    %2829 = vmatprep.subr.mxu0 0.0
    %2830 = vmatpush1.msra.mxu0 %v1699
    %2831 = vmatprep.subr.mxu0 0.0
    %2832 = vmatpush1.msra.mxu0 %v1698
    %2833 = vmatprep.subr.mxu0 0.0
    %2834 = vmatpush1.msra.mxu0 %v1697
    %2835 = vmatprep.subr.mxu0 0.0
    %2836 = vmatpush1.msra.mxu0 %v1696
    %2837 = vmatprep.subr.mxu0 0.0
    %2838 = vmatpush1.msra.mxu0 %v1695
    %2839 = vmatprep.subr.mxu0 0.0
    %2840 = vmatpush1.msra.mxu0 %v1694
    %2841 = vmatprep.subr.mxu0 0.0
    %2842 = vmatpush1.msra.mxu0 %v1693
    %2843 = vmatprep.subr.mxu0 0.0
    %2844 = vmatpush1.msra.mxu0 %v1692
    %2845 = vmatprep.subr.mxu0 0.0
    %2846 = vmatpush1.msra.mxu0 %v1691
    %2847 = vmatprep.subr.mxu0 0.0
    %2848 = vmatpush1.msra.mxu0 %v1690
    %2849 = vmatprep.subr.mxu0 0.0
    %2850 = vmatpush1.msra.mxu0 %v1689
    %2851 = vmatprep.subr.mxu0 0.0
    %2852 = vmatpush1.msra.mxu0 %v1688
    %2853 = vmatprep.subr.mxu0 0.0
    %2854 = vmatpush1.msra.mxu0 %v1687
    %2855 = vmatprep.subr.mxu0 0.0
    %2856 = vmatpush1.msra.mxu0 %v1686
    %2857 = vmatprep.subr.mxu0 0.0
    %2858 = vmatpush1.msra.mxu0 %v1685
    %2859 = vmatprep.subr.mxu0 0.0
    %2860 = vmatpush2.msra.mxu0 %v1716
    %2861 = vmatprep.subr.mxu0 0.0
    %2862 = vmatpush2.msra.mxu0 %v1715
    %2863 = vmatprep.subr.mxu0 0.0
    %2864 = vmatpush2.msra.mxu0 %v1714
    %2865 = vmatprep.subr.mxu0 0.0
    %2866 = vmatpush2.msra.mxu0 %v1713
    %2867 = vmatprep.subr.mxu0 0.0
    %2868 = vmatpush2.msra.mxu0 %v1712
    %2869 = vmatprep.subr.mxu0 0.0
    %2870 = vmatpush2.msra.mxu0 %v1711
    %2871 = vmatprep.subr.mxu0 0.0
    %2872 = vmatpush2.msra.mxu0 %v1710
    %2873 = vmatprep.subr.mxu0 0.0
    %2874 = vmatpush2.msra.mxu0 %v1709
    %2875 = vmatprep.subr.mxu0 0.0
    %2876 = vmatpush2.msra.mxu0 %v1708
    %2877 = vmatprep.subr.mxu0 0.0
    %2878 = vmatpush2.msra.mxu0 %v1707
    %2879 = vmatprep.subr.mxu0 0.0
    %2880 = vmatpush2.msra.mxu0 %v1706
    %2881 = vmatprep.subr.mxu0 0.0
    %2882 = vmatpush2.msra.mxu0 %v1705
    %2883 = vmatprep.subr.mxu0 0.0
    %2884 = vmatpush2.msra.mxu0 %v1704
    %2885 = vmatprep.subr.mxu0 0.0
    %2886 = vmatpush2.msra.mxu0 %v1703
    %2887 = vmatprep.subr.mxu0 0.0
    %2888 = vmatpush2.msra.mxu0 %v1702
    %2889 = vmatprep.subr.mxu0 0.0
    %2890 = vmatpush2.msra.mxu0 %v1701
    %2891 = vmatprep.mubr.f32.mxu0 %v2630
    %2892 = vmatmul.mubr.f32.gmra.mxu0 %v2629
    %v2893 = vpop.f32.mrf.mxu0
    %v2894 = vadd.f32 %v2809, %v2893
    %v2895 = vpop.f32.mrf.mxu0
    %2896 = vmatprep.mubr.f32.mxu0 %v2638
    %2897 = vmatmul.mubr.f32.gmra.mxu0 %v2637
    %v2898 = vpop.f32.mrf.mxu0
    %v2899 = vadd.f32 %v2814, %v2898
    %v2900 = vpop.f32.mrf.mxu0
    %2901 = vmatprep.mubr.f32.mxu0 %v2646
    %2902 = vmatmul.mubr.f32.gmra.mxu0 %v2645
    %v2903 = vpop.f32.mrf.mxu0
    %v2904 = vadd.f32 %v2819, %v2903
    %v2905 = vpop.f32.mrf.mxu0
    %2906 = vmatprep.mubr.f32.mxu0 %v2654
    %2907 = vmatmul.mubr.f32.gmra.mxu0 %v2653
    %v2908 = vpop.f32.mrf.mxu0
    %v2909 = vadd.f32 %v2824, %v2908
    %v2910 = vpop.f32.mrf.mxu0
    %2911 = vdwg.mxu0
    %2912 = vmatprep.subr.mxu0 0.0
    %2913 = vmatpush1.msra.mxu0 %v1732
    %2914 = vmatprep.subr.mxu0 0.0
    %2915 = vmatpush1.msra.mxu0 %v1731
    %2916 = vmatprep.subr.mxu0 0.0
    %2917 = vmatpush1.msra.mxu0 %v1730
    %2918 = vmatprep.subr.mxu0 0.0
    %2919 = vmatpush1.msra.mxu0 %v1729
    %2920 = vmatprep.subr.mxu0 0.0
    %2921 = vmatpush1.msra.mxu0 %v1728
    %2922 = vmatprep.subr.mxu0 0.0
    %2923 = vmatpush1.msra.mxu0 %v1727
    %2924 = vmatprep.subr.mxu0 0.0
    %2925 = vmatpush1.msra.mxu0 %v1726
    %2926 = vmatprep.subr.mxu0 0.0
    %2927 = vmatpush1.msra.mxu0 %v1725
    %2928 = vmatprep.subr.mxu0 0.0
    %2929 = vmatpush1.msra.mxu0 %v1724
    %2930 = vmatprep.subr.mxu0 0.0
    %2931 = vmatpush1.msra.mxu0 %v1723
    %2932 = vmatprep.subr.mxu0 0.0
    %2933 = vmatpush1.msra.mxu0 %v1722
    %2934 = vmatprep.subr.mxu0 0.0
    %2935 = vmatpush1.msra.mxu0 %v1721
    %2936 = vmatprep.subr.mxu0 0.0
    %2937 = vmatpush1.msra.mxu0 %v1720
    %2938 = vmatprep.subr.mxu0 0.0
    %2939 = vmatpush1.msra.mxu0 %v1719
    %2940 = vmatprep.subr.mxu0 0.0
    %2941 = vmatpush1.msra.mxu0 %v1718
    %2942 = vmatprep.subr.mxu0 0.0
    %2943 = vmatpush1.msra.mxu0 %v1717
    %2944 = vmatprep.subr.mxu0 0.0
    %2945 = vmatpush2.msra.mxu0 %v1748
    %2946 = vmatprep.subr.mxu0 0.0
    %2947 = vmatpush2.msra.mxu0 %v1747
    %2948 = vmatprep.subr.mxu0 0.0
    %2949 = vmatpush2.msra.mxu0 %v1746
    %2950 = vmatprep.subr.mxu0 0.0
    %2951 = vmatpush2.msra.mxu0 %v1745
    %2952 = vmatprep.subr.mxu0 0.0
    %2953 = vmatpush2.msra.mxu0 %v1744
    %2954 = vmatprep.subr.mxu0 0.0
    %2955 = vmatpush2.msra.mxu0 %v1743
    %2956 = vmatprep.subr.mxu0 0.0
    %2957 = vmatpush2.msra.mxu0 %v1742
    %2958 = vmatprep.subr.mxu0 0.0
    %2959 = vmatpush2.msra.mxu0 %v1741
    %2960 = vmatprep.subr.mxu0 0.0
    %2961 = vmatpush2.msra.mxu0 %v1740
    %2962 = vmatprep.subr.mxu0 0.0
    %2963 = vmatpush2.msra.mxu0 %v1739
    %2964 = vmatprep.subr.mxu0 0.0
    %2965 = vmatpush2.msra.mxu0 %v1738
    %2966 = vmatprep.subr.mxu0 0.0
    %2967 = vmatpush2.msra.mxu0 %v1737
    %2968 = vmatprep.subr.mxu0 0.0
    %2969 = vmatpush2.msra.mxu0 %v1736
    %2970 = vmatprep.subr.mxu0 0.0
    %2971 = vmatpush2.msra.mxu0 %v1735
    %2972 = vmatprep.subr.mxu0 0.0
    %2973 = vmatpush2.msra.mxu0 %v1734
    %2974 = vmatprep.subr.mxu0 0.0
    %2975 = vmatpush2.msra.mxu0 %v1733
    %2976 = vmatprep.mubr.f32.mxu0 %v2632
    %2977 = vmatmul.mubr.f32.gmra.mxu0 %v2631
    %v2978 = vpop.f32.mrf.mxu0
    %v2979 = vadd.f32 %v2894, %v2978
    %v2980 = vpop.f32.mrf.mxu0
    %2981 = vmatprep.mubr.f32.mxu0 %v2640
    %2982 = vmatmul.mubr.f32.gmra.mxu0 %v2639
    %v2983 = vpop.f32.mrf.mxu0
    %v2984 = vadd.f32 %v2899, %v2983
    %v2985 = vpop.f32.mrf.mxu0
    %2986 = vmatprep.mubr.f32.mxu0 %v2648
    %2987 = vmatmul.mubr.f32.gmra.mxu0 %v2647
    %v2988 = vpop.f32.mrf.mxu0
    %v2989 = vadd.f32 %v2904, %v2988
    %v2990 = vpop.f32.mrf.mxu0
    %2991 = vmatprep.mubr.f32.mxu0 %v2656
    %2992 = vmatmul.mubr.f32.gmra.mxu0 %v2655
    %v2993 = vpop.f32.mrf.mxu0
    %v2994 = vadd.f32 %v2909, %v2993
    %v2995 = vpop.f32.mrf.mxu0
    %2996 = vdwg.mxu0
    %2997 = vst.msk [vmem:[#allocation13] sm:$0xff] %vm199, %v2979
    %2998 = vst.msk [vmem:[#allocation13 + $0x8] sm:$0xff] %vm199, %v2984
    %2999 = vst.msk [vmem:[#allocation13 + $0x10] sm:$0xff] %vm199, %v2989
    %3000 = vst.msk [vmem:[#allocation13 + $0x18] sm:$0xff] %vm199, %v2994
    %vm3001 = vcmask 261124
    %3002 = vst.msk [vmem:[#allocation14 - $0x4] sm:$0xf0] %vm3001, %v2994
    // Predicated region
    $region54: #{tpu_custom_call.1} parent=1 // pred_check
      _
    $region55: #{tpu_custom_call.1} parent=1 // pred_check_branch
      %3004 = sbr.rel (0) target = $region57
    $region56: #{tpu_custom_call.1} parent=1 // pred_region
      %s3006 = ssub.s32 512, 512
      %3007 = vsyncadd [#allocation7], %s3006
      %s3008 = sshll.u32 [#allocation13], 4
      %s3009 = int_to_ptr.vmem [resolvable:$true] %s3008
      %3014 = dma.vmem_to_hbm [thread:$0]  %s3009, 512, %s9, [#allocation7], 128, 128, 8
    $region57: #{tpu_custom_call.1} parent=1 // pred_fallthru
      _
    // Predicated region
    $region58: #{tpu_custom_call.1} parent=1 // pred_check
      _
    $region59: #{tpu_custom_call.1} parent=1 // pred_check_branch
      %3016 = sbr.rel (0) target = $region61
    $region60: #{tpu_custom_call.1} parent=1 // pred_region
      %s3018 = ssub.s32 64, 64
      %3019 = vsyncadd [#allocation15], %s3018
      %s3021 = sshll.u32 [#allocation14], 4
      %s3022 = int_to_ptr.vmem [resolvable:$true] %s3021
      %3024 = dma.vmem_to_hbm [thread:$0]  %s3022, 64, %s10, [#allocation15]
    $region61: #{tpu_custom_call.1} parent=1 // pred_fallthru
      _
    // Predicated region
    $region62: #{tpu_custom_call.1} parent=1 // pred_check
      _
    $region63: #{tpu_custom_call.1} parent=1 // pred_check_branch
      %3026 = sbr.rel (0) target = $region65
    $region64: #{tpu_custom_call.1} parent=1 // pred_region
      %s3028 = ssub.s32 64, 64
      %3029 = vsyncadd [#allocation15], %s3028
      %s3031 = sshll.u32 [#allocation16], 4
      %s3032 = int_to_ptr.vmem [resolvable:$true] %s3031
      %3034 = dma.vmem_to_hbm [thread:$0]  %s3032, 64, %s11, [#allocation15]
    $region65: #{tpu_custom_call.1} parent=1 // pred_fallthru
      _
    // Predicated region
    $region66: #{tpu_custom_call.1} parent=1 // pred_check
      _
    $region67: #{tpu_custom_call.1} parent=1 // pred_check_branch
      %3036 = sbr.rel (0) target = $region69
    $region68: #{tpu_custom_call.1} parent=1 // pred_region
      %3037 = dma.done [#allocation7], 512
    $region69: #{tpu_custom_call.1} parent=1 // pred_fallthru
      _
    // Predicated region
    $region70: #{tpu_custom_call.1} parent=1 // pred_check
      _
    $region71: #{tpu_custom_call.1} parent=1 // pred_check_branch
      %3039 = sbr.rel (0) target = $region73
    $region72: #{tpu_custom_call.1} parent=1 // pred_region
      %3040 = dma.done [#allocation15], 64
    $region73: #{tpu_custom_call.1} parent=1 // pred_fallthru
      _
    // Predicated region
    $region74: #{tpu_custom_call.1} parent=1 // pred_check
      _
    $region75: #{tpu_custom_call.1} parent=1 // pred_check_branch
      %3042 = sbr.rel (0) target = $region77
    $region76: #{tpu_custom_call.1} parent=1 // pred_region
      %3043 = dma.done [#allocation15], 64
    $region77: #{tpu_custom_call.1} parent=1 // pred_fallthru
      _
    %3044 = vsyncpa [#allocation6], 1
    %3045 = vsyncpa [#allocation9], 1
    %3046 = vsyncpa [#allocation12], 1
    %3047 = vsyncpa [#allocation7], 1
    %3048 = vsyncpa [#allocation15], 1

</llo_original>
